<compile_context>
chip_gen: v5e
topology: v5e:2x2
jax: 0.10.0
libtpu: 0.0.40
codegen_flags: <defaults>
</compile_context>

<pallas_src>
import math

import jax
import jax.numpy as jnp
import numpy as np
from jax.experimental import pallas as pl
from jax.experimental.pallas import tpu as pltpu

LANES = 128


def _ceil8(n):
    return ((n + 7) // 8) * 8


# ----------------------------------------------------------------------------
# Constant 0/1 lane-selection matrices: encode the time-axis indexing of a
# Conv1d / ConvTranspose1d (shift, stride, zero padding, per-batch blocking)
# so that the conv becomes  y = sum_k W_k @ (x @ S_k)  with x, y in (C, B*T)
# layout padded to 128 lanes (lane index = b*T + t).
# ----------------------------------------------------------------------------
def _selection_matrices(B, T_in, T_out, K, stride, pad, transposed):
    S = np.zeros((K, LANES, LANES), np.float32)
    for k in range(K):
        for b in range(B):
            if transposed:
                # torch ConvTranspose1d: out[t_in*stride - pad + k] += W_t[:,:,k]^T x[t_in]
                for t_in in range(T_in):
                    t_out = t_in * stride - pad + k
                    if 0 <= t_out < T_out:
                        S[k, b * T_in + t_in, b * T_out + t_out] = 1.0
            else:
                # torch Conv1d: out[t_out] += W[:,:,k] x[t_out*stride - pad + k]
                for t_out in range(T_out):
                    t_in = t_out * stride - pad + k
                    if 0 <= t_in < T_in:
                        S[k, b * T_in + t_in, b * T_out + t_out] = 1.0
    return jnp.asarray(S)


# ----------------------------------------------------------------------------
# Weight preparation (padding to 8-aligned channel counts, per-tap layout).
# ----------------------------------------------------------------------------
def _taps(w):
    # (Cout, Cin, K) -> (K, Cout, Cin)
    return jnp.transpose(w, (2, 0, 1))


def _prep_glu_conv(p, transposed):
    # Conv(/ConvTranspose) feeding BatchNorm+GLU.  Bias is dropped (no-op under
    # BN).  The two GLU halves are each padded to a multiple of 8 rows.
    w = p["w"]
    if transposed:
        w = jnp.transpose(w, (1, 0, 2))          # (2*Ch, Cin, K): A_k = W_t[:,:,k]^T
    c2, cin, _k = w.shape
    ch = c2 // 2
    chp, cinp = _ceil8(ch), _ceil8(cin)
    wk = jnp.zeros((_k, 2 * chp, cinp), jnp.float32)
    wk = wk.at[:, :ch, :cin].set(_taps(w[:ch]))
    wk = wk.at[:, chp:chp + ch, :cin].set(_taps(w[ch:]))
    gamma = jnp.zeros((2 * chp, 1), jnp.float32)
    beta = jnp.zeros((2 * chp, 1), jnp.float32)
    gamma = gamma.at[:ch, 0].set(p["gamma"][:ch]).at[chp:chp + ch, 0].set(p["gamma"][ch:])
    beta = beta.at[:ch, 0].set(p["beta"][:ch]).at[chp:chp + ch, 0].set(p["beta"][ch:])
    return wk, gamma, beta


def _prep_mu_logvar(p_mu, p_lv):
    # Fuse encoder_mu and encoder_logvar into one GEMM (rows [0:Dp) = mu,
    # rows [Dp:2Dp) = logvar).
    wm, wl = p_mu["w"], p_lv["w"]
    d, cin, k = wm.shape
    dp, cinp = _ceil8(d), _ceil8(cin)
    wk = jnp.zeros((k, 2 * dp, cinp), jnp.float32)
    wk = wk.at[:, :d, :cin].set(_taps(wm))
    wk = wk.at[:, dp:dp + d, :cin].set(_taps(wl))
    bias = jnp.zeros((2 * dp, 1), jnp.float32)
    bias = bias.at[:d, 0].set(p_mu["b"]).at[dp:dp + d, 0].set(p_lv["b"])
    return wk, bias


def _prep_out_deconv(p):
    # Final ConvTranspose1d (keeps its bias, no BN).
    w = jnp.transpose(p["w"], (1, 0, 2))         # (Cout, Cin, K)
    cout, cin, k = w.shape
    coutp, cinp = _ceil8(cout), _ceil8(cin)
    wk = jnp.zeros((k, coutp, cinp), jnp.float32)
    wk = wk.at[:, :cout, :cin].set(_taps(w))
    bias = jnp.zeros((coutp, 1), jnp.float32).at[:cout, 0].set(p["b"])
    return wk, bias


# ----------------------------------------------------------------------------
# The fused whole-forward Pallas kernel.
# ----------------------------------------------------------------------------
def _make_vae_kernel(B, T):
    n_full = float(B * T)          # valid lanes at full time resolution
    n_half = float(B * (T // 2))   # valid lanes at half time resolution

    def conv(x, w_ref, s_ref):
        # y = sum_k W_k @ (x @ S_k); K is a small static constant -> unrolled.
        acc = None
        for k in range(w_ref.shape[0]):
            t = jnp.dot(w_ref[k],
                        jnp.dot(x, s_ref[k], preferred_element_type=jnp.float32),
                        preferred_element_type=jnp.float32)
            acc = t if acc is None else acc + t
        return acc

    def bn_glu(y, gamma_ref, beta_ref, n_valid):
        # Training-mode BatchNorm1d over the (batch*time) lane axis.  Padded
        # lanes/rows of y are exactly zero, so summing over all 128 lanes and
        # dividing by the true count is exact.  One-pass E[x], E[x^2].
        inv_n = 1.0 / n_valid
        mean = jnp.sum(y, axis=1, keepdims=True) * inv_n
        var = jnp.maximum(
            jnp.sum(y * y, axis=1, keepdims=True) * inv_n - mean * mean, 0.0)
        yn = (y - mean) * (gamma_ref[...] * jax.lax.rsqrt(var + 1e-5)) + beta_ref[...]
        h = yn.shape[0] // 2
        return yn[:h] * jax.nn.sigmoid(yn[h:])          # GLU over channel halves

    def kernel(x_ref, eps_ref,
               w1_ref, s1_ref, g1_ref, b1_ref,
               w2_ref, s2_ref, g2_ref, b2_ref,
               w3_ref, s3_ref, bias3_ref,
               w4_ref, s4_ref, g4_ref, b4_ref,
               w5_ref, s5_ref, g5_ref, b5_ref,
               w6_ref, s6_ref, bias6_ref,
               sig_ref, mu_ref, logvar_ref):
        # ---- encoder ----
        h = bn_glu(conv(x_ref[...], w1_ref, s1_ref), g1_ref, b1_ref, n_full)
        h = bn_glu(conv(h, w2_ref, s2_ref), g2_ref, b2_ref, n_half)
        ml = conv(h, w3_ref, s3_ref) + bias3_ref[...]   # fused [mu ; logvar]
        half = ml.shape[0] // 2
        mu, logvar = ml[:half], ml[half:]
        mu_ref[...] = mu
        logvar_ref[...] = logvar
        # ---- reparameterize (exp goes to the EUP slot, free next to MXU work)
        z = mu + eps_ref[...] * jnp.exp(0.5 * logvar)
        # ---- decoder ----
        d = bn_glu(conv(z, w4_ref, s4_ref), g4_ref, b4_ref, n_half)
        d = bn_glu(conv(d, w5_ref, s5_ref), g5_ref, b5_ref, n_full)
        sig_ref[...] = conv(d, w6_ref, s6_ref) + bias6_ref[...] + 1e-6

    return kernel


# ----------------------------------------------------------------------------
# Layout glue (boundary only: model-facing NCT <-> kernel (C, B*T) slabs).
# ----------------------------------------------------------------------------
def _to_lane_layout(x, rows_pad):
    # (B, C, T) -> (rows_pad, 128) with lane index b*T + t, zero padded.
    b, c, t = x.shape
    flat = jnp.transpose(x, (1, 0, 2)).reshape(c, b * t)
    return jnp.zeros((rows_pad, LANES), jnp.float32).at[:c, :b * t].set(flat)


def _from_lane_layout(y, c, b, t):
    return y[:c, :b * t].reshape(c, b, t).transpose(1, 0, 2)


@jax.jit
def vae_forward(params, log_x_BxFxT, eps_BxDxT):
    B, F, T = log_x_BxFxT.shape
    D = params["enc_mu"]["w"].shape[0]
    assert T % 4 == 0 and B * T <= LANES, "demo kernel assumes T % 4 == 0 and B*T <= 128"
    Fp, Dp = _ceil8(F), _ceil8(D)

    # Static 0/1 selection matrices (built at trace time, become constants).
    s1 = _selection_matrices(B, T, T, 5, 1, 2, False)          # enc1
    s2 = _selection_matrices(B, T, T // 2, 4, 2, 1, False)     # enc2
    s3 = _selection_matrices(B, T // 2, T // 4, 4, 2, 1, False)  # mu|logvar
    s4 = _selection_matrices(B, T // 4, T // 2, 4, 2, 1, True)   # dec1
    s5 = _selection_matrices(B, T // 2, T, 4, 2, 1, True)        # dec2
    s6 = _selection_matrices(B, T, T, 5, 1, 2, True)             # dec3

    # Padded weights / BN params (bias dropped where BatchNorm follows).
    w1, g1, b1 = _prep_glu_conv(params["enc1"], transposed=False)
    w2, g2, b2 = _prep_glu_conv(params["enc2"], transposed=False)
    w3, bias3 = _prep_mu_logvar(params["enc_mu"], params["enc_logvar"])
    w4, g4, b4 = _prep_glu_conv(params["dec1"], transposed=True)
    w5, g5, b5 = _prep_glu_conv(params["dec2"], transposed=True)
    w6, bias6 = _prep_out_deconv(params["dec3"])

    x_pad = _to_lane_layout(log_x_BxFxT, Fp)
    eps_pad = _to_lane_layout(eps_BxDxT, Dp)

    vmem = pl.BlockSpec(memory_space=pltpu.MemorySpace.VMEM)
    inputs = (x_pad, eps_pad,
              w1, s1, g1, b1,
              w2, s2, g2, b2,
              w3, s3, bias3,
              w4, s4, g4, b4,
              w5, s5, g5, b5,
              w6, s6, bias6)

    sig_p, mu_p, lv_p = pl.pallas_call(
        _make_vae_kernel(B, T),
        out_shape=(jax.ShapeDtypeStruct((Fp, LANES), jnp.float32),
                   jax.ShapeDtypeStruct((Dp, LANES), jnp.float32),
                   jax.ShapeDtypeStruct((Dp, LANES), jnp.float32)),
        in_specs=[vmem] * len(inputs),
        out_specs=(vmem, vmem, vmem),
    )(*inputs)

    log_sigma = _from_lane_layout(sig_p, F, B, T)
    mu = _from_lane_layout(mu_p, D, B, T // 4)
    logvar = _from_lane_layout(lv_p, D, B, T // 4)
    return log_sigma, mu, logvar


# ----------------------------------------------------------------------------
# Parameter init (deterministic, torch-default-like bounds).
# ----------------------------------------------------------------------------
def _conv_params(key, cout, cin, k):
    wk, bk = jax.random.split(key)
    bound = 1.0 / math.sqrt(cin * k)
    return {"w": jax.random.uniform(wk, (cout, cin, k), jnp.float32, -bound, bound),
            "b": jax.random.uniform(bk, (cout,), jnp.float32, -bound, bound)}


def _deconv_params(key, cin, cout, k):
    wk, bk = jax.random.split(key)
    bound = 1.0 / math.sqrt(cout * k)
    return {"w": jax.random.uniform(wk, (cin, cout, k), jnp.float32, -bound, bound),
            "b": jax.random.uniform(bk, (cout,), jnp.float32, -bound, bound)}


def _with_bn(p, c2):
    p = dict(p)
    p["gamma"] = jnp.ones((c2,), jnp.float32)
    p["beta"] = jnp.zeros((c2,), jnp.float32)
    return p


def init_params(key, n_freq, n_latent):
    n_fft = (n_freq - 1) * 2
    ks = jax.random.split(key, 7)
    return {
        "enc1": _with_bn(_conv_params(ks[0], 2 * (n_fft // 4), n_fft // 2 + 1, 5),
                         2 * (n_fft // 4)),
        "enc2": _with_bn(_conv_params(ks[1], 2 * (n_fft // 8), n_fft // 4, 4),
                         2 * (n_fft // 8)),
        "enc_mu": _conv_params(ks[2], n_latent, n_fft // 8, 4),
        "enc_logvar": _conv_params(ks[3], n_latent, n_fft // 8, 4),
        "dec1": _with_bn(_deconv_params(ks[4], n_latent, 2 * (n_fft // 8), 4),
                         2 * (n_fft // 8)),
        "dec2": _with_bn(_deconv_params(ks[5], n_fft // 8, 2 * (n_fft // 4), 4),
                         2 * (n_fft // 4)),
        "dec3": _deconv_params(ks[6], n_fft // 4, n_fft // 2 + 1, 5),
    }


# ----------------------------------------------------------------------------
# Plain-JAX/XLA reference of the torch module (for a numerical cross-check).
# ----------------------------------------------------------------------------
def _ref_conv1d(x, w, b, stride, pad):
    y = jax.lax.conv_general_dilated(x, w, (stride,), [(pad, pad)],
                                     dimension_numbers=("NCH", "OIH", "NCH"))
    return y + b[None, :, None]


def _ref_deconv1d(x, w, b, stride, pad):
    k = w.shape[2]
    w_conv = jnp.flip(w, 2).transpose(1, 0, 2)
    y = jax.lax.conv_general_dilated(x, w_conv, (1,), [(k - 1 - pad, k - 1 - pad)],
                                     lhs_dilation=(stride,),
                                     dimension_numbers=("NCH", "OIH", "NCH"))
    return y + b[None, :, None]


def _ref_bn_glu(y, gamma, beta):
    mean = jnp.mean(y, axis=(0, 2), keepdims=True)
    var = jnp.mean((y - mean) ** 2, axis=(0, 2), keepdims=True)
    yn = (y - mean) * jax.lax.rsqrt(var + 1e-5) * gamma[None, :, None] + beta[None, :, None]
    c = yn.shape[1] // 2
    return yn[:, :c] * jax.nn.sigmoid(yn[:, c:])


def vae_forward_reference(params, x, eps):
    p = params
    h = _ref_bn_glu(_ref_conv1d(x, p["enc1"]["w"], p["enc1"]["b"], 1, 2),
                    p["enc1"]["gamma"], p["enc1"]["beta"])
    h = _ref_bn_glu(_ref_conv1d(h, p["enc2"]["w"], p["enc2"]["b"], 2, 1),
                    p["enc2"]["gamma"], p["enc2"]["beta"])
    mu = _ref_conv1d(h, p["enc_mu"]["w"], p["enc_mu"]["b"], 2, 1)
    logvar = _ref_conv1d(h, p["enc_logvar"]["w"], p["enc_logvar"]["b"], 2, 1)
    z = mu + eps * jnp.exp(0.5 * logvar)
    d = _ref_bn_glu(_ref_deconv1d(z, p["dec1"]["w"], p["dec1"]["b"], 2, 1),
                    p["dec1"]["gamma"], p["dec1"]["beta"])
    d = _ref_bn_glu(_ref_deconv1d(d, p["dec2"]["w"], p["dec2"]["b"], 2, 1),
                    p["dec2"]["gamma"], p["dec2"]["beta"])
    log_sigma = _ref_deconv1d(d, p["dec3"]["w"], p["dec3"]["b"], 1, 2) + 1e-6
    return log_sigma, mu, logvar


if __name__ == "__main__":
    key = jax.random.PRNGKey(0)
    pkey, xkey, ekey = jax.random.split(key, 3)

    # small shapes consistent with the module: n_freq=17 -> n_fft=32
    n_freq, n_latent = 17, 4
    B, T = 2, 16                       # T divisible by 4 (two stride-2 stages)

    params = init_params(pkey, n_freq, n_latent)
    log_x = jax.random.normal(xkey, (B, n_freq, T), jnp.float32)
    eps = jax.random.normal(ekey, (B, n_latent, T // 4), jnp.float32)

    log_sigma, mu, logvar = vae_forward(params, log_x, eps)
    jax.block_until_ready((log_sigma, mu, logvar))

    assert log_sigma.shape == (B, n_freq, T)
    assert mu.shape == (B, n_latent, T // 4)
    assert logvar.shape == (B, n_latent, T // 4)
    assert bool(jnp.all(jnp.isfinite(log_sigma)))

    # Cross-check the fused Pallas kernel against the plain-JAX reference.
    ref_sig, ref_mu, ref_lv = vae_forward_reference(params, log_x, eps)
    for got, ref in ((log_sigma, ref_sig), (mu, ref_mu), (logvar, ref_lv)):
        err = float(jnp.max(jnp.abs(got - ref)))
        assert err < 1e-1, f"mismatch vs reference: max|diff|={err}"

    print("KERNEL_OK")
</pallas_src>

<mosaic_0001>
module attributes {stable_mosaic.version = 11 : i64} {
  func.func @kernel(%arg0: memref<24x128xf32, #tpu.memory_space<vmem>>, %arg1: memref<8x128xf32, #tpu.memory_space<vmem>>, %arg2: memref<5x16x24xf32, #tpu.memory_space<vmem>>, %arg3: memref<5x128x128xf32, #tpu.memory_space<vmem>>, %arg4: memref<16x1xf32, #tpu.memory_space<vmem>>, %arg5: memref<16x1xf32, #tpu.memory_space<vmem>>, %arg6: memref<4x16x8xf32, #tpu.memory_space<vmem>>, %arg7: memref<4x128x128xf32, #tpu.memory_space<vmem>>, %arg8: memref<16x1xf32, #tpu.memory_space<vmem>>, %arg9: memref<16x1xf32, #tpu.memory_space<vmem>>, %arg10: memref<4x16x8xf32, #tpu.memory_space<vmem>>, %arg11: memref<4x128x128xf32, #tpu.memory_space<vmem>>, %arg12: memref<16x1xf32, #tpu.memory_space<vmem>>, %arg13: memref<4x16x8xf32, #tpu.memory_space<vmem>>, %arg14: memref<4x128x128xf32, #tpu.memory_space<vmem>>, %arg15: memref<16x1xf32, #tpu.memory_space<vmem>>, %arg16: memref<16x1xf32, #tpu.memory_space<vmem>>, %arg17: memref<4x16x8xf32, #tpu.memory_space<vmem>>, %arg18: memref<4x128x128xf32, #tpu.memory_space<vmem>>, %arg19: memref<16x1xf32, #tpu.memory_space<vmem>>, %arg20: memref<16x1xf32, #tpu.memory_space<vmem>>, %arg21: memref<5x24x8xf32, #tpu.memory_space<vmem>>, %arg22: memref<5x128x128xf32, #tpu.memory_space<vmem>>, %arg23: memref<24x1xf32, #tpu.memory_space<vmem>>, %arg24: memref<24x128xf32, #tpu.memory_space<vmem>>, %arg25: memref<8x128xf32, #tpu.memory_space<vmem>>, %arg26: memref<8x128xf32, #tpu.memory_space<vmem>>) attributes {dimension_semantics = [], scalar_prefetch = 0 : i64, scratch_operands = 0 : i64, tpu.core_type = #tpu.core_type<tc>} {
    %c0 = arith.constant 0 : index
    %c0_0 = arith.constant 0 : index
    %0 = vector.load %arg0[%c0, %c0_0] : memref<24x128xf32, #tpu.memory_space<vmem>>, vector<24x128xf32>
    %c0_1 = arith.constant 0 : index
    %c0_2 = arith.constant 0 : index
    %c0_3 = arith.constant 0 : index
    %1 = vector.load %arg2[%c0_1, %c0_2, %c0_3] : memref<5x16x24xf32, #tpu.memory_space<vmem>>, vector<1x16x24xf32>
    %2 = vector.shape_cast %1 : vector<1x16x24xf32> to vector<16x24xf32>
    %c0_4 = arith.constant 0 : index
    %c0_5 = arith.constant 0 : index
    %c0_6 = arith.constant 0 : index
    %3 = vector.load %arg3[%c0_4, %c0_5, %c0_6] : memref<5x128x128xf32, #tpu.memory_space<vmem>>, vector<1x128x128xf32>
    %4 = vector.shape_cast %3 : vector<1x128x128xf32> to vector<128x128xf32>
    %cst = arith.constant dense<0.000000e+00> : vector<24x128xf32>
    %5 = tpu.matmul %0, %4, %cst {dimension_numbers = #tpu.dot_dimension_numbers<[1], [0], [0], [1], [0, 0, 1, 1], [], []>} : vector<24x128xf32>, vector<128x128xf32>, vector<24x128xf32> -> vector<24x128xf32>
    %cst_7 = arith.constant dense<0.000000e+00> : vector<16x128xf32>
    %6 = tpu.matmul %2, %5, %cst_7 {dimension_numbers = #tpu.dot_dimension_numbers<[1], [0], [0], [1], [0, 0, 1, 1], [], []>} : vector<16x24xf32>, vector<24x128xf32>, vector<16x128xf32> -> vector<16x128xf32>
    %c1 = arith.constant 1 : index
    %c0_8 = arith.constant 0 : index
    %c0_9 = arith.constant 0 : index
    %7 = vector.load %arg2[%c1, %c0_8, %c0_9] : memref<5x16x24xf32, #tpu.memory_space<vmem>>, vector<1x16x24xf32>
    %8 = vector.shape_cast %7 : vector<1x16x24xf32> to vector<16x24xf32>
    %c1_10 = arith.constant 1 : index
    %c0_11 = arith.constant 0 : index
    %c0_12 = arith.constant 0 : index
    %9 = vector.load %arg3[%c1_10, %c0_11, %c0_12] : memref<5x128x128xf32, #tpu.memory_space<vmem>>, vector<1x128x128xf32>
    %10 = vector.shape_cast %9 : vector<1x128x128xf32> to vector<128x128xf32>
    %cst_13 = arith.constant dense<0.000000e+00> : vector<24x128xf32>
    %11 = tpu.matmul %0, %10, %cst_13 {dimension_numbers = #tpu.dot_dimension_numbers<[1], [0], [0], [1], [0, 0, 1, 1], [], []>} : vector<24x128xf32>, vector<128x128xf32>, vector<24x128xf32> -> vector<24x128xf32>
    %cst_14 = arith.constant dense<0.000000e+00> : vector<16x128xf32>
    %12 = tpu.matmul %8, %11, %cst_14 {dimension_numbers = #tpu.dot_dimension_numbers<[1], [0], [0], [1], [0, 0, 1, 1], [], []>} : vector<16x24xf32>, vector<24x128xf32>, vector<16x128xf32> -> vector<16x128xf32>
    %13 = arith.addf %6, %12 : vector<16x128xf32>
    %c2 = arith.constant 2 : index
    %c0_15 = arith.constant 0 : index
    %c0_16 = arith.constant 0 : index
    %14 = vector.load %arg2[%c2, %c0_15, %c0_16] : memref<5x16x24xf32, #tpu.memory_space<vmem>>, vector<1x16x24xf32>
    %15 = vector.shape_cast %14 : vector<1x16x24xf32> to vector<16x24xf32>
    %c2_17 = arith.constant 2 : index
    %c0_18 = arith.constant 0 : index
    %c0_19 = arith.constant 0 : index
    %16 = vector.load %arg3[%c2_17, %c0_18, %c0_19] : memref<5x128x128xf32, #tpu.memory_space<vmem>>, vector<1x128x128xf32>
    %17 = vector.shape_cast %16 : vector<1x128x128xf32> to vector<128x128xf32>
    %cst_20 = arith.constant dense<0.000000e+00> : vector<24x128xf32>
    %18 = tpu.matmul %0, %17, %cst_20 {dimension_numbers = #tpu.dot_dimension_numbers<[1], [0], [0], [1], [0, 0, 1, 1], [], []>} : vector<24x128xf32>, vector<128x128xf32>, vector<24x128xf32> -> vector<24x128xf32>
    %cst_21 = arith.constant dense<0.000000e+00> : vector<16x128xf32>
    %19 = tpu.matmul %15, %18, %cst_21 {dimension_numbers = #tpu.dot_dimension_numbers<[1], [0], [0], [1], [0, 0, 1, 1], [], []>} : vector<16x24xf32>, vector<24x128xf32>, vector<16x128xf32> -> vector<16x128xf32>
    %20 = arith.addf %13, %19 : vector<16x128xf32>
    %c3 = arith.constant 3 : index
    %c0_22 = arith.constant 0 : index
    %c0_23 = arith.constant 0 : index
    %21 = vector.load %arg2[%c3, %c0_22, %c0_23] : memref<5x16x24xf32, #tpu.memory_space<vmem>>, vector<1x16x24xf32>
    %22 = vector.shape_cast %21 : vector<1x16x24xf32> to vector<16x24xf32>
    %c3_24 = arith.constant 3 : index
    %c0_25 = arith.constant 0 : index
    %c0_26 = arith.constant 0 : index
    %23 = vector.load %arg3[%c3_24, %c0_25, %c0_26] : memref<5x128x128xf32, #tpu.memory_space<vmem>>, vector<1x128x128xf32>
    %24 = vector.shape_cast %23 : vector<1x128x128xf32> to vector<128x128xf32>
    %cst_27 = arith.constant dense<0.000000e+00> : vector<24x128xf32>
    %25 = tpu.matmul %0, %24, %cst_27 {dimension_numbers = #tpu.dot_dimension_numbers<[1], [0], [0], [1], [0, 0, 1, 1], [], []>} : vector<24x128xf32>, vector<128x128xf32>, vector<24x128xf32> -> vector<24x128xf32>
    %cst_28 = arith.constant dense<0.000000e+00> : vector<16x128xf32>
    %26 = tpu.matmul %22, %25, %cst_28 {dimension_numbers = #tpu.dot_dimension_numbers<[1], [0], [0], [1], [0, 0, 1, 1], [], []>} : vector<16x24xf32>, vector<24x128xf32>, vector<16x128xf32> -> vector<16x128xf32>
    %27 = arith.addf %20, %26 : vector<16x128xf32>
    %c4 = arith.constant 4 : index
    %c0_29 = arith.constant 0 : index
    %c0_30 = arith.constant 0 : index
    %28 = vector.load %arg2[%c4, %c0_29, %c0_30] : memref<5x16x24xf32, #tpu.memory_space<vmem>>, vector<1x16x24xf32>
    %29 = vector.shape_cast %28 : vector<1x16x24xf32> to vector<16x24xf32>
    %c4_31 = arith.constant 4 : index
    %c0_32 = arith.constant 0 : index
    %c0_33 = arith.constant 0 : index
    %30 = vector.load %arg3[%c4_31, %c0_32, %c0_33] : memref<5x128x128xf32, #tpu.memory_space<vmem>>, vector<1x128x128xf32>
    %31 = vector.shape_cast %30 : vector<1x128x128xf32> to vector<128x128xf32>
    %cst_34 = arith.constant dense<0.000000e+00> : vector<24x128xf32>
    %32 = tpu.matmul %0, %31, %cst_34 {dimension_numbers = #tpu.dot_dimension_numbers<[1], [0], [0], [1], [0, 0, 1, 1], [], []>} : vector<24x128xf32>, vector<128x128xf32>, vector<24x128xf32> -> vector<24x128xf32>
    %cst_35 = arith.constant dense<0.000000e+00> : vector<16x128xf32>
    %33 = tpu.matmul %29, %32, %cst_35 {dimension_numbers = #tpu.dot_dimension_numbers<[1], [0], [0], [1], [0, 0, 1, 1], [], []>} : vector<16x24xf32>, vector<24x128xf32>, vector<16x128xf32> -> vector<16x128xf32>
    %34 = arith.addf %27, %33 : vector<16x128xf32>
    %cst_36 = arith.constant dense<0.000000e+00> : vector<16xf32>
    %35 = vector.multi_reduction <add>, %34, %cst_36 [1] : vector<16x128xf32> to vector<16xf32>
    %36 = vector.shape_cast %35 : vector<16xf32> to vector<16x1xf32>
    %cst_37 = arith.constant 3.125000e-02 : f32
    %37 = vector.broadcast %cst_37 : f32 to vector<16x1xf32>
    %38 = arith.mulf %36, %37 : vector<16x1xf32>
    %39 = arith.mulf %34, %34 : vector<16x128xf32>
    %cst_38 = arith.constant dense<0.000000e+00> : vector<16xf32>
    %40 = vector.multi_reduction <add>, %39, %cst_38 [1] : vector<16x128xf32> to vector<16xf32>
    %41 = vector.shape_cast %40 : vector<16xf32> to vector<16x1xf32>
    %cst_39 = arith.constant 3.125000e-02 : f32
    %42 = vector.broadcast %cst_39 : f32 to vector<16x1xf32>
    %43 = arith.mulf %41, %42 : vector<16x1xf32>
    %44 = arith.mulf %38, %38 : vector<16x1xf32>
    %45 = arith.subf %43, %44 : vector<16x1xf32>
    %cst_40 = arith.constant 0.000000e+00 : f32
    %46 = vector.broadcast %cst_40 : f32 to vector<16x1xf32>
    %47 = arith.maximumf %45, %46 : vector<16x1xf32>
    %48 = vector.broadcast %38 : vector<16x1xf32> to vector<16x128xf32>
    %49 = arith.subf %34, %48 : vector<16x128xf32>
    %c0_41 = arith.constant 0 : index
    %c0_42 = arith.constant 0 : index
    %50 = vector.load %arg4[%c0_41, %c0_42] : memref<16x1xf32, #tpu.memory_space<vmem>>, vector<16x1xf32>
    %cst_43 = arith.constant 9.99999974E-6 : f32
    %51 = vector.broadcast %cst_43 : f32 to vector<16x1xf32>
    %52 = arith.addf %47, %51 : vector<16x1xf32>
    %53 = math.rsqrt %52 : vector<16x1xf32>
    %54 = arith.mulf %50, %53 : vector<16x1xf32>
    %55 = vector.broadcast %54 : vector<16x1xf32> to vector<16x128xf32>
    %56 = arith.mulf %49, %55 : vector<16x128xf32>
    %c0_44 = arith.constant 0 : index
    %c0_45 = arith.constant 0 : index
    %57 = vector.load %arg5[%c0_44, %c0_45] : memref<16x1xf32, #tpu.memory_space<vmem>>, vector<16x1xf32>
    %58 = vector.broadcast %57 : vector<16x1xf32> to vector<16x128xf32>
    %59 = arith.addf %56, %58 : vector<16x128xf32>
    %60 = vector.extract_strided_slice %59 {offsets = [0, 0], sizes = [8, 128], strides = [1, 1]} : vector<16x128xf32> to vector<8x128xf32>
    %61 = vector.extract_strided_slice %59 {offsets = [8, 0], sizes = [8, 128], strides = [1, 1]} : vector<16x128xf32> to vector<8x128xf32>
    %62 = arith.negf %61 : vector<8x128xf32>
    %63 = math.exp %62 : vector<8x128xf32>
    %cst_46 = arith.constant 1.000000e+00 : f32
    %64 = vector.broadcast %cst_46 : f32 to vector<8x128xf32>
    %65 = arith.addf %64, %63 : vector<8x128xf32>
    %66 = arith.divf %64, %65 : vector<8x128xf32>
    %67 = arith.mulf %60, %66 : vector<8x128xf32>
    %c0_47 = arith.constant 0 : index
    %c0_48 = arith.constant 0 : index
    %c0_49 = arith.constant 0 : index
    %68 = vector.load %arg6[%c0_47, %c0_48, %c0_49] : memref<4x16x8xf32, #tpu.memory_space<vmem>>, vector<1x16x8xf32>
    %69 = vector.shape_cast %68 : vector<1x16x8xf32> to vector<16x8xf32>
    %c0_50 = arith.constant 0 : index
    %c0_51 = arith.constant 0 : index
    %c0_52 = arith.constant 0 : index
    %70 = vector.load %arg7[%c0_50, %c0_51, %c0_52] : memref<4x128x128xf32, #tpu.memory_space<vmem>>, vector<1x128x128xf32>
    %71 = vector.shape_cast %70 : vector<1x128x128xf32> to vector<128x128xf32>
    %cst_53 = arith.constant dense<0.000000e+00> : vector<8x128xf32>
    %72 = tpu.matmul %67, %71, %cst_53 {dimension_numbers = #tpu.dot_dimension_numbers<[1], [0], [0], [1], [0, 0, 1, 1], [], []>} : vector<8x128xf32>, vector<128x128xf32>, vector<8x128xf32> -> vector<8x128xf32>
    %cst_54 = arith.constant dense<0.000000e+00> : vector<16x128xf32>
    %73 = tpu.matmul %69, %72, %cst_54 {dimension_numbers = #tpu.dot_dimension_numbers<[1], [0], [0], [1], [0, 0, 1, 1], [], []>} : vector<16x8xf32>, vector<8x128xf32>, vector<16x128xf32> -> vector<16x128xf32>
    %c1_55 = arith.constant 1 : index
    %c0_56 = arith.constant 0 : index
    %c0_57 = arith.constant 0 : index
    %74 = vector.load %arg6[%c1_55, %c0_56, %c0_57] : memref<4x16x8xf32, #tpu.memory_space<vmem>>, vector<1x16x8xf32>
    %75 = vector.shape_cast %74 : vector<1x16x8xf32> to vector<16x8xf32>
    %c1_58 = arith.constant 1 : index
    %c0_59 = arith.constant 0 : index
    %c0_60 = arith.constant 0 : index
    %76 = vector.load %arg7[%c1_58, %c0_59, %c0_60] : memref<4x128x128xf32, #tpu.memory_space<vmem>>, vector<1x128x128xf32>
    %77 = vector.shape_cast %76 : vector<1x128x128xf32> to vector<128x128xf32>
    %cst_61 = arith.constant dense<0.000000e+00> : vector<8x128xf32>
    %78 = tpu.matmul %67, %77, %cst_61 {dimension_numbers = #tpu.dot_dimension_numbers<[1], [0], [0], [1], [0, 0, 1, 1], [], []>} : vector<8x128xf32>, vector<128x128xf32>, vector<8x128xf32> -> vector<8x128xf32>
    %cst_62 = arith.constant dense<0.000000e+00> : vector<16x128xf32>
    %79 = tpu.matmul %75, %78, %cst_62 {dimension_numbers = #tpu.dot_dimension_numbers<[1], [0], [0], [1], [0, 0, 1, 1], [], []>} : vector<16x8xf32>, vector<8x128xf32>, vector<16x128xf32> -> vector<16x128xf32>
    %80 = arith.addf %73, %79 : vector<16x128xf32>
    %c2_63 = arith.constant 2 : index
    %c0_64 = arith.constant 0 : index
    %c0_65 = arith.constant 0 : index
    %81 = vector.load %arg6[%c2_63, %c0_64, %c0_65] : memref<4x16x8xf32, #tpu.memory_space<vmem>>, vector<1x16x8xf32>
    %82 = vector.shape_cast %81 : vector<1x16x8xf32> to vector<16x8xf32>
    %c2_66 = arith.constant 2 : index
    %c0_67 = arith.constant 0 : index
    %c0_68 = arith.constant 0 : index
    %83 = vector.load %arg7[%c2_66, %c0_67, %c0_68] : memref<4x128x128xf32, #tpu.memory_space<vmem>>, vector<1x128x128xf32>
    %84 = vector.shape_cast %83 : vector<1x128x128xf32> to vector<128x128xf32>
    %cst_69 = arith.constant dense<0.000000e+00> : vector<8x128xf32>
    %85 = tpu.matmul %67, %84, %cst_69 {dimension_numbers = #tpu.dot_dimension_numbers<[1], [0], [0], [1], [0, 0, 1, 1], [], []>} : vector<8x128xf32>, vector<128x128xf32>, vector<8x128xf32> -> vector<8x128xf32>
    %cst_70 = arith.constant dense<0.000000e+00> : vector<16x128xf32>
    %86 = tpu.matmul %82, %85, %cst_70 {dimension_numbers = #tpu.dot_dimension_numbers<[1], [0], [0], [1], [0, 0, 1, 1], [], []>} : vector<16x8xf32>, vector<8x128xf32>, vector<16x128xf32> -> vector<16x128xf32>
    %87 = arith.addf %80, %86 : vector<16x128xf32>
    %c3_71 = arith.constant 3 : index
    %c0_72 = arith.constant 0 : index
    %c0_73 = arith.constant 0 : index
    %88 = vector.load %arg6[%c3_71, %c0_72, %c0_73] : memref<4x16x8xf32, #tpu.memory_space<vmem>>, vector<1x16x8xf32>
    %89 = vector.shape_cast %88 : vector<1x16x8xf32> to vector<16x8xf32>
    %c3_74 = arith.constant 3 : index
    %c0_75 = arith.constant 0 : index
    %c0_76 = arith.constant 0 : index
    %90 = vector.load %arg7[%c3_74, %c0_75, %c0_76] : memref<4x128x128xf32, #tpu.memory_space<vmem>>, vector<1x128x128xf32>
    %91 = vector.shape_cast %90 : vector<1x128x128xf32> to vector<128x128xf32>
    %cst_77 = arith.constant dense<0.000000e+00> : vector<8x128xf32>
    %92 = tpu.matmul %67, %91, %cst_77 {dimension_numbers = #tpu.dot_dimension_numbers<[1], [0], [0], [1], [0, 0, 1, 1], [], []>} : vector<8x128xf32>, vector<128x128xf32>, vector<8x128xf32> -> vector<8x128xf32>
    %cst_78 = arith.constant dense<0.000000e+00> : vector<16x128xf32>
    %93 = tpu.matmul %89, %92, %cst_78 {dimension_numbers = #tpu.dot_dimension_numbers<[1], [0], [0], [1], [0, 0, 1, 1], [], []>} : vector<16x8xf32>, vector<8x128xf32>, vector<16x128xf32> -> vector<16x128xf32>
    %94 = arith.addf %87, %93 : vector<16x128xf32>
    %cst_79 = arith.constant dense<0.000000e+00> : vector<16xf32>
    %95 = vector.multi_reduction <add>, %94, %cst_79 [1] : vector<16x128xf32> to vector<16xf32>
    %96 = vector.shape_cast %95 : vector<16xf32> to vector<16x1xf32>
    %cst_80 = arith.constant 6.250000e-02 : f32
    %97 = vector.broadcast %cst_80 : f32 to vector<16x1xf32>
    %98 = arith.mulf %96, %97 : vector<16x1xf32>
    %99 = arith.mulf %94, %94 : vector<16x128xf32>
    %cst_81 = arith.constant dense<0.000000e+00> : vector<16xf32>
    %100 = vector.multi_reduction <add>, %99, %cst_81 [1] : vector<16x128xf32> to vector<16xf32>
    %101 = vector.shape_cast %100 : vector<16xf32> to vector<16x1xf32>
    %cst_82 = arith.constant 6.250000e-02 : f32
    %102 = vector.broadcast %cst_82 : f32 to vector<16x1xf32>
    %103 = arith.mulf %101, %102 : vector<16x1xf32>
    %104 = arith.mulf %98, %98 : vector<16x1xf32>
    %105 = arith.subf %103, %104 : vector<16x1xf32>
    %cst_83 = arith.constant 0.000000e+00 : f32
    %106 = vector.broadcast %cst_83 : f32 to vector<16x1xf32>
    %107 = arith.maximumf %105, %106 : vector<16x1xf32>
    %108 = vector.broadcast %98 : vector<16x1xf32> to vector<16x128xf32>
    %109 = arith.subf %94, %108 : vector<16x128xf32>
    %c0_84 = arith.constant 0 : index
    %c0_85 = arith.constant 0 : index
    %110 = vector.load %arg8[%c0_84, %c0_85] : memref<16x1xf32, #tpu.memory_space<vmem>>, vector<16x1xf32>
    %cst_86 = arith.constant 9.99999974E-6 : f32
    %111 = vector.broadcast %cst_86 : f32 to vector<16x1xf32>
    %112 = arith.addf %107, %111 : vector<16x1xf32>
    %113 = math.rsqrt %112 : vector<16x1xf32>
    %114 = arith.mulf %110, %113 : vector<16x1xf32>
    %115 = vector.broadcast %114 : vector<16x1xf32> to vector<16x128xf32>
    %116 = arith.mulf %109, %115 : vector<16x128xf32>
    %c0_87 = arith.constant 0 : index
    %c0_88 = arith.constant 0 : index
    %117 = vector.load %arg9[%c0_87, %c0_88] : memref<16x1xf32, #tpu.memory_space<vmem>>, vector<16x1xf32>
    %118 = vector.broadcast %117 : vector<16x1xf32> to vector<16x128xf32>
    %119 = arith.addf %116, %118 : vector<16x128xf32>
    %120 = vector.extract_strided_slice %119 {offsets = [0, 0], sizes = [8, 128], strides = [1, 1]} : vector<16x128xf32> to vector<8x128xf32>
    %121 = vector.extract_strided_slice %119 {offsets = [8, 0], sizes = [8, 128], strides = [1, 1]} : vector<16x128xf32> to vector<8x128xf32>
    %122 = arith.negf %121 : vector<8x128xf32>
    %123 = math.exp %122 : vector<8x128xf32>
    %cst_89 = arith.constant 1.000000e+00 : f32
    %124 = vector.broadcast %cst_89 : f32 to vector<8x128xf32>
    %125 = arith.addf %124, %123 : vector<8x128xf32>
    %126 = arith.divf %124, %125 : vector<8x128xf32>
    %127 = arith.mulf %120, %126 : vector<8x128xf32>
    %c0_90 = arith.constant 0 : index
    %c0_91 = arith.constant 0 : index
    %c0_92 = arith.constant 0 : index
    %128 = vector.load %arg10[%c0_90, %c0_91, %c0_92] : memref<4x16x8xf32, #tpu.memory_space<vmem>>, vector<1x16x8xf32>
    %129 = vector.shape_cast %128 : vector<1x16x8xf32> to vector<16x8xf32>
    %c0_93 = arith.constant 0 : index
    %c0_94 = arith.constant 0 : index
    %c0_95 = arith.constant 0 : index
    %130 = vector.load %arg11[%c0_93, %c0_94, %c0_95] : memref<4x128x128xf32, #tpu.memory_space<vmem>>, vector<1x128x128xf32>
    %131 = vector.shape_cast %130 : vector<1x128x128xf32> to vector<128x128xf32>
    %cst_96 = arith.constant dense<0.000000e+00> : vector<8x128xf32>
    %132 = tpu.matmul %127, %131, %cst_96 {dimension_numbers = #tpu.dot_dimension_numbers<[1], [0], [0], [1], [0, 0, 1, 1], [], []>} : vector<8x128xf32>, vector<128x128xf32>, vector<8x128xf32> -> vector<8x128xf32>
    %cst_97 = arith.constant dense<0.000000e+00> : vector<16x128xf32>
    %133 = tpu.matmul %129, %132, %cst_97 {dimension_numbers = #tpu.dot_dimension_numbers<[1], [0], [0], [1], [0, 0, 1, 1], [], []>} : vector<16x8xf32>, vector<8x128xf32>, vector<16x128xf32> -> vector<16x128xf32>
    %c1_98 = arith.constant 1 : index
    %c0_99 = arith.constant 0 : index
    %c0_100 = arith.constant 0 : index
    %134 = vector.load %arg10[%c1_98, %c0_99, %c0_100] : memref<4x16x8xf32, #tpu.memory_space<vmem>>, vector<1x16x8xf32>
    %135 = vector.shape_cast %134 : vector<1x16x8xf32> to vector<16x8xf32>
    %c1_101 = arith.constant 1 : index
    %c0_102 = arith.constant 0 : index
    %c0_103 = arith.constant 0 : index
    %136 = vector.load %arg11[%c1_101, %c0_102, %c0_103] : memref<4x128x128xf32, #tpu.memory_space<vmem>>, vector<1x128x128xf32>
    %137 = vector.shape_cast %136 : vector<1x128x128xf32> to vector<128x128xf32>
    %cst_104 = arith.constant dense<0.000000e+00> : vector<8x128xf32>
    %138 = tpu.matmul %127, %137, %cst_104 {dimension_numbers = #tpu.dot_dimension_numbers<[1], [0], [0], [1], [0, 0, 1, 1], [], []>} : vector<8x128xf32>, vector<128x128xf32>, vector<8x128xf32> -> vector<8x128xf32>
    %cst_105 = arith.constant dense<0.000000e+00> : vector<16x128xf32>
    %139 = tpu.matmul %135, %138, %cst_105 {dimension_numbers = #tpu.dot_dimension_numbers<[1], [0], [0], [1], [0, 0, 1, 1], [], []>} : vector<16x8xf32>, vector<8x128xf32>, vector<16x128xf32> -> vector<16x128xf32>
    %140 = arith.addf %133, %139 : vector<16x128xf32>
    %c2_106 = arith.constant 2 : index
    %c0_107 = arith.constant 0 : index
    %c0_108 = arith.constant 0 : index
    %141 = vector.load %arg10[%c2_106, %c0_107, %c0_108] : memref<4x16x8xf32, #tpu.memory_space<vmem>>, vector<1x16x8xf32>
    %142 = vector.shape_cast %141 : vector<1x16x8xf32> to vector<16x8xf32>
    %c2_109 = arith.constant 2 : index
    %c0_110 = arith.constant 0 : index
    %c0_111 = arith.constant 0 : index
    %143 = vector.load %arg11[%c2_109, %c0_110, %c0_111] : memref<4x128x128xf32, #tpu.memory_space<vmem>>, vector<1x128x128xf32>
    %144 = vector.shape_cast %143 : vector<1x128x128xf32> to vector<128x128xf32>
    %cst_112 = arith.constant dense<0.000000e+00> : vector<8x128xf32>
    %145 = tpu.matmul %127, %144, %cst_112 {dimension_numbers = #tpu.dot_dimension_numbers<[1], [0], [0], [1], [0, 0, 1, 1], [], []>} : vector<8x128xf32>, vector<128x128xf32>, vector<8x128xf32> -> vector<8x128xf32>
    %cst_113 = arith.constant dense<0.000000e+00> : vector<16x128xf32>
    %146 = tpu.matmul %142, %145, %cst_113 {dimension_numbers = #tpu.dot_dimension_numbers<[1], [0], [0], [1], [0, 0, 1, 1], [], []>} : vector<16x8xf32>, vector<8x128xf32>, vector<16x128xf32> -> vector<16x128xf32>
    %147 = arith.addf %140, %146 : vector<16x128xf32>
    %c3_114 = arith.constant 3 : index
    %c0_115 = arith.constant 0 : index
    %c0_116 = arith.constant 0 : index
    %148 = vector.load %arg10[%c3_114, %c0_115, %c0_116] : memref<4x16x8xf32, #tpu.memory_space<vmem>>, vector<1x16x8xf32>
    %149 = vector.shape_cast %148 : vector<1x16x8xf32> to vector<16x8xf32>
    %c3_117 = arith.constant 3 : index
    %c0_118 = arith.constant 0 : index
    %c0_119 = arith.constant 0 : index
    %150 = vector.load %arg11[%c3_117, %c0_118, %c0_119] : memref<4x128x128xf32, #tpu.memory_space<vmem>>, vector<1x128x128xf32>
    %151 = vector.shape_cast %150 : vector<1x128x128xf32> to vector<128x128xf32>
    %cst_120 = arith.constant dense<0.000000e+00> : vector<8x128xf32>
    %152 = tpu.matmul %127, %151, %cst_120 {dimension_numbers = #tpu.dot_dimension_numbers<[1], [0], [0], [1], [0, 0, 1, 1], [], []>} : vector<8x128xf32>, vector<128x128xf32>, vector<8x128xf32> -> vector<8x128xf32>
    %cst_121 = arith.constant dense<0.000000e+00> : vector<16x128xf32>
    %153 = tpu.matmul %149, %152, %cst_121 {dimension_numbers = #tpu.dot_dimension_numbers<[1], [0], [0], [1], [0, 0, 1, 1], [], []>} : vector<16x8xf32>, vector<8x128xf32>, vector<16x128xf32> -> vector<16x128xf32>
    %154 = arith.addf %147, %153 : vector<16x128xf32>
    %c0_122 = arith.constant 0 : index
    %c0_123 = arith.constant 0 : index
    %155 = vector.load %arg12[%c0_122, %c0_123] : memref<16x1xf32, #tpu.memory_space<vmem>>, vector<16x1xf32>
    %156 = vector.broadcast %155 : vector<16x1xf32> to vector<16x128xf32>
    %157 = arith.addf %154, %156 : vector<16x128xf32>
    %158 = vector.extract_strided_slice %157 {offsets = [0, 0], sizes = [8, 128], strides = [1, 1]} : vector<16x128xf32> to vector<8x128xf32>
    %159 = vector.extract_strided_slice %157 {offsets = [8, 0], sizes = [8, 128], strides = [1, 1]} : vector<16x128xf32> to vector<8x128xf32>
    %c0_124 = arith.constant 0 : index
    %c0_125 = arith.constant 0 : index
    %160 = vector.load %arg25[%c0_124, %c0_125] : memref<8x128xf32, #tpu.memory_space<vmem>>, vector<8x128xf32>
    tpu.vector_store %arg25[%c0_124, %c0_125], %158 {strides = array<i32>} : memref<8x128xf32, #tpu.memory_space<vmem>>, vector<8x128xf32>,
    %c0_126 = arith.constant 0 : index
    %c0_127 = arith.constant 0 : index
    %161 = vector.load %arg26[%c0_126, %c0_127] : memref<8x128xf32, #tpu.memory_space<vmem>>, vector<8x128xf32>
    tpu.vector_store %arg26[%c0_126, %c0_127], %159 {strides = array<i32>} : memref<8x128xf32, #tpu.memory_space<vmem>>, vector<8x128xf32>,
    %c0_128 = arith.constant 0 : index
    %c0_129 = arith.constant 0 : index
    %162 = vector.load %arg1[%c0_128, %c0_129] : memref<8x128xf32, #tpu.memory_space<vmem>>, vector<8x128xf32>
    %cst_130 = arith.constant 5.000000e-01 : f32
    %163 = vector.broadcast %cst_130 : f32 to vector<8x128xf32>
    %164 = arith.mulf %163, %159 : vector<8x128xf32>
    %165 = math.exp %164 : vector<8x128xf32>
    %166 = arith.mulf %162, %165 : vector<8x128xf32>
    %167 = arith.addf %158, %166 : vector<8x128xf32>
    %c0_131 = arith.constant 0 : index
    %c0_132 = arith.constant 0 : index
    %c0_133 = arith.constant 0 : index
    %168 = vector.load %arg13[%c0_131, %c0_132, %c0_133] : memref<4x16x8xf32, #tpu.memory_space<vmem>>, vector<1x16x8xf32>
    %169 = vector.shape_cast %168 : vector<1x16x8xf32> to vector<16x8xf32>
    %c0_134 = arith.constant 0 : index
    %c0_135 = arith.constant 0 : index
    %c0_136 = arith.constant 0 : index
    %170 = vector.load %arg14[%c0_134, %c0_135, %c0_136] : memref<4x128x128xf32, #tpu.memory_space<vmem>>, vector<1x128x128xf32>
    %171 = vector.shape_cast %170 : vector<1x128x128xf32> to vector<128x128xf32>
    %cst_137 = arith.constant dense<0.000000e+00> : vector<8x128xf32>
    %172 = tpu.matmul %167, %171, %cst_137 {dimension_numbers = #tpu.dot_dimension_numbers<[1], [0], [0], [1], [0, 0, 1, 1], [], []>} : vector<8x128xf32>, vector<128x128xf32>, vector<8x128xf32> -> vector<8x128xf32>
    %cst_138 = arith.constant dense<0.000000e+00> : vector<16x128xf32>
    %173 = tpu.matmul %169, %172, %cst_138 {dimension_numbers = #tpu.dot_dimension_numbers<[1], [0], [0], [1], [0, 0, 1, 1], [], []>} : vector<16x8xf32>, vector<8x128xf32>, vector<16x128xf32> -> vector<16x128xf32>
    %c1_139 = arith.constant 1 : index
    %c0_140 = arith.constant 0 : index
    %c0_141 = arith.constant 0 : index
    %174 = vector.load %arg13[%c1_139, %c0_140, %c0_141] : memref<4x16x8xf32, #tpu.memory_space<vmem>>, vector<1x16x8xf32>
    %175 = vector.shape_cast %174 : vector<1x16x8xf32> to vector<16x8xf32>
    %c1_142 = arith.constant 1 : index
    %c0_143 = arith.constant 0 : index
    %c0_144 = arith.constant 0 : index
    %176 = vector.load %arg14[%c1_142, %c0_143, %c0_144] : memref<4x128x128xf32, #tpu.memory_space<vmem>>, vector<1x128x128xf32>
    %177 = vector.shape_cast %176 : vector<1x128x128xf32> to vector<128x128xf32>
    %cst_145 = arith.constant dense<0.000000e+00> : vector<8x128xf32>
    %178 = tpu.matmul %167, %177, %cst_145 {dimension_numbers = #tpu.dot_dimension_numbers<[1], [0], [0], [1], [0, 0, 1, 1], [], []>} : vector<8x128xf32>, vector<128x128xf32>, vector<8x128xf32> -> vector<8x128xf32>
    %cst_146 = arith.constant dense<0.000000e+00> : vector<16x128xf32>
    %179 = tpu.matmul %175, %178, %cst_146 {dimension_numbers = #tpu.dot_dimension_numbers<[1], [0], [0], [1], [0, 0, 1, 1], [], []>} : vector<16x8xf32>, vector<8x128xf32>, vector<16x128xf32> -> vector<16x128xf32>
    %180 = arith.addf %173, %179 : vector<16x128xf32>
    %c2_147 = arith.constant 2 : index
    %c0_148 = arith.constant 0 : index
    %c0_149 = arith.constant 0 : index
    %181 = vector.load %arg13[%c2_147, %c0_148, %c0_149] : memref<4x16x8xf32, #tpu.memory_space<vmem>>, vector<1x16x8xf32>
    %182 = vector.shape_cast %181 : vector<1x16x8xf32> to vector<16x8xf32>
    %c2_150 = arith.constant 2 : index
    %c0_151 = arith.constant 0 : index
    %c0_152 = arith.constant 0 : index
    %183 = vector.load %arg14[%c2_150, %c0_151, %c0_152] : memref<4x128x128xf32, #tpu.memory_space<vmem>>, vector<1x128x128xf32>
    %184 = vector.shape_cast %183 : vector<1x128x128xf32> to vector<128x128xf32>
    %cst_153 = arith.constant dense<0.000000e+00> : vector<8x128xf32>
    %185 = tpu.matmul %167, %184, %cst_153 {dimension_numbers = #tpu.dot_dimension_numbers<[1], [0], [0], [1], [0, 0, 1, 1], [], []>} : vector<8x128xf32>, vector<128x128xf32>, vector<8x128xf32> -> vector<8x128xf32>
    %cst_154 = arith.constant dense<0.000000e+00> : vector<16x128xf32>
    %186 = tpu.matmul %182, %185, %cst_154 {dimension_numbers = #tpu.dot_dimension_numbers<[1], [0], [0], [1], [0, 0, 1, 1], [], []>} : vector<16x8xf32>, vector<8x128xf32>, vector<16x128xf32> -> vector<16x128xf32>
    %187 = arith.addf %180, %186 : vector<16x128xf32>
    %c3_155 = arith.constant 3 : index
    %c0_156 = arith.constant 0 : index
    %c0_157 = arith.constant 0 : index
    %188 = vector.load %arg13[%c3_155, %c0_156, %c0_157] : memref<4x16x8xf32, #tpu.memory_space<vmem>>, vector<1x16x8xf32>
    %189 = vector.shape_cast %188 : vector<1x16x8xf32> to vector<16x8xf32>
    %c3_158 = arith.constant 3 : index
    %c0_159 = arith.constant 0 : index
    %c0_160 = arith.constant 0 : index
    %190 = vector.load %arg14[%c3_158, %c0_159, %c0_160] : memref<4x128x128xf32, #tpu.memory_space<vmem>>, vector<1x128x128xf32>
    %191 = vector.shape_cast %190 : vector<1x128x128xf32> to vector<128x128xf32>
    %cst_161 = arith.constant dense<0.000000e+00> : vector<8x128xf32>
    %192 = tpu.matmul %167, %191, %cst_161 {dimension_numbers = #tpu.dot_dimension_numbers<[1], [0], [0], [1], [0, 0, 1, 1], [], []>} : vector<8x128xf32>, vector<128x128xf32>, vector<8x128xf32> -> vector<8x128xf32>
    %cst_162 = arith.constant dense<0.000000e+00> : vector<16x128xf32>
    %193 = tpu.matmul %189, %192, %cst_162 {dimension_numbers = #tpu.dot_dimension_numbers<[1], [0], [0], [1], [0, 0, 1, 1], [], []>} : vector<16x8xf32>, vector<8x128xf32>, vector<16x128xf32> -> vector<16x128xf32>
    %194 = arith.addf %187, %193 : vector<16x128xf32>
    %cst_163 = arith.constant dense<0.000000e+00> : vector<16xf32>
    %195 = vector.multi_reduction <add>, %194, %cst_163 [1] : vector<16x128xf32> to vector<16xf32>
    %196 = vector.shape_cast %195 : vector<16xf32> to vector<16x1xf32>
    %cst_164 = arith.constant 6.250000e-02 : f32
    %197 = vector.broadcast %cst_164 : f32 to vector<16x1xf32>
    %198 = arith.mulf %196, %197 : vector<16x1xf32>
    %199 = arith.mulf %194, %194 : vector<16x128xf32>
    %cst_165 = arith.constant dense<0.000000e+00> : vector<16xf32>
    %200 = vector.multi_reduction <add>, %199, %cst_165 [1] : vector<16x128xf32> to vector<16xf32>
    %201 = vector.shape_cast %200 : vector<16xf32> to vector<16x1xf32>
    %cst_166 = arith.constant 6.250000e-02 : f32
    %202 = vector.broadcast %cst_166 : f32 to vector<16x1xf32>
    %203 = arith.mulf %201, %202 : vector<16x1xf32>
    %204 = arith.mulf %198, %198 : vector<16x1xf32>
    %205 = arith.subf %203, %204 : vector<16x1xf32>
    %cst_167 = arith.constant 0.000000e+00 : f32
    %206 = vector.broadcast %cst_167 : f32 to vector<16x1xf32>
    %207 = arith.maximumf %205, %206 : vector<16x1xf32>
    %208 = vector.broadcast %198 : vector<16x1xf32> to vector<16x128xf32>
    %209 = arith.subf %194, %208 : vector<16x128xf32>
    %c0_168 = arith.constant 0 : index
    %c0_169 = arith.constant 0 : index
    %210 = vector.load %arg15[%c0_168, %c0_169] : memref<16x1xf32, #tpu.memory_space<vmem>>, vector<16x1xf32>
    %cst_170 = arith.constant 9.99999974E-6 : f32
    %211 = vector.broadcast %cst_170 : f32 to vector<16x1xf32>
    %212 = arith.addf %207, %211 : vector<16x1xf32>
    %213 = math.rsqrt %212 : vector<16x1xf32>
    %214 = arith.mulf %210, %213 : vector<16x1xf32>
    %215 = vector.broadcast %214 : vector<16x1xf32> to vector<16x128xf32>
    %216 = arith.mulf %209, %215 : vector<16x128xf32>
    %c0_171 = arith.constant 0 : index
    %c0_172 = arith.constant 0 : index
    %217 = vector.load %arg16[%c0_171, %c0_172] : memref<16x1xf32, #tpu.memory_space<vmem>>, vector<16x1xf32>
    %218 = vector.broadcast %217 : vector<16x1xf32> to vector<16x128xf32>
    %219 = arith.addf %216, %218 : vector<16x128xf32>
    %220 = vector.extract_strided_slice %219 {offsets = [0, 0], sizes = [8, 128], strides = [1, 1]} : vector<16x128xf32> to vector<8x128xf32>
    %221 = vector.extract_strided_slice %219 {offsets = [8, 0], sizes = [8, 128], strides = [1, 1]} : vector<16x128xf32> to vector<8x128xf32>
    %222 = arith.negf %221 : vector<8x128xf32>
    %223 = math.exp %222 : vector<8x128xf32>
    %cst_173 = arith.constant 1.000000e+00 : f32
    %224 = vector.broadcast %cst_173 : f32 to vector<8x128xf32>
    %225 = arith.addf %224, %223 : vector<8x128xf32>
    %226 = arith.divf %224, %225 : vector<8x128xf32>
    %227 = arith.mulf %220, %226 : vector<8x128xf32>
    %c0_174 = arith.constant 0 : index
    %c0_175 = arith.constant 0 : index
    %c0_176 = arith.constant 0 : index
    %228 = vector.load %arg17[%c0_174, %c0_175, %c0_176] : memref<4x16x8xf32, #tpu.memory_space<vmem>>, vector<1x16x8xf32>
    %229 = vector.shape_cast %228 : vector<1x16x8xf32> to vector<16x8xf32>
    %c0_177 = arith.constant 0 : index
    %c0_178 = arith.constant 0 : index
    %c0_179 = arith.constant 0 : index
    %230 = vector.load %arg18[%c0_177, %c0_178, %c0_179] : memref<4x128x128xf32, #tpu.memory_space<vmem>>, vector<1x128x128xf32>
    %231 = vector.shape_cast %230 : vector<1x128x128xf32> to vector<128x128xf32>
    %cst_180 = arith.constant dense<0.000000e+00> : vector<8x128xf32>
    %232 = tpu.matmul %227, %231, %cst_180 {dimension_numbers = #tpu.dot_dimension_numbers<[1], [0], [0], [1], [0, 0, 1, 1], [], []>} : vector<8x128xf32>, vector<128x128xf32>, vector<8x128xf32> -> vector<8x128xf32>
    %cst_181 = arith.constant dense<0.000000e+00> : vector<16x128xf32>
    %233 = tpu.matmul %229, %232, %cst_181 {dimension_numbers = #tpu.dot_dimension_numbers<[1], [0], [0], [1], [0, 0, 1, 1], [], []>} : vector<16x8xf32>, vector<8x128xf32>, vector<16x128xf32> -> vector<16x128xf32>
    %c1_182 = arith.constant 1 : index
    %c0_183 = arith.constant 0 : index
    %c0_184 = arith.constant 0 : index
    %234 = vector.load %arg17[%c1_182, %c0_183, %c0_184] : memref<4x16x8xf32, #tpu.memory_space<vmem>>, vector<1x16x8xf32>
    %235 = vector.shape_cast %234 : vector<1x16x8xf32> to vector<16x8xf32>
    %c1_185 = arith.constant 1 : index
    %c0_186 = arith.constant 0 : index
    %c0_187 = arith.constant 0 : index
    %236 = vector.load %arg18[%c1_185, %c0_186, %c0_187] : memref<4x128x128xf32, #tpu.memory_space<vmem>>, vector<1x128x128xf32>
    %237 = vector.shape_cast %236 : vector<1x128x128xf32> to vector<128x128xf32>
    %cst_188 = arith.constant dense<0.000000e+00> : vector<8x128xf32>
    %238 = tpu.matmul %227, %237, %cst_188 {dimension_numbers = #tpu.dot_dimension_numbers<[1], [0], [0], [1], [0, 0, 1, 1], [], []>} : vector<8x128xf32>, vector<128x128xf32>, vector<8x128xf32> -> vector<8x128xf32>
    %cst_189 = arith.constant dense<0.000000e+00> : vector<16x128xf32>
    %239 = tpu.matmul %235, %238, %cst_189 {dimension_numbers = #tpu.dot_dimension_numbers<[1], [0], [0], [1], [0, 0, 1, 1], [], []>} : vector<16x8xf32>, vector<8x128xf32>, vector<16x128xf32> -> vector<16x128xf32>
    %240 = arith.addf %233, %239 : vector<16x128xf32>
    %c2_190 = arith.constant 2 : index
    %c0_191 = arith.constant 0 : index
    %c0_192 = arith.constant 0 : index
    %241 = vector.load %arg17[%c2_190, %c0_191, %c0_192] : memref<4x16x8xf32, #tpu.memory_space<vmem>>, vector<1x16x8xf32>
    %242 = vector.shape_cast %241 : vector<1x16x8xf32> to vector<16x8xf32>
    %c2_193 = arith.constant 2 : index
    %c0_194 = arith.constant 0 : index
    %c0_195 = arith.constant 0 : index
    %243 = vector.load %arg18[%c2_193, %c0_194, %c0_195] : memref<4x128x128xf32, #tpu.memory_space<vmem>>, vector<1x128x128xf32>
    %244 = vector.shape_cast %243 : vector<1x128x128xf32> to vector<128x128xf32>
    %cst_196 = arith.constant dense<0.000000e+00> : vector<8x128xf32>
    %245 = tpu.matmul %227, %244, %cst_196 {dimension_numbers = #tpu.dot_dimension_numbers<[1], [0], [0], [1], [0, 0, 1, 1], [], []>} : vector<8x128xf32>, vector<128x128xf32>, vector<8x128xf32> -> vector<8x128xf32>
    %cst_197 = arith.constant dense<0.000000e+00> : vector<16x128xf32>
    %246 = tpu.matmul %242, %245, %cst_197 {dimension_numbers = #tpu.dot_dimension_numbers<[1], [0], [0], [1], [0, 0, 1, 1], [], []>} : vector<16x8xf32>, vector<8x128xf32>, vector<16x128xf32> -> vector<16x128xf32>
    %247 = arith.addf %240, %246 : vector<16x128xf32>
    %c3_198 = arith.constant 3 : index
    %c0_199 = arith.constant 0 : index
    %c0_200 = arith.constant 0 : index
    %248 = vector.load %arg17[%c3_198, %c0_199, %c0_200] : memref<4x16x8xf32, #tpu.memory_space<vmem>>, vector<1x16x8xf32>
    %249 = vector.shape_cast %248 : vector<1x16x8xf32> to vector<16x8xf32>
    %c3_201 = arith.constant 3 : index
    %c0_202 = arith.constant 0 : index
    %c0_203 = arith.constant 0 : index
    %250 = vector.load %arg18[%c3_201, %c0_202, %c0_203] : memref<4x128x128xf32, #tpu.memory_space<vmem>>, vector<1x128x128xf32>
    %251 = vector.shape_cast %250 : vector<1x128x128xf32> to vector<128x128xf32>
    %cst_204 = arith.constant dense<0.000000e+00> : vector<8x128xf32>
    %252 = tpu.matmul %227, %251, %cst_204 {dimension_numbers = #tpu.dot_dimension_numbers<[1], [0], [0], [1], [0, 0, 1, 1], [], []>} : vector<8x128xf32>, vector<128x128xf32>, vector<8x128xf32> -> vector<8x128xf32>
    %cst_205 = arith.constant dense<0.000000e+00> : vector<16x128xf32>
    %253 = tpu.matmul %249, %252, %cst_205 {dimension_numbers = #tpu.dot_dimension_numbers<[1], [0], [0], [1], [0, 0, 1, 1], [], []>} : vector<16x8xf32>, vector<8x128xf32>, vector<16x128xf32> -> vector<16x128xf32>
    %254 = arith.addf %247, %253 : vector<16x128xf32>
    %cst_206 = arith.constant dense<0.000000e+00> : vector<16xf32>
    %255 = vector.multi_reduction <add>, %254, %cst_206 [1] : vector<16x128xf32> to vector<16xf32>
    %256 = vector.shape_cast %255 : vector<16xf32> to vector<16x1xf32>
    %cst_207 = arith.constant 3.125000e-02 : f32
    %257 = vector.broadcast %cst_207 : f32 to vector<16x1xf32>
    %258 = arith.mulf %256, %257 : vector<16x1xf32>
    %259 = arith.mulf %254, %254 : vector<16x128xf32>
    %cst_208 = arith.constant dense<0.000000e+00> : vector<16xf32>
    %260 = vector.multi_reduction <add>, %259, %cst_208 [1] : vector<16x128xf32> to vector<16xf32>
    %261 = vector.shape_cast %260 : vector<16xf32> to vector<16x1xf32>
    %cst_209 = arith.constant 3.125000e-02 : f32
    %262 = vector.broadcast %cst_209 : f32 to vector<16x1xf32>
    %263 = arith.mulf %261, %262 : vector<16x1xf32>
    %264 = arith.mulf %258, %258 : vector<16x1xf32>
    %265 = arith.subf %263, %264 : vector<16x1xf32>
    %cst_210 = arith.constant 0.000000e+00 : f32
    %266 = vector.broadcast %cst_210 : f32 to vector<16x1xf32>
    %267 = arith.maximumf %265, %266 : vector<16x1xf32>
    %268 = vector.broadcast %258 : vector<16x1xf32> to vector<16x128xf32>
    %269 = arith.subf %254, %268 : vector<16x128xf32>
    %c0_211 = arith.constant 0 : index
    %c0_212 = arith.constant 0 : index
    %270 = vector.load %arg19[%c0_211, %c0_212] : memref<16x1xf32, #tpu.memory_space<vmem>>, vector<16x1xf32>
    %cst_213 = arith.constant 9.99999974E-6 : f32
    %271 = vector.broadcast %cst_213 : f32 to vector<16x1xf32>
    %272 = arith.addf %267, %271 : vector<16x1xf32>
    %273 = math.rsqrt %272 : vector<16x1xf32>
    %274 = arith.mulf %270, %273 : vector<16x1xf32>
    %275 = vector.broadcast %274 : vector<16x1xf32> to vector<16x128xf32>
    %276 = arith.mulf %269, %275 : vector<16x128xf32>
    %c0_214 = arith.constant 0 : index
    %c0_215 = arith.constant 0 : index
    %277 = vector.load %arg20[%c0_214, %c0_215] : memref<16x1xf32, #tpu.memory_space<vmem>>, vector<16x1xf32>
    %278 = vector.broadcast %277 : vector<16x1xf32> to vector<16x128xf32>
    %279 = arith.addf %276, %278 : vector<16x128xf32>
    %280 = vector.extract_strided_slice %279 {offsets = [0, 0], sizes = [8, 128], strides = [1, 1]} : vector<16x128xf32> to vector<8x128xf32>
    %281 = vector.extract_strided_slice %279 {offsets = [8, 0], sizes = [8, 128], strides = [1, 1]} : vector<16x128xf32> to vector<8x128xf32>
    %282 = arith.negf %281 : vector<8x128xf32>
    %283 = math.exp %282 : vector<8x128xf32>
    %cst_216 = arith.constant 1.000000e+00 : f32
    %284 = vector.broadcast %cst_216 : f32 to vector<8x128xf32>
    %285 = arith.addf %284, %283 : vector<8x128xf32>
    %286 = arith.divf %284, %285 : vector<8x128xf32>
    %287 = arith.mulf %280, %286 : vector<8x128xf32>
    %c0_217 = arith.constant 0 : index
    %c0_218 = arith.constant 0 : index
    %c0_219 = arith.constant 0 : index
    %288 = vector.load %arg21[%c0_217, %c0_218, %c0_219] : memref<5x24x8xf32, #tpu.memory_space<vmem>>, vector<1x24x8xf32>
    %289 = vector.shape_cast %288 : vector<1x24x8xf32> to vector<24x8xf32>
    %c0_220 = arith.constant 0 : index
    %c0_221 = arith.constant 0 : index
    %c0_222 = arith.constant 0 : index
    %290 = vector.load %arg22[%c0_220, %c0_221, %c0_222] : memref<5x128x128xf32, #tpu.memory_space<vmem>>, vector<1x128x128xf32>
    %291 = vector.shape_cast %290 : vector<1x128x128xf32> to vector<128x128xf32>
    %cst_223 = arith.constant dense<0.000000e+00> : vector<8x128xf32>
    %292 = tpu.matmul %287, %291, %cst_223 {dimension_numbers = #tpu.dot_dimension_numbers<[1], [0], [0], [1], [0, 0, 1, 1], [], []>} : vector<8x128xf32>, vector<128x128xf32>, vector<8x128xf32> -> vector<8x128xf32>
    %cst_224 = arith.constant dense<0.000000e+00> : vector<24x128xf32>
    %293 = tpu.matmul %289, %292, %cst_224 {dimension_numbers = #tpu.dot_dimension_numbers<[1], [0], [0], [1], [0, 0, 1, 1], [], []>} : vector<24x8xf32>, vector<8x128xf32>, vector<24x128xf32> -> vector<24x128xf32>
    %c1_225 = arith.constant 1 : index
    %c0_226 = arith.constant 0 : index
    %c0_227 = arith.constant 0 : index
    %294 = vector.load %arg21[%c1_225, %c0_226, %c0_227] : memref<5x24x8xf32, #tpu.memory_space<vmem>>, vector<1x24x8xf32>
    %295 = vector.shape_cast %294 : vector<1x24x8xf32> to vector<24x8xf32>
    %c1_228 = arith.constant 1 : index
    %c0_229 = arith.constant 0 : index
    %c0_230 = arith.constant 0 : index
    %296 = vector.load %arg22[%c1_228, %c0_229, %c0_230] : memref<5x128x128xf32, #tpu.memory_space<vmem>>, vector<1x128x128xf32>
    %297 = vector.shape_cast %296 : vector<1x128x128xf32> to vector<128x128xf32>
    %cst_231 = arith.constant dense<0.000000e+00> : vector<8x128xf32>
    %298 = tpu.matmul %287, %297, %cst_231 {dimension_numbers = #tpu.dot_dimension_numbers<[1], [0], [0], [1], [0, 0, 1, 1], [], []>} : vector<8x128xf32>, vector<128x128xf32>, vector<8x128xf32> -> vector<8x128xf32>
    %cst_232 = arith.constant dense<0.000000e+00> : vector<24x128xf32>
    %299 = tpu.matmul %295, %298, %cst_232 {dimension_numbers = #tpu.dot_dimension_numbers<[1], [0], [0], [1], [0, 0, 1, 1], [], []>} : vector<24x8xf32>, vector<8x128xf32>, vector<24x128xf32> -> vector<24x128xf32>
    %300 = arith.addf %293, %299 : vector<24x128xf32>
    %c2_233 = arith.constant 2 : index
    %c0_234 = arith.constant 0 : index
    %c0_235 = arith.constant 0 : index
    %301 = vector.load %arg21[%c2_233, %c0_234, %c0_235] : memref<5x24x8xf32, #tpu.memory_space<vmem>>, vector<1x24x8xf32>
    %302 = vector.shape_cast %301 : vector<1x24x8xf32> to vector<24x8xf32>
    %c2_236 = arith.constant 2 : index
    %c0_237 = arith.constant 0 : index
    %c0_238 = arith.constant 0 : index
    %303 = vector.load %arg22[%c2_236, %c0_237, %c0_238] : memref<5x128x128xf32, #tpu.memory_space<vmem>>, vector<1x128x128xf32>
    %304 = vector.shape_cast %303 : vector<1x128x128xf32> to vector<128x128xf32>
    %cst_239 = arith.constant dense<0.000000e+00> : vector<8x128xf32>
    %305 = tpu.matmul %287, %304, %cst_239 {dimension_numbers = #tpu.dot_dimension_numbers<[1], [0], [0], [1], [0, 0, 1, 1], [], []>} : vector<8x128xf32>, vector<128x128xf32>, vector<8x128xf32> -> vector<8x128xf32>
    %cst_240 = arith.constant dense<0.000000e+00> : vector<24x128xf32>
    %306 = tpu.matmul %302, %305, %cst_240 {dimension_numbers = #tpu.dot_dimension_numbers<[1], [0], [0], [1], [0, 0, 1, 1], [], []>} : vector<24x8xf32>, vector<8x128xf32>, vector<24x128xf32> -> vector<24x128xf32>
    %307 = arith.addf %300, %306 : vector<24x128xf32>
    %c3_241 = arith.constant 3 : index
    %c0_242 = arith.constant 0 : index
    %c0_243 = arith.constant 0 : index
    %308 = vector.load %arg21[%c3_241, %c0_242, %c0_243] : memref<5x24x8xf32, #tpu.memory_space<vmem>>, vector<1x24x8xf32>
    %309 = vector.shape_cast %308 : vector<1x24x8xf32> to vector<24x8xf32>
    %c3_244 = arith.constant 3 : index
    %c0_245 = arith.constant 0 : index
    %c0_246 = arith.constant 0 : index
    %310 = vector.load %arg22[%c3_244, %c0_245, %c0_246] : memref<5x128x128xf32, #tpu.memory_space<vmem>>, vector<1x128x128xf32>
    %311 = vector.shape_cast %310 : vector<1x128x128xf32> to vector<128x128xf32>
    %cst_247 = arith.constant dense<0.000000e+00> : vector<8x128xf32>
    %312 = tpu.matmul %287, %311, %cst_247 {dimension_numbers = #tpu.dot_dimension_numbers<[1], [0], [0], [1], [0, 0, 1, 1], [], []>} : vector<8x128xf32>, vector<128x128xf32>, vector<8x128xf32> -> vector<8x128xf32>
    %cst_248 = arith.constant dense<0.000000e+00> : vector<24x128xf32>
    %313 = tpu.matmul %309, %312, %cst_248 {dimension_numbers = #tpu.dot_dimension_numbers<[1], [0], [0], [1], [0, 0, 1, 1], [], []>} : vector<24x8xf32>, vector<8x128xf32>, vector<24x128xf32> -> vector<24x128xf32>
    %314 = arith.addf %307, %313 : vector<24x128xf32>
    %c4_249 = arith.constant 4 : index
    %c0_250 = arith.constant 0 : index
    %c0_251 = arith.constant 0 : index
    %315 = vector.load %arg21[%c4_249, %c0_250, %c0_251] : memref<5x24x8xf32, #tpu.memory_space<vmem>>, vector<1x24x8xf32>
    %316 = vector.shape_cast %315 : vector<1x24x8xf32> to vector<24x8xf32>
    %c4_252 = arith.constant 4 : index
    %c0_253 = arith.constant 0 : index
    %c0_254 = arith.constant 0 : index
    %317 = vector.load %arg22[%c4_252, %c0_253, %c0_254] : memref<5x128x128xf32, #tpu.memory_space<vmem>>, vector<1x128x128xf32>
    %318 = vector.shape_cast %317 : vector<1x128x128xf32> to vector<128x128xf32>
    %cst_255 = arith.constant dense<0.000000e+00> : vector<8x128xf32>
    %319 = tpu.matmul %287, %318, %cst_255 {dimension_numbers = #tpu.dot_dimension_numbers<[1], [0], [0], [1], [0, 0, 1, 1], [], []>} : vector<8x128xf32>, vector<128x128xf32>, vector<8x128xf32> -> vector<8x128xf32>
    %cst_256 = arith.constant dense<0.000000e+00> : vector<24x128xf32>
    %320 = tpu.matmul %316, %319, %cst_256 {dimension_numbers = #tpu.dot_dimension_numbers<[1], [0], [0], [1], [0, 0, 1, 1], [], []>} : vector<24x8xf32>, vector<8x128xf32>, vector<24x128xf32> -> vector<24x128xf32>
    %321 = arith.addf %314, %320 : vector<24x128xf32>
    %c0_257 = arith.constant 0 : index
    %c0_258 = arith.constant 0 : index
    %322 = vector.load %arg23[%c0_257, %c0_258] : memref<24x1xf32, #tpu.memory_space<vmem>>, vector<24x1xf32>
    %323 = vector.broadcast %322 : vector<24x1xf32> to vector<24x128xf32>
    %324 = arith.addf %321, %323 : vector<24x128xf32>
    %cst_259 = arith.constant 9.99999997E-7 : f32
    %325 = vector.broadcast %cst_259 : f32 to vector<24x128xf32>
    %326 = arith.addf %324, %325 : vector<24x128xf32>
    %c0_260 = arith.constant 0 : index
    %c0_261 = arith.constant 0 : index
    %327 = vector.load %arg24[%c0_260, %c0_261] : memref<24x128xf32, #tpu.memory_space<vmem>>, vector<24x128xf32>
    tpu.vector_store %arg24[%c0_260, %c0_261], %326 {strides = array<i32>} : memref<24x128xf32, #tpu.memory_space<vmem>>, vector<24x128xf32>,
    return
  }
}

</mosaic_0001>

<llo_original>
// kernel: vae_forward.1
$region0: #{vae_forward.1}
  #allocation0 [shape = 'u32[]', space=smem, size = 0x4, offset = 0x4, fixed_abs, tag = 'smem constant byte address 0x4 - core index']
  #allocation1 [shape = 'u32[72,128]{1,0:T(1,128)}', space=vmem, size = 0x9000, scoped, tag = 'internal scratch']
  %s0 = inlined_call_operand.vmem [shape: f32[24,128], index: 0, kind: input, shape index: {}]
  %s1 = inlined_call_operand.vmem [shape: f32[8,128], index: 1, kind: input, shape index: {}]
  %s2 = inlined_call_operand.vmem [shape: f32[5,16,24], index: 2, kind: input, shape index: {}]
  %s3 = inlined_call_operand.hbm [shape: f32[5,128,128], index: 3, kind: input, shape index: {}]
  %s4 = inlined_call_operand.vmem [shape: f32[16,1], index: 4, kind: input, shape index: {}]
  %s5 = inlined_call_operand.vmem [shape: f32[16,1], index: 5, kind: input, shape index: {}]
  %s6 = inlined_call_operand.vmem [shape: f32[4,16,8], index: 6, kind: input, shape index: {}]
  %s7 = inlined_call_operand.hbm [shape: f32[4,128,128], index: 7, kind: input, shape index: {}]
  %s8 = inlined_call_operand.vmem [shape: f32[16,1], index: 8, kind: input, shape index: {}]
  %s9 = inlined_call_operand.vmem [shape: f32[16,1], index: 9, kind: input, shape index: {}]
  %s10 = inlined_call_operand.vmem [shape: f32[4,16,8], index: 10, kind: input, shape index: {}]
  %s11 = inlined_call_operand.hbm [shape: f32[4,128,128], index: 11, kind: input, shape index: {}]
  %s12 = inlined_call_operand.vmem [shape: f32[16,1], index: 12, kind: input, shape index: {}]
  %s13 = inlined_call_operand.vmem [shape: f32[4,16,8], index: 13, kind: input, shape index: {}]
  %s14 = inlined_call_operand.hbm [shape: f32[4,128,128], index: 14, kind: input, shape index: {}]
  %s15 = inlined_call_operand.vmem [shape: f32[16,1], index: 15, kind: input, shape index: {}]
  %s16 = inlined_call_operand.vmem [shape: f32[16,1], index: 16, kind: input, shape index: {}]
  %s17 = inlined_call_operand.vmem [shape: f32[4,16,8], index: 17, kind: input, shape index: {}]
  %s18 = inlined_call_operand.hbm [shape: f32[4,128,128], index: 18, kind: input, shape index: {}]
  %s19 = inlined_call_operand.vmem [shape: f32[16,1], index: 19, kind: input, shape index: {}]
  %s20 = inlined_call_operand.vmem [shape: f32[16,1], index: 20, kind: input, shape index: {}]
  %s21 = inlined_call_operand.vmem [shape: f32[5,24,8], index: 21, kind: input, shape index: {}]
  %s22 = inlined_call_operand.hbm [shape: f32[5,128,128], index: 22, kind: input, shape index: {}]
  %s23 = inlined_call_operand.vmem [shape: f32[24,1], index: 23, kind: input, shape index: {}]
  %s24 = inlined_call_operand.vmem [shape: f32[24,128], index: 24, kind: output, shape index: {0}]
  %s25 = inlined_call_operand.vmem [shape: f32[8,128], index: 25, kind: output, shape index: {1}]
  %s26 = inlined_call_operand.vmem [shape: f32[8,128], index: 26, kind: output, shape index: {2}]
  %27 = xla_tuple %s24, %s25, %s26
  %s28 = sld [smem:[#allocation0]]
  $region146: #{vae_forward.1} parent=0
    _
  %s30 = ssub.s32 1, %s28
  %s31 = scalar_select 0, %s30, %s28
  $region1: #{vae_forward.1} parent=0
    #allocation2 [shape = 'u8[327680]{0}', space=vmem, size = 0x50000, scoped, tag = 'input window, operand 3, single buffered']
    #allocation3 [shape = 's32[1]{0}', space=sflag, size = 0x4, scoped, tag = 'scoped memory for vae_forward.1']
    #allocation4 [shape = 'u8[262144]{0}', space=vmem, size = 0x40000, scoped, tag = 'input window, operand 7, single buffered']
    #allocation5 [shape = 's32[1]{0}', space=sflag, size = 0x4, scoped, tag = 'scoped memory for vae_forward.1']
    #allocation6 [shape = 'u8[262144]{0}', space=vmem, size = 0x40000, scoped, tag = 'input window, operand 11, single buffered']
    #allocation7 [shape = 'u8[262144]{0}', space=vmem, size = 0x40000, scoped, tag = 'input window, operand 14, single buffered']
    #allocation8 [shape = 's32[1]{0}', space=sflag, size = 0x4, scoped, tag = 'scoped memory for vae_forward.1']
    #allocation9 [shape = 'u8[262144]{0}', space=vmem, size = 0x40000, scoped, tag = 'input window, operand 18, single buffered']
    #allocation10 [shape = 'u8[327680]{0}', space=vmem, size = 0x50000, scoped, tag = 'input window, operand 22, single buffered']
    #allocation11 [shape = 's32[1]{0}', space=sflag, size = 0x4, scoped, tag = 'scoped memory for vae_forward.1']
    %32 = vsyncpa [#allocation3], 0
    %33 = vsyncpa [#allocation5], 0
    %34 = vsyncpa [#allocation8], 0
    %35 = vsyncpa [#allocation11], 0
    // Predicated region
    $region2: #{vae_forward.1} parent=1 // pred_check
      _
    $region3: #{vae_forward.1} parent=1 // pred_check_branch
      %37 = sbr.rel (0) target = $region5
    $region4: #{vae_forward.1} parent=1 // pred_region
      _
    $region5: #{vae_forward.1} parent=1 // pred_fallthru
      _
    // Predicated region
    $region6: #{vae_forward.1} parent=1 // pred_check
      _
    $region7: #{vae_forward.1} parent=1 // pred_check_branch
      %39 = sbr.rel (0) target = $region9
    $region8: #{vae_forward.1} parent=1 // pred_region
      _
    $region9: #{vae_forward.1} parent=1 // pred_fallthru
      _
    // Predicated region
    $region10: #{vae_forward.1} parent=1 // pred_check
      _
    $region11: #{vae_forward.1} parent=1 // pred_check_branch
      %41 = sbr.rel (0) target = $region13
    $region12: #{vae_forward.1} parent=1 // pred_region
      _
    $region13: #{vae_forward.1} parent=1 // pred_fallthru
      _
    // Predicated region
    $region14: #{vae_forward.1} parent=1 // pred_check
      _
    $region15: #{vae_forward.1} parent=1 // pred_check_branch
      %43 = sbr.rel (0) target = $region17
    $region16: #{vae_forward.1} parent=1 // pred_region
      %45 = vsyncadd [#allocation3], 0
      %s46 = sshll.u32 %s3, 4
      %s47 = int_to_ptr.hbm [resolvable:$true] %s46
      %s48 = sshll.u32 [#allocation2], 4
      %s49 = int_to_ptr.vmem [resolvable:$true] %s48
      %54 = dma.hbm_to_vmem [thread:$0]  %s47, 10240, %s49, [#allocation3], 128, 128, 8
    $region17: #{vae_forward.1} parent=1 // pred_fallthru
      _
    // Predicated region
    $region18: #{vae_forward.1} parent=1 // pred_check
      _
    $region19: #{vae_forward.1} parent=1 // pred_check_branch
      %56 = sbr.rel (0) target = $region21
    $region20: #{vae_forward.1} parent=1 // pred_region
      _
    $region21: #{vae_forward.1} parent=1 // pred_fallthru
      _
    // Predicated region
    $region22: #{vae_forward.1} parent=1 // pred_check
      _
    $region23: #{vae_forward.1} parent=1 // pred_check_branch
      %58 = sbr.rel (0) target = $region25
    $region24: #{vae_forward.1} parent=1 // pred_region
      _
    $region25: #{vae_forward.1} parent=1 // pred_fallthru
      _
    // Predicated region
    $region26: #{vae_forward.1} parent=1 // pred_check
      _
    $region27: #{vae_forward.1} parent=1 // pred_check_branch
      %60 = sbr.rel (0) target = $region29
    $region28: #{vae_forward.1} parent=1 // pred_region
      _
    $region29: #{vae_forward.1} parent=1 // pred_fallthru
      _
    // Predicated region
    $region30: #{vae_forward.1} parent=1 // pred_check
      _
    $region31: #{vae_forward.1} parent=1 // pred_check_branch
      %62 = sbr.rel (0) target = $region33
    $region32: #{vae_forward.1} parent=1 // pred_region
      %64 = vsyncadd [#allocation5], 0
      %s65 = sshll.u32 %s7, 4
      %s66 = int_to_ptr.hbm [resolvable:$true] %s65
      %s67 = sshll.u32 [#allocation4], 4
      %s68 = int_to_ptr.vmem [resolvable:$true] %s67
      %73 = dma.hbm_to_vmem [thread:$0]  %s66, 8192, %s68, [#allocation5], 128, 128, 8
    $region33: #{vae_forward.1} parent=1 // pred_fallthru
      _
    // Predicated region
    $region34: #{vae_forward.1} parent=1 // pred_check
      _
    $region35: #{vae_forward.1} parent=1 // pred_check_branch
      %75 = sbr.rel (0) target = $region37
    $region36: #{vae_forward.1} parent=1 // pred_region
      _
    $region37: #{vae_forward.1} parent=1 // pred_fallthru
      _
    // Predicated region
    $region38: #{vae_forward.1} parent=1 // pred_check
      _
    $region39: #{vae_forward.1} parent=1 // pred_check_branch
      %77 = sbr.rel (0) target = $region41
    $region40: #{vae_forward.1} parent=1 // pred_region
      _
    $region41: #{vae_forward.1} parent=1 // pred_fallthru
      _
    // Predicated region
    $region42: #{vae_forward.1} parent=1 // pred_check
      _
    $region43: #{vae_forward.1} parent=1 // pred_check_branch
      %79 = sbr.rel (0) target = $region45
    $region44: #{vae_forward.1} parent=1 // pred_region
      _
    $region45: #{vae_forward.1} parent=1 // pred_fallthru
      _
    // Predicated region
    $region46: #{vae_forward.1} parent=1 // pred_check
      _
    $region47: #{vae_forward.1} parent=1 // pred_check_branch
      %81 = sbr.rel (0) target = $region49
    $region48: #{vae_forward.1} parent=1 // pred_region
      %83 = vsyncadd [#allocation5], 0
      %s84 = sshll.u32 %s11, 4
      %s85 = int_to_ptr.hbm [resolvable:$true] %s84
      %s86 = sshll.u32 [#allocation6], 4
      %s87 = int_to_ptr.vmem [resolvable:$true] %s86
      %92 = dma.hbm_to_vmem [thread:$0]  %s85, 8192, %s87, [#allocation5], 128, 128, 8
    $region49: #{vae_forward.1} parent=1 // pred_fallthru
      _
    // Predicated region
    $region50: #{vae_forward.1} parent=1 // pred_check
      _
    $region51: #{vae_forward.1} parent=1 // pred_check_branch
      %94 = sbr.rel (0) target = $region53
    $region52: #{vae_forward.1} parent=1 // pred_region
      _
    $region53: #{vae_forward.1} parent=1 // pred_fallthru
      _
    // Predicated region
    $region54: #{vae_forward.1} parent=1 // pred_check
      _
    $region55: #{vae_forward.1} parent=1 // pred_check_branch
      %96 = sbr.rel (0) target = $region57
    $region56: #{vae_forward.1} parent=1 // pred_region
      _
    $region57: #{vae_forward.1} parent=1 // pred_fallthru
      _
    // Predicated region
    $region58: #{vae_forward.1} parent=1 // pred_check
      _
    $region59: #{vae_forward.1} parent=1 // pred_check_branch
      %98 = sbr.rel (0) target = $region61
    $region60: #{vae_forward.1} parent=1 // pred_region
      %100 = vsyncadd [#allocation8], 0
      %s101 = sshll.u32 %s14, 4
      %s102 = int_to_ptr.hbm [resolvable:$true] %s101
      %s103 = sshll.u32 [#allocation7], 4
      %s104 = int_to_ptr.vmem [resolvable:$true] %s103
      %109 = dma.hbm_to_vmem [thread:$0]  %s102, 8192, %s104, [#allocation8], 128, 128, 8
    $region61: #{vae_forward.1} parent=1 // pred_fallthru
      _
    // Predicated region
    $region62: #{vae_forward.1} parent=1 // pred_check
      _
    $region63: #{vae_forward.1} parent=1 // pred_check_branch
      %111 = sbr.rel (0) target = $region65
    $region64: #{vae_forward.1} parent=1 // pred_region
      _
    $region65: #{vae_forward.1} parent=1 // pred_fallthru
      _
    // Predicated region
    $region66: #{vae_forward.1} parent=1 // pred_check
      _
    $region67: #{vae_forward.1} parent=1 // pred_check_branch
      %113 = sbr.rel (0) target = $region69
    $region68: #{vae_forward.1} parent=1 // pred_region
      _
    $region69: #{vae_forward.1} parent=1 // pred_fallthru
      _
    // Predicated region
    $region70: #{vae_forward.1} parent=1 // pred_check
      _
    $region71: #{vae_forward.1} parent=1 // pred_check_branch
      %115 = sbr.rel (0) target = $region73
    $region72: #{vae_forward.1} parent=1 // pred_region
      _
    $region73: #{vae_forward.1} parent=1 // pred_fallthru
      _
    // Predicated region
    $region74: #{vae_forward.1} parent=1 // pred_check
      _
    $region75: #{vae_forward.1} parent=1 // pred_check_branch
      %117 = sbr.rel (0) target = $region77
    $region76: #{vae_forward.1} parent=1 // pred_region
      %119 = vsyncadd [#allocation8], 0
      %s120 = sshll.u32 %s18, 4
      %s121 = int_to_ptr.hbm [resolvable:$true] %s120
      %s122 = sshll.u32 [#allocation9], 4
      %s123 = int_to_ptr.vmem [resolvable:$true] %s122
      %128 = dma.hbm_to_vmem [thread:$0]  %s121, 8192, %s123, [#allocation8], 128, 128, 8
    $region77: #{vae_forward.1} parent=1 // pred_fallthru
      _
    // Predicated region
    $region78: #{vae_forward.1} parent=1 // pred_check
      _
    $region79: #{vae_forward.1} parent=1 // pred_check_branch
      %130 = sbr.rel (0) target = $region81
    $region80: #{vae_forward.1} parent=1 // pred_region
      _
    $region81: #{vae_forward.1} parent=1 // pred_fallthru
      _
    // Predicated region
    $region82: #{vae_forward.1} parent=1 // pred_check
      _
    $region83: #{vae_forward.1} parent=1 // pred_check_branch
      %132 = sbr.rel (0) target = $region85
    $region84: #{vae_forward.1} parent=1 // pred_region
      _
    $region85: #{vae_forward.1} parent=1 // pred_fallthru
      _
    // Predicated region
    $region86: #{vae_forward.1} parent=1 // pred_check
      _
    $region87: #{vae_forward.1} parent=1 // pred_check_branch
      %134 = sbr.rel (0) target = $region89
    $region88: #{vae_forward.1} parent=1 // pred_region
      _
    $region89: #{vae_forward.1} parent=1 // pred_fallthru
      _
    // Predicated region
    $region90: #{vae_forward.1} parent=1 // pred_check
      _
    $region91: #{vae_forward.1} parent=1 // pred_check_branch
      %136 = sbr.rel (0) target = $region93
    $region92: #{vae_forward.1} parent=1 // pred_region
      %138 = vsyncadd [#allocation11], 0
      %s139 = sshll.u32 %s22, 4
      %s140 = int_to_ptr.hbm [resolvable:$true] %s139
      %s141 = sshll.u32 [#allocation10], 4
      %s142 = int_to_ptr.vmem [resolvable:$true] %s141
      %147 = dma.hbm_to_vmem [thread:$0]  %s140, 10240, %s142, [#allocation11], 128, 128, 8
    $region93: #{vae_forward.1} parent=1 // pred_fallthru
      _
    // Predicated region
    $region94: #{vae_forward.1} parent=1 // pred_check
      _
    $region95: #{vae_forward.1} parent=1 // pred_check_branch
      %149 = sbr.rel (0) target = $region97
    $region96: #{vae_forward.1} parent=1 // pred_region
      _
    $region97: #{vae_forward.1} parent=1 // pred_fallthru
      _
    // Predicated region
    $region98: #{vae_forward.1} parent=1 // pred_check
      _
    $region99: #{vae_forward.1} parent=1 // pred_check_branch
      %151 = sbr.rel (0) target = $region101
    $region100: #{vae_forward.1} parent=1 // pred_region
      %153 = dma.done [#allocation3], 10240
    $region101: #{vae_forward.1} parent=1 // pred_fallthru
      _
    // Predicated region
    $region102: #{vae_forward.1} parent=1 // pred_check
      _
    $region103: #{vae_forward.1} parent=1 // pred_check_branch
      %155 = sbr.rel (0) target = $region105
    $region104: #{vae_forward.1} parent=1 // pred_region
      %157 = dma.done [#allocation5], 8192
    $region105: #{vae_forward.1} parent=1 // pred_fallthru
      _
    // Predicated region
    $region106: #{vae_forward.1} parent=1 // pred_check
      _
    $region107: #{vae_forward.1} parent=1 // pred_check_branch
      %159 = sbr.rel (0) target = $region109
    $region108: #{vae_forward.1} parent=1 // pred_region
      %161 = dma.done [#allocation5], 8192
    $region109: #{vae_forward.1} parent=1 // pred_fallthru
      _
    // Predicated region
    $region110: #{vae_forward.1} parent=1 // pred_check
      _
    $region111: #{vae_forward.1} parent=1 // pred_check_branch
      %163 = sbr.rel (0) target = $region113
    $region112: #{vae_forward.1} parent=1 // pred_region
      %165 = dma.done [#allocation8], 8192
    $region113: #{vae_forward.1} parent=1 // pred_fallthru
      _
    // Predicated region
    $region114: #{vae_forward.1} parent=1 // pred_check
      _
    $region115: #{vae_forward.1} parent=1 // pred_check_branch
      %167 = sbr.rel (0) target = $region117
    $region116: #{vae_forward.1} parent=1 // pred_region
      %169 = dma.done [#allocation8], 8192
    $region117: #{vae_forward.1} parent=1 // pred_fallthru
      _
    // Predicated region
    $region118: #{vae_forward.1} parent=1 // pred_check
      _
    $region119: #{vae_forward.1} parent=1 // pred_check_branch
      %171 = sbr.rel (0) target = $region121
    $region120: #{vae_forward.1} parent=1 // pred_region
      %173 = dma.done [#allocation11], 10240
    $region121: #{vae_forward.1} parent=1 // pred_fallthru
      _
    %v174 = vld [vmem:[%s0] sm:$0xff]
    %v175 = vld [vmem:[%s0 + $0x8] sm:$0xff]
    %v176 = vld [vmem:[%s0 + $0x10] sm:$0xff]
    %v177 = vld [vmem:[%s2] sm:$0xff]
    %v178 = vld [vmem:[%s2 + $0x8] sm:$0xff]
    %v179 = vld [vmem:[#allocation2] sm:$0xff]
    %v180 = vld [vmem:[#allocation2 + $0x8] sm:$0xff]
    %v181 = vld [vmem:[#allocation2 + $0x10] sm:$0xff]
    %v182 = vld [vmem:[#allocation2 + $0x18] sm:$0xff]
    %v183 = vld [vmem:[#allocation2 + $0x20] sm:$0xff]
    %v184 = vld [vmem:[#allocation2 + $0x28] sm:$0xff]
    %v185 = vld [vmem:[#allocation2 + $0x30] sm:$0xff]
    %v186 = vld [vmem:[#allocation2 + $0x38] sm:$0xff]
    %v187 = vld [vmem:[#allocation2 + $0x40] sm:$0xff]
    %v188 = vld [vmem:[#allocation2 + $0x48] sm:$0xff]
    %v189 = vld [vmem:[#allocation2 + $0x50] sm:$0xff]
    %v190 = vld [vmem:[#allocation2 + $0x58] sm:$0xff]
    %v191 = vld [vmem:[#allocation2 + $0x60] sm:$0xff]
    %v192 = vld [vmem:[#allocation2 + $0x68] sm:$0xff]
    %v193 = vld [vmem:[#allocation2 + $0x70] sm:$0xff]
    %v194 = vld [vmem:[#allocation2 + $0x78] sm:$0xff]
    %195 = vmatpush.msra.mxu0 %v194
    %196 = vmatpush.msra.mxu0 %v193
    %197 = vmatpush.msra.mxu0 %v192
    %198 = vmatpush.msra.mxu0 %v191
    %199 = vmatpush.msra.mxu0 %v190
    %200 = vmatpush.msra.mxu0 %v189
    %201 = vmatpush.msra.mxu0 %v188
    %202 = vmatpush.msra.mxu0 %v187
    %203 = vmatpush.msra.mxu0 %v186
    %204 = vmatpush.msra.mxu0 %v185
    %205 = vmatpush.msra.mxu0 %v184
    %206 = vmatpush.msra.mxu0 %v183
    %207 = vmatpush.msra.mxu0 %v182
    %208 = vmatpush.msra.mxu0 %v181
    %209 = vmatpush.msra.mxu0 %v180
    %210 = vmatpush.msra.mxu0 %v179
    %211 = vmatmul.f32.gmra.mxu0 %v174
    %v212 = vpop.f32.mrf.mxu0
    %v213 = vadd.f32 0.0, %v212
    %214 = vmatmul.f32.gmra.mxu0 %v175
    %v215 = vpop.f32.mrf.mxu0
    %v216 = vadd.f32 0.0, %v215
    %217 = vmatmul.f32.gmra.mxu0 %v176
    %v218 = vpop.f32.mrf.mxu0
    %v219 = vadd.f32 0.0, %v218
    %220 = vdwg.mxu0
    %s221 = scalar_lea.vmem %s2, 16
    %v222 = vld [vmem:[%s221] sm:$0xff]
    %v223 = vld [vmem:[%s221 + $0x8] sm:$0xff]
    %s224 = scalar_lea.vmem [#allocation2], 128
    %v225 = vld [vmem:[%s224] sm:$0xff]
    %v226 = vld [vmem:[%s224 + $0x8] sm:$0xff]
    %v227 = vld [vmem:[%s224 + $0x10] sm:$0xff]
    %v228 = vld [vmem:[%s224 + $0x18] sm:$0xff]
    %v229 = vld [vmem:[%s224 + $0x20] sm:$0xff]
    %v230 = vld [vmem:[%s224 + $0x28] sm:$0xff]
    %v231 = vld [vmem:[%s224 + $0x30] sm:$0xff]
    %v232 = vld [vmem:[%s224 + $0x38] sm:$0xff]
    %v233 = vld [vmem:[%s224 + $0x40] sm:$0xff]
    %v234 = vld [vmem:[%s224 + $0x48] sm:$0xff]
    %v235 = vld [vmem:[%s224 + $0x50] sm:$0xff]
    %v236 = vld [vmem:[%s224 + $0x58] sm:$0xff]
    %v237 = vld [vmem:[%s224 + $0x60] sm:$0xff]
    %v238 = vld [vmem:[%s224 + $0x68] sm:$0xff]
    %v239 = vld [vmem:[%s224 + $0x70] sm:$0xff]
    %v240 = vld [vmem:[%s224 + $0x78] sm:$0xff]
    %241 = vmatpush.msra.mxu0 %v240
    %242 = vmatpush.msra.mxu0 %v239
    %243 = vmatpush.msra.mxu0 %v238
    %244 = vmatpush.msra.mxu0 %v237
    %245 = vmatpush.msra.mxu0 %v236
    %246 = vmatpush.msra.mxu0 %v235
    %247 = vmatpush.msra.mxu0 %v234
    %248 = vmatpush.msra.mxu0 %v233
    %249 = vmatpush.msra.mxu0 %v232
    %250 = vmatpush.msra.mxu0 %v231
    %251 = vmatpush.msra.mxu0 %v230
    %252 = vmatpush.msra.mxu0 %v229
    %253 = vmatpush.msra.mxu0 %v228
    %254 = vmatpush.msra.mxu0 %v227
    %255 = vmatpush.msra.mxu0 %v226
    %256 = vmatpush.msra.mxu0 %v225
    %257 = vmatmul.f32.gmra.mxu0 %v174
    %v258 = vpop.f32.mrf.mxu0
    %v259 = vadd.f32 0.0, %v258
    %260 = vmatmul.f32.gmra.mxu0 %v175
    %v261 = vpop.f32.mrf.mxu0
    %v262 = vadd.f32 0.0, %v261
    %263 = vmatmul.f32.gmra.mxu0 %v176
    %v264 = vpop.f32.mrf.mxu0
    %v265 = vadd.f32 0.0, %v264
    %266 = vdwg.mxu0
    %vm267 = vcmask 195584
    %v269 = vsel %vm267, %v222, 0
    %v272 = vsel %vm267, %v223, 0
    %274 = vmatpush.msra.mxu0 0.0
    %275 = vmatpush.msra.mxu0 0.0
    %276 = vmatpush.msra.mxu0 0.0
    %277 = vmatpush.msra.mxu0 0.0
    %278 = vmatpush.msra.mxu0 0.0
    %279 = vmatpush.msra.mxu0 0.0
    %280 = vmatpush.msra.mxu0 0.0
    %281 = vmatpush.msra.mxu0 0.0
    %282 = vmatpush.msra.mxu0 0.0
    %283 = vmatpush.msra.mxu0 0.0
    %284 = vmatpush.msra.mxu0 0.0
    %285 = vmatpush.msra.mxu0 0.0
    %286 = vmatpush.msra.mxu0 0.0
    %287 = vmatpush.msra.mxu0 %v265
    %288 = vmatpush.msra.mxu0 %v262
    %289 = vmatpush.msra.mxu0 %v259
    %290 = vmatmul.f32.gmra.mxu0 %v269
    %v291 = vpop.f32.mrf.mxu0
    %v292 = vadd.f32 0.0, %v291
    %293 = vmatmul.f32.gmra.mxu0 %v272
    %v294 = vpop.f32.mrf.mxu0
    %v295 = vadd.f32 0.0, %v294
    %296 = vdwg.mxu0
    %v298 = vsel %vm267, %v177, 0
    %v301 = vsel %vm267, %v178, 0
    %303 = vmatpush.msra.mxu0 0.0
    %304 = vmatpush.msra.mxu0 0.0
    %305 = vmatpush.msra.mxu0 0.0
    %306 = vmatpush.msra.mxu0 0.0
    %307 = vmatpush.msra.mxu0 0.0
    %308 = vmatpush.msra.mxu0 0.0
    %309 = vmatpush.msra.mxu0 0.0
    %310 = vmatpush.msra.mxu0 0.0
    %311 = vmatpush.msra.mxu0 0.0
    %312 = vmatpush.msra.mxu0 0.0
    %313 = vmatpush.msra.mxu0 0.0
    %314 = vmatpush.msra.mxu0 0.0
    %315 = vmatpush.msra.mxu0 0.0
    %316 = vmatpush.msra.mxu0 %v219
    %317 = vmatpush.msra.mxu0 %v216
    %318 = vmatpush.msra.mxu0 %v213
    %319 = vmatmul.f32.gmra.mxu0 %v298
    %v320 = vpop.f32.mrf.mxu0
    %v321 = vadd.f32 %v292, %v320
    %322 = vmatmul.f32.gmra.mxu0 %v301
    %v323 = vpop.f32.mrf.mxu0
    %v324 = vadd.f32 %v295, %v323
    %325 = vdwg.mxu0
    %s326 = scalar_lea.vmem %s2, 32
    %v327 = vld [vmem:[%s326] sm:$0xff]
    %v328 = vld [vmem:[%s326 + $0x8] sm:$0xff]
    %s329 = scalar_lea.vmem [#allocation2], 256
    %v330 = vld [vmem:[%s329] sm:$0xff]
    %v331 = vld [vmem:[%s329 + $0x8] sm:$0xff]
    %v332 = vld [vmem:[%s329 + $0x10] sm:$0xff]
    %v333 = vld [vmem:[%s329 + $0x18] sm:$0xff]
    %v334 = vld [vmem:[%s329 + $0x20] sm:$0xff]
    %v335 = vld [vmem:[%s329 + $0x28] sm:$0xff]
    %v336 = vld [vmem:[%s329 + $0x30] sm:$0xff]
    %v337 = vld [vmem:[%s329 + $0x38] sm:$0xff]
    %v338 = vld [vmem:[%s329 + $0x40] sm:$0xff]
    %v339 = vld [vmem:[%s329 + $0x48] sm:$0xff]
    %v340 = vld [vmem:[%s329 + $0x50] sm:$0xff]
    %v341 = vld [vmem:[%s329 + $0x58] sm:$0xff]
    %v342 = vld [vmem:[%s329 + $0x60] sm:$0xff]
    %v343 = vld [vmem:[%s329 + $0x68] sm:$0xff]
    %v344 = vld [vmem:[%s329 + $0x70] sm:$0xff]
    %v345 = vld [vmem:[%s329 + $0x78] sm:$0xff]
    %346 = vmatpush.msra.mxu0 %v345
    %347 = vmatpush.msra.mxu0 %v344
    %348 = vmatpush.msra.mxu0 %v343
    %349 = vmatpush.msra.mxu0 %v342
    %350 = vmatpush.msra.mxu0 %v341
    %351 = vmatpush.msra.mxu0 %v340
    %352 = vmatpush.msra.mxu0 %v339
    %353 = vmatpush.msra.mxu0 %v338
    %354 = vmatpush.msra.mxu0 %v337
    %355 = vmatpush.msra.mxu0 %v336
    %356 = vmatpush.msra.mxu0 %v335
    %357 = vmatpush.msra.mxu0 %v334
    %358 = vmatpush.msra.mxu0 %v333
    %359 = vmatpush.msra.mxu0 %v332
    %360 = vmatpush.msra.mxu0 %v331
    %361 = vmatpush.msra.mxu0 %v330
    %362 = vmatmul.f32.gmra.mxu0 %v174
    %v363 = vpop.f32.mrf.mxu0
    %v364 = vadd.f32 0.0, %v363
    %365 = vmatmul.f32.gmra.mxu0 %v175
    %v366 = vpop.f32.mrf.mxu0
    %v367 = vadd.f32 0.0, %v366
    %368 = vmatmul.f32.gmra.mxu0 %v176
    %v369 = vpop.f32.mrf.mxu0
    %v370 = vadd.f32 0.0, %v369
    %371 = vdwg.mxu0
    %v373 = vsel %vm267, %v327, 0
    %v376 = vsel %vm267, %v328, 0
    %378 = vmatpush.msra.mxu0 0.0
    %379 = vmatpush.msra.mxu0 0.0
    %380 = vmatpush.msra.mxu0 0.0
    %381 = vmatpush.msra.mxu0 0.0
    %382 = vmatpush.msra.mxu0 0.0
    %383 = vmatpush.msra.mxu0 0.0
    %384 = vmatpush.msra.mxu0 0.0
    %385 = vmatpush.msra.mxu0 0.0
    %386 = vmatpush.msra.mxu0 0.0
    %387 = vmatpush.msra.mxu0 0.0
    %388 = vmatpush.msra.mxu0 0.0
    %389 = vmatpush.msra.mxu0 0.0
    %390 = vmatpush.msra.mxu0 0.0
    %391 = vmatpush.msra.mxu0 %v370
    %392 = vmatpush.msra.mxu0 %v367
    %393 = vmatpush.msra.mxu0 %v364
    %394 = vmatmul.f32.gmra.mxu0 %v373
    %v395 = vpop.f32.mrf.mxu0
    %v396 = vadd.f32 0.0, %v395
    %397 = vmatmul.f32.gmra.mxu0 %v376
    %v398 = vpop.f32.mrf.mxu0
    %v399 = vadd.f32 0.0, %v398
    %400 = vdwg.mxu0
    %v401 = vadd.f32 %v321, %v396
    %v402 = vadd.f32 %v324, %v399
    %s403 = scalar_lea.vmem %s2, 48
    %v404 = vld [vmem:[%s403] sm:$0xff]
    %v405 = vld [vmem:[%s403 + $0x8] sm:$0xff]
    %s406 = scalar_lea.vmem [#allocation2], 384
    %v407 = vld [vmem:[%s406] sm:$0xff]
    %v408 = vld [vmem:[%s406 + $0x8] sm:$0xff]
    %v409 = vld [vmem:[%s406 + $0x10] sm:$0xff]
    %v410 = vld [vmem:[%s406 + $0x18] sm:$0xff]
    %v411 = vld [vmem:[%s406 + $0x20] sm:$0xff]
    %v412 = vld [vmem:[%s406 + $0x28] sm:$0xff]
    %v413 = vld [vmem:[%s406 + $0x30] sm:$0xff]
    %v414 = vld [vmem:[%s406 + $0x38] sm:$0xff]
    %v415 = vld [vmem:[%s406 + $0x40] sm:$0xff]
    %v416 = vld [vmem:[%s406 + $0x48] sm:$0xff]
    %v417 = vld [vmem:[%s406 + $0x50] sm:$0xff]
    %v418 = vld [vmem:[%s406 + $0x58] sm:$0xff]
    %v419 = vld [vmem:[%s406 + $0x60] sm:$0xff]
    %v420 = vld [vmem:[%s406 + $0x68] sm:$0xff]
    %v421 = vld [vmem:[%s406 + $0x70] sm:$0xff]
    %v422 = vld [vmem:[%s406 + $0x78] sm:$0xff]
    %423 = vmatpush.msra.mxu0 %v422
    %424 = vmatpush.msra.mxu0 %v421
    %425 = vmatpush.msra.mxu0 %v420
    %426 = vmatpush.msra.mxu0 %v419
    %427 = vmatpush.msra.mxu0 %v418
    %428 = vmatpush.msra.mxu0 %v417
    %429 = vmatpush.msra.mxu0 %v416
    %430 = vmatpush.msra.mxu0 %v415
    %431 = vmatpush.msra.mxu0 %v414
    %432 = vmatpush.msra.mxu0 %v413
    %433 = vmatpush.msra.mxu0 %v412
    %434 = vmatpush.msra.mxu0 %v411
    %435 = vmatpush.msra.mxu0 %v410
    %436 = vmatpush.msra.mxu0 %v409
    %437 = vmatpush.msra.mxu0 %v408
    %438 = vmatpush.msra.mxu0 %v407
    %439 = vmatmul.f32.gmra.mxu0 %v174
    %v440 = vpop.f32.mrf.mxu0
    %v441 = vadd.f32 0.0, %v440
    %442 = vmatmul.f32.gmra.mxu0 %v175
    %v443 = vpop.f32.mrf.mxu0
    %v444 = vadd.f32 0.0, %v443
    %445 = vmatmul.f32.gmra.mxu0 %v176
    %v446 = vpop.f32.mrf.mxu0
    %v447 = vadd.f32 0.0, %v446
    %448 = vdwg.mxu0
    %v450 = vsel %vm267, %v404, 0
    %v453 = vsel %vm267, %v405, 0
    %455 = vmatpush.msra.mxu0 0.0
    %456 = vmatpush.msra.mxu0 0.0
    %457 = vmatpush.msra.mxu0 0.0
    %458 = vmatpush.msra.mxu0 0.0
    %459 = vmatpush.msra.mxu0 0.0
    %460 = vmatpush.msra.mxu0 0.0
    %461 = vmatpush.msra.mxu0 0.0
    %462 = vmatpush.msra.mxu0 0.0
    %463 = vmatpush.msra.mxu0 0.0
    %464 = vmatpush.msra.mxu0 0.0
    %465 = vmatpush.msra.mxu0 0.0
    %466 = vmatpush.msra.mxu0 0.0
    %467 = vmatpush.msra.mxu0 0.0
    %468 = vmatpush.msra.mxu0 %v447
    %469 = vmatpush.msra.mxu0 %v444
    %470 = vmatpush.msra.mxu0 %v441
    %471 = vmatmul.f32.gmra.mxu0 %v450
    %v472 = vpop.f32.mrf.mxu0
    %v473 = vadd.f32 0.0, %v472
    %474 = vmatmul.f32.gmra.mxu0 %v453
    %v475 = vpop.f32.mrf.mxu0
    %v476 = vadd.f32 0.0, %v475
    %477 = vdwg.mxu0
    %v478 = vadd.f32 %v401, %v473
    %v479 = vadd.f32 %v402, %v476
    %s480 = scalar_lea.vmem %s2, 64
    %v481 = vld [vmem:[%s480] sm:$0xff]
    %v482 = vld [vmem:[%s480 + $0x8] sm:$0xff]
    %s483 = scalar_lea.vmem [#allocation2], 512
    %v484 = vld [vmem:[%s483] sm:$0xff]
    %v485 = vld [vmem:[%s483 + $0x8] sm:$0xff]
    %v486 = vld [vmem:[%s483 + $0x10] sm:$0xff]
    %v487 = vld [vmem:[%s483 + $0x18] sm:$0xff]
    %v488 = vld [vmem:[%s483 + $0x20] sm:$0xff]
    %v489 = vld [vmem:[%s483 + $0x28] sm:$0xff]
    %v490 = vld [vmem:[%s483 + $0x30] sm:$0xff]
    %v491 = vld [vmem:[%s483 + $0x38] sm:$0xff]
    %v492 = vld [vmem:[%s483 + $0x40] sm:$0xff]
    %v493 = vld [vmem:[%s483 + $0x48] sm:$0xff]
    %v494 = vld [vmem:[%s483 + $0x50] sm:$0xff]
    %v495 = vld [vmem:[%s483 + $0x58] sm:$0xff]
    %v496 = vld [vmem:[%s483 + $0x60] sm:$0xff]
    %v497 = vld [vmem:[%s483 + $0x68] sm:$0xff]
    %v498 = vld [vmem:[%s483 + $0x70] sm:$0xff]
    %v499 = vld [vmem:[%s483 + $0x78] sm:$0xff]
    %500 = vmatpush.msra.mxu0 %v499
    %501 = vmatpush.msra.mxu0 %v498
    %502 = vmatpush.msra.mxu0 %v497
    %503 = vmatpush.msra.mxu0 %v496
    %504 = vmatpush.msra.mxu0 %v495
    %505 = vmatpush.msra.mxu0 %v494
    %506 = vmatpush.msra.mxu0 %v493
    %507 = vmatpush.msra.mxu0 %v492
    %508 = vmatpush.msra.mxu0 %v491
    %509 = vmatpush.msra.mxu0 %v490
    %510 = vmatpush.msra.mxu0 %v489
    %511 = vmatpush.msra.mxu0 %v488
    %512 = vmatpush.msra.mxu0 %v487
    %513 = vmatpush.msra.mxu0 %v486
    %514 = vmatpush.msra.mxu0 %v485
    %515 = vmatpush.msra.mxu0 %v484
    %516 = vmatmul.f32.gmra.mxu0 %v174
    %v517 = vpop.f32.mrf.mxu0
    %v518 = vadd.f32 0.0, %v517
    %519 = vmatmul.f32.gmra.mxu0 %v175
    %v520 = vpop.f32.mrf.mxu0
    %v521 = vadd.f32 0.0, %v520
    %522 = vmatmul.f32.gmra.mxu0 %v176
    %v523 = vpop.f32.mrf.mxu0
    %v524 = vadd.f32 0.0, %v523
    %525 = vdwg.mxu0
    %v527 = vsel %vm267, %v481, 0
    %v530 = vsel %vm267, %v482, 0
    %532 = vmatpush.msra.mxu0 0.0
    %533 = vmatpush.msra.mxu0 0.0
    %534 = vmatpush.msra.mxu0 0.0
    %535 = vmatpush.msra.mxu0 0.0
    %536 = vmatpush.msra.mxu0 0.0
    %537 = vmatpush.msra.mxu0 0.0
    %538 = vmatpush.msra.mxu0 0.0
    %539 = vmatpush.msra.mxu0 0.0
    %540 = vmatpush.msra.mxu0 0.0
    %541 = vmatpush.msra.mxu0 0.0
    %542 = vmatpush.msra.mxu0 0.0
    %543 = vmatpush.msra.mxu0 0.0
    %544 = vmatpush.msra.mxu0 0.0
    %545 = vmatpush.msra.mxu0 %v524
    %546 = vmatpush.msra.mxu0 %v521
    %547 = vmatpush.msra.mxu0 %v518
    %548 = vmatmul.f32.gmra.mxu0 %v527
    %v549 = vpop.f32.mrf.mxu0
    %v550 = vadd.f32 0.0, %v549
    %551 = vmatmul.f32.gmra.mxu0 %v530
    %v552 = vpop.f32.mrf.mxu0
    %v553 = vadd.f32 0.0, %v552
    %554 = vdwg.mxu0
    %v555 = vadd.f32 %v478, %v550
    %v556 = vadd.f32 %v479, %v553
    %557 = vadd.xlane.f32.xlu0 %v555
    %v558 = vpop.xlane.xlu0 %557
    %559 = vadd.xlane.f32.xlu0 %v556
    %v560 = vpop.xlane.xlu0 %559
    %v561 = vmul.f32 %v558, 0.03125
    %v562 = vmul.f32 %v560, 0.03125
    %v563 = vmul.f32 %v555, %v555
    %v564 = vmul.f32 %v556, %v556
    %565 = vadd.xlane.f32.xlu0 %v563
    %v566 = vpop.xlane.xlu0 %565
    %567 = vadd.xlane.f32.xlu0 %v564
    %v568 = vpop.xlane.xlu0 %567
    %v569 = vmul.f32 %v566, 0.03125
    %v570 = vmul.f32 %v568, 0.03125
    %v571 = vmul.f32 %v561, %v561
    %v572 = vmul.f32 %v562, %v562
    %v573 = vsub.f32 %v569, %v571
    %v574 = vsub.f32 %v570, %v572
    %v575 = vmax.f32 %v573, 0.0
    %v576 = vmax.f32 %v574, 0.0
    %v577 = vsub.f32 %v555, %v561
    %v578 = vsub.f32 %v556, %v562
    %v579 = vld [vmem:[%s4] sm:$0xff]
    %v580 = vld [vmem:[%s4 + $0x8] sm:$0xff]
    %v581 = vadd.f32 %v575, 1e-05
    %v582 = vadd.f32 %v576, 1e-05
    %v583 = vrsqrt.pop %v581
    %v584 = vmul.f32 %v583, %v581
    %v585 = vmul.f32 %v584, %v583
    %v586 = vmul.f32 0.5, %v585
    %v587 = vsub.f32 1.5, %v586
    %v588 = vmul.f32 %v583, %v587
    %vm589 = vweird.f32 %v581
    %vm590 = vweird.f32 %v583
    %vm591 = vmor %vm589, %vm590
    %v592 = vsel %vm591, %v583, %v588
    %v593 = vrsqrt.pop %v582
    %v594 = vmul.f32 %v593, %v582
    %v595 = vmul.f32 %v594, %v593
    %v596 = vmul.f32 0.5, %v595
    %v597 = vsub.f32 1.5, %v596
    %v598 = vmul.f32 %v593, %v597
    %vm599 = vweird.f32 %v582
    %vm600 = vweird.f32 %v593
    %vm601 = vmor %vm599, %vm600
    %v602 = vsel %vm601, %v593, %v598
    %v603 = vmul.f32 %v579, %v592
    %v604 = vmul.f32 %v580, %v602
    %606 = vset.pattern.permute.xlu0 0
    %607 = vperm.xlu0 %606, %v603
    %v608 = vpop.permute.xlu0 %607
    %611 = vset.pattern.permute.xlu0 0
    %612 = vperm.xlu0 %611, %v604
    %v613 = vpop.permute.xlu0 %612
    %v615 = vmul.f32 %v577, %v608
    %v616 = vmul.f32 %v578, %v613
    %v617 = vld [vmem:[%s5] sm:$0xff]
    %v618 = vld [vmem:[%s5 + $0x8] sm:$0xff]
    %620 = vset.pattern.permute.xlu0 0
    %621 = vperm.xlu0 %620, %v617
    %v622 = vpop.permute.xlu0 %621
    %625 = vset.pattern.permute.xlu0 0
    %626 = vperm.xlu0 %625, %v618
    %v627 = vpop.permute.xlu0 %626
    %v629 = vadd.f32 %v615, %v622
    %v630 = vadd.f32 %v616, %v627
    %v631 = vxor.u32 %v630, 2147483648
    %v632 = vmul.f32 %v631, 1.442695
    %v633 = vpow.pop %v632
    %v634 = vadd.f32 %v633, 1.0
    %v635 = vrcp.pop %v634
    %v636 = vmul.f32 %v634, %v635
    %v637 = vsub.f32 1.0, %v636
    %v638 = vmul.f32 %v635, %v637
    %v639 = vadd.f32 %v635, %v638
    %vm640 = vweird.f32 %v634
    %vm641 = vweird.f32 %v635
    %vm642 = vmor %vm640, %vm641
    %v643 = vsel %vm642, %v635, %v639
    %v644 = vand.u32 2147483647, %v634
    %vm645 = vcmp.eq.f32.partialorder %v644, 8.507059e+37
    %v646 = vand.u32 %v634, 2147483648
    %v647 = vor.u32 1.1754944e-38, %v646
    %v648 = vsel %vm645, %v647, %v643
    %v649 = vmul.f32 1.0, %v648
    %v650 = vmul.f32 %v629, %v649
    %v651 = vld [vmem:[%s6] sm:$0xff]
    %v652 = vld [vmem:[%s6 + $0x8] sm:$0xff]
    %v653 = vld [vmem:[#allocation4] sm:$0xff]
    %v654 = vld [vmem:[#allocation4 + $0x8] sm:$0xff]
    %v655 = vld [vmem:[#allocation4 + $0x10] sm:$0xff]
    %v656 = vld [vmem:[#allocation4 + $0x18] sm:$0xff]
    %v657 = vld [vmem:[#allocation4 + $0x20] sm:$0xff]
    %v658 = vld [vmem:[#allocation4 + $0x28] sm:$0xff]
    %v659 = vld [vmem:[#allocation4 + $0x30] sm:$0xff]
    %v660 = vld [vmem:[#allocation4 + $0x38] sm:$0xff]
    %v661 = vld [vmem:[#allocation4 + $0x40] sm:$0xff]
    %v662 = vld [vmem:[#allocation4 + $0x48] sm:$0xff]
    %v663 = vld [vmem:[#allocation4 + $0x50] sm:$0xff]
    %v664 = vld [vmem:[#allocation4 + $0x58] sm:$0xff]
    %v665 = vld [vmem:[#allocation4 + $0x60] sm:$0xff]
    %v666 = vld [vmem:[#allocation4 + $0x68] sm:$0xff]
    %v667 = vld [vmem:[#allocation4 + $0x70] sm:$0xff]
    %v668 = vld [vmem:[#allocation4 + $0x78] sm:$0xff]
    %669 = vmatpush.msra.mxu0 %v668
    %670 = vmatpush.msra.mxu0 %v667
    %671 = vmatpush.msra.mxu0 %v666
    %672 = vmatpush.msra.mxu0 %v665
    %673 = vmatpush.msra.mxu0 %v664
    %674 = vmatpush.msra.mxu0 %v663
    %675 = vmatpush.msra.mxu0 %v662
    %676 = vmatpush.msra.mxu0 %v661
    %677 = vmatpush.msra.mxu0 %v660
    %678 = vmatpush.msra.mxu0 %v659
    %679 = vmatpush.msra.mxu0 %v658
    %680 = vmatpush.msra.mxu0 %v657
    %681 = vmatpush.msra.mxu0 %v656
    %682 = vmatpush.msra.mxu0 %v655
    %683 = vmatpush.msra.mxu0 %v654
    %684 = vmatpush.msra.mxu0 %v653
    %685 = vmatmul.f32.gmra.mxu0 %v650
    %v686 = vpop.f32.mrf.mxu0
    %v687 = vadd.f32 0.0, %v686
    %688 = vdwg.mxu0
    %s689 = scalar_lea.vmem %s6, 16
    %v690 = vld [vmem:[%s689] sm:$0xff]
    %v691 = vld [vmem:[%s689 + $0x8] sm:$0xff]
    %s692 = scalar_lea.vmem [#allocation4], 128
    %v693 = vld [vmem:[%s692] sm:$0xff]
    %v694 = vld [vmem:[%s692 + $0x8] sm:$0xff]
    %v695 = vld [vmem:[%s692 + $0x10] sm:$0xff]
    %v696 = vld [vmem:[%s692 + $0x18] sm:$0xff]
    %v697 = vld [vmem:[%s692 + $0x20] sm:$0xff]
    %v698 = vld [vmem:[%s692 + $0x28] sm:$0xff]
    %v699 = vld [vmem:[%s692 + $0x30] sm:$0xff]
    %v700 = vld [vmem:[%s692 + $0x38] sm:$0xff]
    %v701 = vld [vmem:[%s692 + $0x40] sm:$0xff]
    %v702 = vld [vmem:[%s692 + $0x48] sm:$0xff]
    %v703 = vld [vmem:[%s692 + $0x50] sm:$0xff]
    %v704 = vld [vmem:[%s692 + $0x58] sm:$0xff]
    %v705 = vld [vmem:[%s692 + $0x60] sm:$0xff]
    %v706 = vld [vmem:[%s692 + $0x68] sm:$0xff]
    %v707 = vld [vmem:[%s692 + $0x70] sm:$0xff]
    %v708 = vld [vmem:[%s692 + $0x78] sm:$0xff]
    %709 = vmatpush.msra.mxu0 %v708
    %710 = vmatpush.msra.mxu0 %v707
    %711 = vmatpush.msra.mxu0 %v706
    %712 = vmatpush.msra.mxu0 %v705
    %713 = vmatpush.msra.mxu0 %v704
    %714 = vmatpush.msra.mxu0 %v703
    %715 = vmatpush.msra.mxu0 %v702
    %716 = vmatpush.msra.mxu0 %v701
    %717 = vmatpush.msra.mxu0 %v700
    %718 = vmatpush.msra.mxu0 %v699
    %719 = vmatpush.msra.mxu0 %v698
    %720 = vmatpush.msra.mxu0 %v697
    %721 = vmatpush.msra.mxu0 %v696
    %722 = vmatpush.msra.mxu0 %v695
    %723 = vmatpush.msra.mxu0 %v694
    %724 = vmatpush.msra.mxu0 %v693
    %725 = vmatmul.f32.gmra.mxu0 %v650
    %v726 = vpop.f32.mrf.mxu0
    %v727 = vadd.f32 0.0, %v726
    %728 = vdwg.mxu0
    %vm729 = vcmask 64512
    %v731 = vsel %vm729, %v690, 0
    %v734 = vsel %vm729, %v691, 0
    %736 = vmatpush.msra.mxu0 0.0
    %737 = vmatpush.msra.mxu0 0.0
    %738 = vmatpush.msra.mxu0 0.0
    %739 = vmatpush.msra.mxu0 0.0
    %740 = vmatpush.msra.mxu0 0.0
    %741 = vmatpush.msra.mxu0 0.0
    %742 = vmatpush.msra.mxu0 0.0
    %743 = vmatpush.msra.mxu0 0.0
    %744 = vmatpush.msra.mxu0 0.0
    %745 = vmatpush.msra.mxu0 0.0
    %746 = vmatpush.msra.mxu0 0.0
    %747 = vmatpush.msra.mxu0 0.0
    %748 = vmatpush.msra.mxu0 0.0
    %749 = vmatpush.msra.mxu0 0.0
    %750 = vmatpush.msra.mxu0 0.0
    %751 = vmatpush.msra.mxu0 %v727
    %752 = vmatmul.f32.gmra.mxu0 %v731
    %v753 = vpop.f32.mrf.mxu0
    %v754 = vadd.f32 0.0, %v753
    %755 = vmatmul.f32.gmra.mxu0 %v734
    %v756 = vpop.f32.mrf.mxu0
    %v757 = vadd.f32 0.0, %v756
    %758 = vdwg.mxu0
    %v760 = vsel %vm729, %v651, 0
    %v763 = vsel %vm729, %v652, 0
    %765 = vmatpush.msra.mxu0 0.0
    %766 = vmatpush.msra.mxu0 0.0
    %767 = vmatpush.msra.mxu0 0.0
    %768 = vmatpush.msra.mxu0 0.0
    %769 = vmatpush.msra.mxu0 0.0
    %770 = vmatpush.msra.mxu0 0.0
    %771 = vmatpush.msra.mxu0 0.0
    %772 = vmatpush.msra.mxu0 0.0
    %773 = vmatpush.msra.mxu0 0.0
    %774 = vmatpush.msra.mxu0 0.0
    %775 = vmatpush.msra.mxu0 0.0
    %776 = vmatpush.msra.mxu0 0.0
    %777 = vmatpush.msra.mxu0 0.0
    %778 = vmatpush.msra.mxu0 0.0
    %779 = vmatpush.msra.mxu0 0.0
    %780 = vmatpush.msra.mxu0 %v687
    %781 = vmatmul.f32.gmra.mxu0 %v760
    %v782 = vpop.f32.mrf.mxu0
    %v783 = vadd.f32 %v754, %v782
    %784 = vmatmul.f32.gmra.mxu0 %v763
    %v785 = vpop.f32.mrf.mxu0
    %v786 = vadd.f32 %v757, %v785
    %787 = vdwg.mxu0
    %s788 = scalar_lea.vmem %s6, 32
    %v789 = vld [vmem:[%s788] sm:$0xff]
    %v790 = vld [vmem:[%s788 + $0x8] sm:$0xff]
    %s791 = scalar_lea.vmem [#allocation4], 256
    %v792 = vld [vmem:[%s791] sm:$0xff]
    %v793 = vld [vmem:[%s791 + $0x8] sm:$0xff]
    %v794 = vld [vmem:[%s791 + $0x10] sm:$0xff]
    %v795 = vld [vmem:[%s791 + $0x18] sm:$0xff]
    %v796 = vld [vmem:[%s791 + $0x20] sm:$0xff]
    %v797 = vld [vmem:[%s791 + $0x28] sm:$0xff]
    %v798 = vld [vmem:[%s791 + $0x30] sm:$0xff]
    %v799 = vld [vmem:[%s791 + $0x38] sm:$0xff]
    %v800 = vld [vmem:[%s791 + $0x40] sm:$0xff]
    %v801 = vld [vmem:[%s791 + $0x48] sm:$0xff]
    %v802 = vld [vmem:[%s791 + $0x50] sm:$0xff]
    %v803 = vld [vmem:[%s791 + $0x58] sm:$0xff]
    %v804 = vld [vmem:[%s791 + $0x60] sm:$0xff]
    %v805 = vld [vmem:[%s791 + $0x68] sm:$0xff]
    %v806 = vld [vmem:[%s791 + $0x70] sm:$0xff]
    %v807 = vld [vmem:[%s791 + $0x78] sm:$0xff]
    %808 = vmatpush.msra.mxu0 %v807
    %809 = vmatpush.msra.mxu0 %v806
    %810 = vmatpush.msra.mxu0 %v805
    %811 = vmatpush.msra.mxu0 %v804
    %812 = vmatpush.msra.mxu0 %v803
    %813 = vmatpush.msra.mxu0 %v802
    %814 = vmatpush.msra.mxu0 %v801
    %815 = vmatpush.msra.mxu0 %v800
    %816 = vmatpush.msra.mxu0 %v799
    %817 = vmatpush.msra.mxu0 %v798
    %818 = vmatpush.msra.mxu0 %v797
    %819 = vmatpush.msra.mxu0 %v796
    %820 = vmatpush.msra.mxu0 %v795
    %821 = vmatpush.msra.mxu0 %v794
    %822 = vmatpush.msra.mxu0 %v793
    %823 = vmatpush.msra.mxu0 %v792
    %824 = vmatmul.f32.gmra.mxu0 %v650
    %v825 = vpop.f32.mrf.mxu0
    %v826 = vadd.f32 0.0, %v825
    %827 = vdwg.mxu0
    %v829 = vsel %vm729, %v789, 0
    %v832 = vsel %vm729, %v790, 0
    %834 = vmatpush.msra.mxu0 0.0
    %835 = vmatpush.msra.mxu0 0.0
    %836 = vmatpush.msra.mxu0 0.0
    %837 = vmatpush.msra.mxu0 0.0
    %838 = vmatpush.msra.mxu0 0.0
    %839 = vmatpush.msra.mxu0 0.0
    %840 = vmatpush.msra.mxu0 0.0
    %841 = vmatpush.msra.mxu0 0.0
    %842 = vmatpush.msra.mxu0 0.0
    %843 = vmatpush.msra.mxu0 0.0
    %844 = vmatpush.msra.mxu0 0.0
    %845 = vmatpush.msra.mxu0 0.0
    %846 = vmatpush.msra.mxu0 0.0
    %847 = vmatpush.msra.mxu0 0.0
    %848 = vmatpush.msra.mxu0 0.0
    %849 = vmatpush.msra.mxu0 %v826
    %850 = vmatmul.f32.gmra.mxu0 %v829
    %v851 = vpop.f32.mrf.mxu0
    %v852 = vadd.f32 0.0, %v851
    %853 = vmatmul.f32.gmra.mxu0 %v832
    %v854 = vpop.f32.mrf.mxu0
    %v855 = vadd.f32 0.0, %v854
    %856 = vdwg.mxu0
    %v857 = vadd.f32 %v783, %v852
    %v858 = vadd.f32 %v786, %v855
    %s859 = scalar_lea.vmem %s6, 48
    %v860 = vld [vmem:[%s859] sm:$0xff]
    %v861 = vld [vmem:[%s859 + $0x8] sm:$0xff]
    %s862 = scalar_lea.vmem [#allocation4], 384
    %v863 = vld [vmem:[%s862] sm:$0xff]
    %v864 = vld [vmem:[%s862 + $0x8] sm:$0xff]
    %v865 = vld [vmem:[%s862 + $0x10] sm:$0xff]
    %v866 = vld [vmem:[%s862 + $0x18] sm:$0xff]
    %v867 = vld [vmem:[%s862 + $0x20] sm:$0xff]
    %v868 = vld [vmem:[%s862 + $0x28] sm:$0xff]
    %v869 = vld [vmem:[%s862 + $0x30] sm:$0xff]
    %v870 = vld [vmem:[%s862 + $0x38] sm:$0xff]
    %v871 = vld [vmem:[%s862 + $0x40] sm:$0xff]
    %v872 = vld [vmem:[%s862 + $0x48] sm:$0xff]
    %v873 = vld [vmem:[%s862 + $0x50] sm:$0xff]
    %v874 = vld [vmem:[%s862 + $0x58] sm:$0xff]
    %v875 = vld [vmem:[%s862 + $0x60] sm:$0xff]
    %v876 = vld [vmem:[%s862 + $0x68] sm:$0xff]
    %v877 = vld [vmem:[%s862 + $0x70] sm:$0xff]
    %v878 = vld [vmem:[%s862 + $0x78] sm:$0xff]
    %879 = vmatpush.msra.mxu0 %v878
    %880 = vmatpush.msra.mxu0 %v877
    %881 = vmatpush.msra.mxu0 %v876
    %882 = vmatpush.msra.mxu0 %v875
    %883 = vmatpush.msra.mxu0 %v874
    %884 = vmatpush.msra.mxu0 %v873
    %885 = vmatpush.msra.mxu0 %v872
    %886 = vmatpush.msra.mxu0 %v871
    %887 = vmatpush.msra.mxu0 %v870
    %888 = vmatpush.msra.mxu0 %v869
    %889 = vmatpush.msra.mxu0 %v868
    %890 = vmatpush.msra.mxu0 %v867
    %891 = vmatpush.msra.mxu0 %v866
    %892 = vmatpush.msra.mxu0 %v865
    %893 = vmatpush.msra.mxu0 %v864
    %894 = vmatpush.msra.mxu0 %v863
    %895 = vmatmul.f32.gmra.mxu0 %v650
    %v896 = vpop.f32.mrf.mxu0
    %v897 = vadd.f32 0.0, %v896
    %898 = vdwg.mxu0
    %v900 = vsel %vm729, %v860, 0
    %v903 = vsel %vm729, %v861, 0
    %905 = vmatpush.msra.mxu0 0.0
    %906 = vmatpush.msra.mxu0 0.0
    %907 = vmatpush.msra.mxu0 0.0
    %908 = vmatpush.msra.mxu0 0.0
    %909 = vmatpush.msra.mxu0 0.0
    %910 = vmatpush.msra.mxu0 0.0
    %911 = vmatpush.msra.mxu0 0.0
    %912 = vmatpush.msra.mxu0 0.0
    %913 = vmatpush.msra.mxu0 0.0
    %914 = vmatpush.msra.mxu0 0.0
    %915 = vmatpush.msra.mxu0 0.0
    %916 = vmatpush.msra.mxu0 0.0
    %917 = vmatpush.msra.mxu0 0.0
    %918 = vmatpush.msra.mxu0 0.0
    %919 = vmatpush.msra.mxu0 0.0
    %920 = vmatpush.msra.mxu0 %v897
    %921 = vmatmul.f32.gmra.mxu0 %v900
    %v922 = vpop.f32.mrf.mxu0
    %v923 = vadd.f32 0.0, %v922
    %924 = vmatmul.f32.gmra.mxu0 %v903
    %v925 = vpop.f32.mrf.mxu0
    %v926 = vadd.f32 0.0, %v925
    %927 = vdwg.mxu0
    %v928 = vadd.f32 %v857, %v923
    %v929 = vadd.f32 %v858, %v926
    %930 = vadd.xlane.f32.xlu0 %v928
    %v931 = vpop.xlane.xlu0 %930
    %932 = vadd.xlane.f32.xlu0 %v929
    %v933 = vpop.xlane.xlu0 %932
    %v934 = vmul.f32 %v931, 0.0625
    %v935 = vmul.f32 %v933, 0.0625
    %v936 = vmul.f32 %v928, %v928
    %v937 = vmul.f32 %v929, %v929
    %938 = vadd.xlane.f32.xlu0 %v936
    %v939 = vpop.xlane.xlu0 %938
    %940 = vadd.xlane.f32.xlu0 %v937
    %v941 = vpop.xlane.xlu0 %940
    %v942 = vmul.f32 %v939, 0.0625
    %v943 = vmul.f32 %v941, 0.0625
    %v944 = vmul.f32 %v934, %v934
    %v945 = vmul.f32 %v935, %v935
    %v946 = vsub.f32 %v942, %v944
    %v947 = vsub.f32 %v943, %v945
    %v948 = vmax.f32 %v946, 0.0
    %v949 = vmax.f32 %v947, 0.0
    %v950 = vsub.f32 %v928, %v934
    %v951 = vsub.f32 %v929, %v935
    %v952 = vld [vmem:[%s8] sm:$0xff]
    %v953 = vld [vmem:[%s8 + $0x8] sm:$0xff]
    %v954 = vadd.f32 %v948, 1e-05
    %v955 = vadd.f32 %v949, 1e-05
    %v956 = vrsqrt.pop %v954
    %v957 = vmul.f32 %v956, %v954
    %v958 = vmul.f32 %v957, %v956
    %v959 = vmul.f32 0.5, %v958
    %v960 = vsub.f32 1.5, %v959
    %v961 = vmul.f32 %v956, %v960
    %vm962 = vweird.f32 %v954
    %vm963 = vweird.f32 %v956
    %vm964 = vmor %vm962, %vm963
    %v965 = vsel %vm964, %v956, %v961
    %v966 = vrsqrt.pop %v955
    %v967 = vmul.f32 %v966, %v955
    %v968 = vmul.f32 %v967, %v966
    %v969 = vmul.f32 0.5, %v968
    %v970 = vsub.f32 1.5, %v969
    %v971 = vmul.f32 %v966, %v970
    %vm972 = vweird.f32 %v955
    %vm973 = vweird.f32 %v966
    %vm974 = vmor %vm972, %vm973
    %v975 = vsel %vm974, %v966, %v971
    %v976 = vmul.f32 %v952, %v965
    %v977 = vmul.f32 %v953, %v975
    %979 = vset.pattern.permute.xlu0 0
    %980 = vperm.xlu0 %979, %v976
    %v981 = vpop.permute.xlu0 %980
    %984 = vset.pattern.permute.xlu0 0
    %985 = vperm.xlu0 %984, %v977
    %v986 = vpop.permute.xlu0 %985
    %v988 = vmul.f32 %v950, %v981
    %v989 = vmul.f32 %v951, %v986
    %v990 = vld [vmem:[%s9] sm:$0xff]
    %v991 = vld [vmem:[%s9 + $0x8] sm:$0xff]
    %993 = vset.pattern.permute.xlu0 0
    %994 = vperm.xlu0 %993, %v990
    %v995 = vpop.permute.xlu0 %994
    %998 = vset.pattern.permute.xlu0 0
    %999 = vperm.xlu0 %998, %v991
    %v1000 = vpop.permute.xlu0 %999
    %v1002 = vadd.f32 %v988, %v995
    %v1003 = vadd.f32 %v989, %v1000
    %v1004 = vxor.u32 %v1003, 2147483648
    %v1005 = vmul.f32 %v1004, 1.442695
    %v1006 = vpow.pop %v1005
    %v1007 = vadd.f32 %v1006, 1.0
    %v1008 = vrcp.pop %v1007
    %v1009 = vmul.f32 %v1007, %v1008
    %v1010 = vsub.f32 1.0, %v1009
    %v1011 = vmul.f32 %v1008, %v1010
    %v1012 = vadd.f32 %v1008, %v1011
    %vm1013 = vweird.f32 %v1007
    %vm1014 = vweird.f32 %v1008
    %vm1015 = vmor %vm1013, %vm1014
    %v1016 = vsel %vm1015, %v1008, %v1012
    %v1017 = vand.u32 2147483647, %v1007
    %vm1018 = vcmp.eq.f32.partialorder %v1017, 8.507059e+37
    %v1019 = vand.u32 %v1007, 2147483648
    %v1020 = vor.u32 1.1754944e-38, %v1019
    %v1021 = vsel %vm1018, %v1020, %v1016
    %v1022 = vmul.f32 1.0, %v1021
    %v1023 = vmul.f32 %v1002, %v1022
    %v1024 = vld [vmem:[%s10] sm:$0xff]
    %v1025 = vld [vmem:[%s10 + $0x8] sm:$0xff]
    %v1026 = vld [vmem:[#allocation6] sm:$0xff]
    %v1027 = vld [vmem:[#allocation6 + $0x8] sm:$0xff]
    %v1028 = vld [vmem:[#allocation6 + $0x10] sm:$0xff]
    %v1029 = vld [vmem:[#allocation6 + $0x18] sm:$0xff]
    %v1030 = vld [vmem:[#allocation6 + $0x20] sm:$0xff]
    %v1031 = vld [vmem:[#allocation6 + $0x28] sm:$0xff]
    %v1032 = vld [vmem:[#allocation6 + $0x30] sm:$0xff]
    %v1033 = vld [vmem:[#allocation6 + $0x38] sm:$0xff]
    %v1034 = vld [vmem:[#allocation6 + $0x40] sm:$0xff]
    %v1035 = vld [vmem:[#allocation6 + $0x48] sm:$0xff]
    %v1036 = vld [vmem:[#allocation6 + $0x50] sm:$0xff]
    %v1037 = vld [vmem:[#allocation6 + $0x58] sm:$0xff]
    %v1038 = vld [vmem:[#allocation6 + $0x60] sm:$0xff]
    %v1039 = vld [vmem:[#allocation6 + $0x68] sm:$0xff]
    %v1040 = vld [vmem:[#allocation6 + $0x70] sm:$0xff]
    %v1041 = vld [vmem:[#allocation6 + $0x78] sm:$0xff]
    %1042 = vmatpush.msra.mxu0 %v1041
    %1043 = vmatpush.msra.mxu0 %v1040
    %1044 = vmatpush.msra.mxu0 %v1039
    %1045 = vmatpush.msra.mxu0 %v1038
    %1046 = vmatpush.msra.mxu0 %v1037
    %1047 = vmatpush.msra.mxu0 %v1036
    %1048 = vmatpush.msra.mxu0 %v1035
    %1049 = vmatpush.msra.mxu0 %v1034
    %1050 = vmatpush.msra.mxu0 %v1033
    %1051 = vmatpush.msra.mxu0 %v1032
    %1052 = vmatpush.msra.mxu0 %v1031
    %1053 = vmatpush.msra.mxu0 %v1030
    %1054 = vmatpush.msra.mxu0 %v1029
    %1055 = vmatpush.msra.mxu0 %v1028
    %1056 = vmatpush.msra.mxu0 %v1027
    %1057 = vmatpush.msra.mxu0 %v1026
    %1058 = vmatmul.f32.gmra.mxu0 %v1023
    %v1059 = vpop.f32.mrf.mxu0
    %v1060 = vadd.f32 0.0, %v1059
    %1061 = vdwg.mxu0
    %s1062 = scalar_lea.vmem %s10, 16
    %v1063 = vld [vmem:[%s1062] sm:$0xff]
    %v1064 = vld [vmem:[%s1062 + $0x8] sm:$0xff]
    %s1065 = scalar_lea.vmem [#allocation6], 128
    %v1066 = vld [vmem:[%s1065] sm:$0xff]
    %v1067 = vld [vmem:[%s1065 + $0x8] sm:$0xff]
    %v1068 = vld [vmem:[%s1065 + $0x10] sm:$0xff]
    %v1069 = vld [vmem:[%s1065 + $0x18] sm:$0xff]
    %v1070 = vld [vmem:[%s1065 + $0x20] sm:$0xff]
    %v1071 = vld [vmem:[%s1065 + $0x28] sm:$0xff]
    %v1072 = vld [vmem:[%s1065 + $0x30] sm:$0xff]
    %v1073 = vld [vmem:[%s1065 + $0x38] sm:$0xff]
    %v1074 = vld [vmem:[%s1065 + $0x40] sm:$0xff]
    %v1075 = vld [vmem:[%s1065 + $0x48] sm:$0xff]
    %v1076 = vld [vmem:[%s1065 + $0x50] sm:$0xff]
    %v1077 = vld [vmem:[%s1065 + $0x58] sm:$0xff]
    %v1078 = vld [vmem:[%s1065 + $0x60] sm:$0xff]
    %v1079 = vld [vmem:[%s1065 + $0x68] sm:$0xff]
    %v1080 = vld [vmem:[%s1065 + $0x70] sm:$0xff]
    %v1081 = vld [vmem:[%s1065 + $0x78] sm:$0xff]
    %1082 = vmatpush.msra.mxu0 %v1081
    %1083 = vmatpush.msra.mxu0 %v1080
    %1084 = vmatpush.msra.mxu0 %v1079
    %1085 = vmatpush.msra.mxu0 %v1078
    %1086 = vmatpush.msra.mxu0 %v1077
    %1087 = vmatpush.msra.mxu0 %v1076
    %1088 = vmatpush.msra.mxu0 %v1075
    %1089 = vmatpush.msra.mxu0 %v1074
    %1090 = vmatpush.msra.mxu0 %v1073
    %1091 = vmatpush.msra.mxu0 %v1072
    %1092 = vmatpush.msra.mxu0 %v1071
    %1093 = vmatpush.msra.mxu0 %v1070
    %1094 = vmatpush.msra.mxu0 %v1069
    %1095 = vmatpush.msra.mxu0 %v1068
    %1096 = vmatpush.msra.mxu0 %v1067
    %1097 = vmatpush.msra.mxu0 %v1066
    %1098 = vmatmul.f32.gmra.mxu0 %v1023
    %v1099 = vpop.f32.mrf.mxu0
    %v1100 = vadd.f32 0.0, %v1099
    %1101 = vdwg.mxu0
    %v1103 = vsel %vm729, %v1063, 0
    %v1106 = vsel %vm729, %v1064, 0
    %1108 = vmatpush.msra.mxu0 0.0
    %1109 = vmatpush.msra.mxu0 0.0
    %1110 = vmatpush.msra.mxu0 0.0
    %1111 = vmatpush.msra.mxu0 0.0
    %1112 = vmatpush.msra.mxu0 0.0
    %1113 = vmatpush.msra.mxu0 0.0
    %1114 = vmatpush.msra.mxu0 0.0
    %1115 = vmatpush.msra.mxu0 0.0
    %1116 = vmatpush.msra.mxu0 0.0
    %1117 = vmatpush.msra.mxu0 0.0
    %1118 = vmatpush.msra.mxu0 0.0
    %1119 = vmatpush.msra.mxu0 0.0
    %1120 = vmatpush.msra.mxu0 0.0
    %1121 = vmatpush.msra.mxu0 0.0
    %1122 = vmatpush.msra.mxu0 0.0
    %1123 = vmatpush.msra.mxu0 %v1100
    %1124 = vmatmul.f32.gmra.mxu0 %v1103
    %v1125 = vpop.f32.mrf.mxu0
    %v1126 = vadd.f32 0.0, %v1125
    %1127 = vmatmul.f32.gmra.mxu0 %v1106
    %v1128 = vpop.f32.mrf.mxu0
    %v1129 = vadd.f32 0.0, %v1128
    %1130 = vdwg.mxu0
    %v1132 = vsel %vm729, %v1024, 0
    %v1135 = vsel %vm729, %v1025, 0
    %1137 = vmatpush.msra.mxu0 0.0
    %1138 = vmatpush.msra.mxu0 0.0
    %1139 = vmatpush.msra.mxu0 0.0
    %1140 = vmatpush.msra.mxu0 0.0
    %1141 = vmatpush.msra.mxu0 0.0
    %1142 = vmatpush.msra.mxu0 0.0
    %1143 = vmatpush.msra.mxu0 0.0
    %1144 = vmatpush.msra.mxu0 0.0
    %1145 = vmatpush.msra.mxu0 0.0
    %1146 = vmatpush.msra.mxu0 0.0
    %1147 = vmatpush.msra.mxu0 0.0
    %1148 = vmatpush.msra.mxu0 0.0
    %1149 = vmatpush.msra.mxu0 0.0
    %1150 = vmatpush.msra.mxu0 0.0
    %1151 = vmatpush.msra.mxu0 0.0
    %1152 = vmatpush.msra.mxu0 %v1060
    %1153 = vmatmul.f32.gmra.mxu0 %v1132
    %v1154 = vpop.f32.mrf.mxu0
    %v1155 = vadd.f32 %v1126, %v1154
    %1156 = vmatmul.f32.gmra.mxu0 %v1135
    %v1157 = vpop.f32.mrf.mxu0
    %v1158 = vadd.f32 %v1129, %v1157
    %1159 = vdwg.mxu0
    %s1160 = scalar_lea.vmem %s10, 32
    %v1161 = vld [vmem:[%s1160] sm:$0xff]
    %v1162 = vld [vmem:[%s1160 + $0x8] sm:$0xff]
    %s1163 = scalar_lea.vmem [#allocation6], 256
    %v1164 = vld [vmem:[%s1163] sm:$0xff]
    %v1165 = vld [vmem:[%s1163 + $0x8] sm:$0xff]
    %v1166 = vld [vmem:[%s1163 + $0x10] sm:$0xff]
    %v1167 = vld [vmem:[%s1163 + $0x18] sm:$0xff]
    %v1168 = vld [vmem:[%s1163 + $0x20] sm:$0xff]
    %v1169 = vld [vmem:[%s1163 + $0x28] sm:$0xff]
    %v1170 = vld [vmem:[%s1163 + $0x30] sm:$0xff]
    %v1171 = vld [vmem:[%s1163 + $0x38] sm:$0xff]
    %v1172 = vld [vmem:[%s1163 + $0x40] sm:$0xff]
    %v1173 = vld [vmem:[%s1163 + $0x48] sm:$0xff]
    %v1174 = vld [vmem:[%s1163 + $0x50] sm:$0xff]
    %v1175 = vld [vmem:[%s1163 + $0x58] sm:$0xff]
    %v1176 = vld [vmem:[%s1163 + $0x60] sm:$0xff]
    %v1177 = vld [vmem:[%s1163 + $0x68] sm:$0xff]
    %v1178 = vld [vmem:[%s1163 + $0x70] sm:$0xff]
    %v1179 = vld [vmem:[%s1163 + $0x78] sm:$0xff]
    %1180 = vmatpush.msra.mxu0 %v1179
    %1181 = vmatpush.msra.mxu0 %v1178
    %1182 = vmatpush.msra.mxu0 %v1177
    %1183 = vmatpush.msra.mxu0 %v1176
    %1184 = vmatpush.msra.mxu0 %v1175
    %1185 = vmatpush.msra.mxu0 %v1174
    %1186 = vmatpush.msra.mxu0 %v1173
    %1187 = vmatpush.msra.mxu0 %v1172
    %1188 = vmatpush.msra.mxu0 %v1171
    %1189 = vmatpush.msra.mxu0 %v1170
    %1190 = vmatpush.msra.mxu0 %v1169
    %1191 = vmatpush.msra.mxu0 %v1168
    %1192 = vmatpush.msra.mxu0 %v1167
    %1193 = vmatpush.msra.mxu0 %v1166
    %1194 = vmatpush.msra.mxu0 %v1165
    %1195 = vmatpush.msra.mxu0 %v1164
    %1196 = vmatmul.f32.gmra.mxu0 %v1023
    %v1197 = vpop.f32.mrf.mxu0
    %v1198 = vadd.f32 0.0, %v1197
    %1199 = vdwg.mxu0
    %v1201 = vsel %vm729, %v1161, 0
    %v1204 = vsel %vm729, %v1162, 0
    %1206 = vmatpush.msra.mxu0 0.0
    %1207 = vmatpush.msra.mxu0 0.0
    %1208 = vmatpush.msra.mxu0 0.0
    %1209 = vmatpush.msra.mxu0 0.0
    %1210 = vmatpush.msra.mxu0 0.0
    %1211 = vmatpush.msra.mxu0 0.0
    %1212 = vmatpush.msra.mxu0 0.0
    %1213 = vmatpush.msra.mxu0 0.0
    %1214 = vmatpush.msra.mxu0 0.0
    %1215 = vmatpush.msra.mxu0 0.0
    %1216 = vmatpush.msra.mxu0 0.0
    %1217 = vmatpush.msra.mxu0 0.0
    %1218 = vmatpush.msra.mxu0 0.0
    %1219 = vmatpush.msra.mxu0 0.0
    %1220 = vmatpush.msra.mxu0 0.0
    %1221 = vmatpush.msra.mxu0 %v1198
    %1222 = vmatmul.f32.gmra.mxu0 %v1201
    %v1223 = vpop.f32.mrf.mxu0
    %v1224 = vadd.f32 0.0, %v1223
    %1225 = vmatmul.f32.gmra.mxu0 %v1204
    %v1226 = vpop.f32.mrf.mxu0
    %v1227 = vadd.f32 0.0, %v1226
    %1228 = vdwg.mxu0
    %v1229 = vadd.f32 %v1155, %v1224
    %v1230 = vadd.f32 %v1158, %v1227
    %s1231 = scalar_lea.vmem %s10, 48
    %v1232 = vld [vmem:[%s1231] sm:$0xff]
    %v1233 = vld [vmem:[%s1231 + $0x8] sm:$0xff]
    %s1234 = scalar_lea.vmem [#allocation6], 384
    %v1235 = vld [vmem:[%s1234] sm:$0xff]
    %v1236 = vld [vmem:[%s1234 + $0x8] sm:$0xff]
    %v1237 = vld [vmem:[%s1234 + $0x10] sm:$0xff]
    %v1238 = vld [vmem:[%s1234 + $0x18] sm:$0xff]
    %v1239 = vld [vmem:[%s1234 + $0x20] sm:$0xff]
    %v1240 = vld [vmem:[%s1234 + $0x28] sm:$0xff]
    %v1241 = vld [vmem:[%s1234 + $0x30] sm:$0xff]
    %v1242 = vld [vmem:[%s1234 + $0x38] sm:$0xff]
    %v1243 = vld [vmem:[%s1234 + $0x40] sm:$0xff]
    %v1244 = vld [vmem:[%s1234 + $0x48] sm:$0xff]
    %v1245 = vld [vmem:[%s1234 + $0x50] sm:$0xff]
    %v1246 = vld [vmem:[%s1234 + $0x58] sm:$0xff]
    %v1247 = vld [vmem:[%s1234 + $0x60] sm:$0xff]
    %v1248 = vld [vmem:[%s1234 + $0x68] sm:$0xff]
    %v1249 = vld [vmem:[%s1234 + $0x70] sm:$0xff]
    %v1250 = vld [vmem:[%s1234 + $0x78] sm:$0xff]
    %1251 = vmatpush.msra.mxu0 %v1250
    %1252 = vmatpush.msra.mxu0 %v1249
    %1253 = vmatpush.msra.mxu0 %v1248
    %1254 = vmatpush.msra.mxu0 %v1247
    %1255 = vmatpush.msra.mxu0 %v1246
    %1256 = vmatpush.msra.mxu0 %v1245
    %1257 = vmatpush.msra.mxu0 %v1244
    %1258 = vmatpush.msra.mxu0 %v1243
    %1259 = vmatpush.msra.mxu0 %v1242
    %1260 = vmatpush.msra.mxu0 %v1241
    %1261 = vmatpush.msra.mxu0 %v1240
    %1262 = vmatpush.msra.mxu0 %v1239
    %1263 = vmatpush.msra.mxu0 %v1238
    %1264 = vmatpush.msra.mxu0 %v1237
    %1265 = vmatpush.msra.mxu0 %v1236
    %1266 = vmatpush.msra.mxu0 %v1235
    %1267 = vmatmul.f32.gmra.mxu0 %v1023
    %v1268 = vpop.f32.mrf.mxu0
    %v1269 = vadd.f32 0.0, %v1268
    %1270 = vdwg.mxu0
    %v1272 = vsel %vm729, %v1232, 0
    %v1275 = vsel %vm729, %v1233, 0
    %1277 = vmatpush.msra.mxu0 0.0
    %1278 = vmatpush.msra.mxu0 0.0
    %1279 = vmatpush.msra.mxu0 0.0
    %1280 = vmatpush.msra.mxu0 0.0
    %1281 = vmatpush.msra.mxu0 0.0
    %1282 = vmatpush.msra.mxu0 0.0
    %1283 = vmatpush.msra.mxu0 0.0
    %1284 = vmatpush.msra.mxu0 0.0
    %1285 = vmatpush.msra.mxu0 0.0
    %1286 = vmatpush.msra.mxu0 0.0
    %1287 = vmatpush.msra.mxu0 0.0
    %1288 = vmatpush.msra.mxu0 0.0
    %1289 = vmatpush.msra.mxu0 0.0
    %1290 = vmatpush.msra.mxu0 0.0
    %1291 = vmatpush.msra.mxu0 0.0
    %1292 = vmatpush.msra.mxu0 %v1269
    %1293 = vmatmul.f32.gmra.mxu0 %v1272
    %v1294 = vpop.f32.mrf.mxu0
    %v1295 = vadd.f32 0.0, %v1294
    %1296 = vmatmul.f32.gmra.mxu0 %v1275
    %v1297 = vpop.f32.mrf.mxu0
    %v1298 = vadd.f32 0.0, %v1297
    %1299 = vdwg.mxu0
    %v1300 = vadd.f32 %v1229, %v1295
    %v1301 = vadd.f32 %v1230, %v1298
    %v1302 = vld [vmem:[%s12] sm:$0xff]
    %v1303 = vld [vmem:[%s12 + $0x8] sm:$0xff]
    %1305 = vset.pattern.permute.xlu0 0
    %1306 = vperm.xlu0 %1305, %v1302
    %v1307 = vpop.permute.xlu0 %1306
    %1310 = vset.pattern.permute.xlu0 0
    %1311 = vperm.xlu0 %1310, %v1303
    %v1312 = vpop.permute.xlu0 %1311
    %v1314 = vadd.f32 %v1300, %v1307
    %v1315 = vadd.f32 %v1301, %v1312
    %1316 = vst [vmem:[%s25] sm:$0xff] %v1314
    %1317 = vst [vmem:[%s26] sm:$0xff] %v1315
    %v1318 = vld [vmem:[%s1] sm:$0xff]
    %v1319 = vmul.f32 %v1315, 0.5
    %v1320 = vmul.f32 %v1319, 1.442695
    %v1321 = vpow.pop %v1320
    %v1322 = vmul.f32 %v1318, %v1321
    %v1323 = vadd.f32 %v1314, %v1322
    %v1324 = vld [vmem:[%s13] sm:$0xff]
    %v1325 = vld [vmem:[%s13 + $0x8] sm:$0xff]
    %v1326 = vld [vmem:[#allocation7] sm:$0xff]
    %v1327 = vld [vmem:[#allocation7 + $0x8] sm:$0xff]
    %v1328 = vld [vmem:[#allocation7 + $0x10] sm:$0xff]
    %v1329 = vld [vmem:[#allocation7 + $0x18] sm:$0xff]
    %v1330 = vld [vmem:[#allocation7 + $0x20] sm:$0xff]
    %v1331 = vld [vmem:[#allocation7 + $0x28] sm:$0xff]
    %v1332 = vld [vmem:[#allocation7 + $0x30] sm:$0xff]
    %v1333 = vld [vmem:[#allocation7 + $0x38] sm:$0xff]
    %v1334 = vld [vmem:[#allocation7 + $0x40] sm:$0xff]
    %v1335 = vld [vmem:[#allocation7 + $0x48] sm:$0xff]
    %v1336 = vld [vmem:[#allocation7 + $0x50] sm:$0xff]
    %v1337 = vld [vmem:[#allocation7 + $0x58] sm:$0xff]
    %v1338 = vld [vmem:[#allocation7 + $0x60] sm:$0xff]
    %v1339 = vld [vmem:[#allocation7 + $0x68] sm:$0xff]
    %v1340 = vld [vmem:[#allocation7 + $0x70] sm:$0xff]
    %v1341 = vld [vmem:[#allocation7 + $0x78] sm:$0xff]
    %1342 = vmatpush.msra.mxu0 %v1341
    %1343 = vmatpush.msra.mxu0 %v1340
    %1344 = vmatpush.msra.mxu0 %v1339
    %1345 = vmatpush.msra.mxu0 %v1338
    %1346 = vmatpush.msra.mxu0 %v1337
    %1347 = vmatpush.msra.mxu0 %v1336
    %1348 = vmatpush.msra.mxu0 %v1335
    %1349 = vmatpush.msra.mxu0 %v1334
    %1350 = vmatpush.msra.mxu0 %v1333
    %1351 = vmatpush.msra.mxu0 %v1332
    %1352 = vmatpush.msra.mxu0 %v1331
    %1353 = vmatpush.msra.mxu0 %v1330
    %1354 = vmatpush.msra.mxu0 %v1329
    %1355 = vmatpush.msra.mxu0 %v1328
    %1356 = vmatpush.msra.mxu0 %v1327
    %1357 = vmatpush.msra.mxu0 %v1326
    %1358 = vmatmul.f32.gmra.mxu0 %v1323
    %v1359 = vpop.f32.mrf.mxu0
    %v1360 = vadd.f32 0.0, %v1359
    %1361 = vdwg.mxu0
    %s1362 = scalar_lea.vmem %s13, 16
    %v1363 = vld [vmem:[%s1362] sm:$0xff]
    %v1364 = vld [vmem:[%s1362 + $0x8] sm:$0xff]
    %s1365 = scalar_lea.vmem [#allocation7], 128
    %v1366 = vld [vmem:[%s1365] sm:$0xff]
    %v1367 = vld [vmem:[%s1365 + $0x8] sm:$0xff]
    %v1368 = vld [vmem:[%s1365 + $0x10] sm:$0xff]
    %v1369 = vld [vmem:[%s1365 + $0x18] sm:$0xff]
    %v1370 = vld [vmem:[%s1365 + $0x20] sm:$0xff]
    %v1371 = vld [vmem:[%s1365 + $0x28] sm:$0xff]
    %v1372 = vld [vmem:[%s1365 + $0x30] sm:$0xff]
    %v1373 = vld [vmem:[%s1365 + $0x38] sm:$0xff]
    %v1374 = vld [vmem:[%s1365 + $0x40] sm:$0xff]
    %v1375 = vld [vmem:[%s1365 + $0x48] sm:$0xff]
    %v1376 = vld [vmem:[%s1365 + $0x50] sm:$0xff]
    %v1377 = vld [vmem:[%s1365 + $0x58] sm:$0xff]
    %v1378 = vld [vmem:[%s1365 + $0x60] sm:$0xff]
    %v1379 = vld [vmem:[%s1365 + $0x68] sm:$0xff]
    %v1380 = vld [vmem:[%s1365 + $0x70] sm:$0xff]
    %v1381 = vld [vmem:[%s1365 + $0x78] sm:$0xff]
    %1382 = vmatpush.msra.mxu0 %v1381
    %1383 = vmatpush.msra.mxu0 %v1380
    %1384 = vmatpush.msra.mxu0 %v1379
    %1385 = vmatpush.msra.mxu0 %v1378
    %1386 = vmatpush.msra.mxu0 %v1377
    %1387 = vmatpush.msra.mxu0 %v1376
    %1388 = vmatpush.msra.mxu0 %v1375
    %1389 = vmatpush.msra.mxu0 %v1374
    %1390 = vmatpush.msra.mxu0 %v1373
    %1391 = vmatpush.msra.mxu0 %v1372
    %1392 = vmatpush.msra.mxu0 %v1371
    %1393 = vmatpush.msra.mxu0 %v1370
    %1394 = vmatpush.msra.mxu0 %v1369
    %1395 = vmatpush.msra.mxu0 %v1368
    %1396 = vmatpush.msra.mxu0 %v1367
    %1397 = vmatpush.msra.mxu0 %v1366
    %1398 = vmatmul.f32.gmra.mxu0 %v1323
    %v1399 = vpop.f32.mrf.mxu0
    %v1400 = vadd.f32 0.0, %v1399
    %1401 = vdwg.mxu0
    %v1403 = vsel %vm729, %v1363, 0
    %v1406 = vsel %vm729, %v1364, 0
    %1408 = vmatpush.msra.mxu0 0.0
    %1409 = vmatpush.msra.mxu0 0.0
    %1410 = vmatpush.msra.mxu0 0.0
    %1411 = vmatpush.msra.mxu0 0.0
    %1412 = vmatpush.msra.mxu0 0.0
    %1413 = vmatpush.msra.mxu0 0.0
    %1414 = vmatpush.msra.mxu0 0.0
    %1415 = vmatpush.msra.mxu0 0.0
    %1416 = vmatpush.msra.mxu0 0.0
    %1417 = vmatpush.msra.mxu0 0.0
    %1418 = vmatpush.msra.mxu0 0.0
    %1419 = vmatpush.msra.mxu0 0.0
    %1420 = vmatpush.msra.mxu0 0.0
    %1421 = vmatpush.msra.mxu0 0.0
    %1422 = vmatpush.msra.mxu0 0.0
    %1423 = vmatpush.msra.mxu0 %v1400
    %1424 = vmatmul.f32.gmra.mxu0 %v1403
    %v1425 = vpop.f32.mrf.mxu0
    %v1426 = vadd.f32 0.0, %v1425
    %1427 = vmatmul.f32.gmra.mxu0 %v1406
    %v1428 = vpop.f32.mrf.mxu0
    %v1429 = vadd.f32 0.0, %v1428
    %1430 = vdwg.mxu0
    %v1432 = vsel %vm729, %v1324, 0
    %v1435 = vsel %vm729, %v1325, 0
    %1437 = vmatpush.msra.mxu0 0.0
    %1438 = vmatpush.msra.mxu0 0.0
    %1439 = vmatpush.msra.mxu0 0.0
    %1440 = vmatpush.msra.mxu0 0.0
    %1441 = vmatpush.msra.mxu0 0.0
    %1442 = vmatpush.msra.mxu0 0.0
    %1443 = vmatpush.msra.mxu0 0.0
    %1444 = vmatpush.msra.mxu0 0.0
    %1445 = vmatpush.msra.mxu0 0.0
    %1446 = vmatpush.msra.mxu0 0.0
    %1447 = vmatpush.msra.mxu0 0.0
    %1448 = vmatpush.msra.mxu0 0.0
    %1449 = vmatpush.msra.mxu0 0.0
    %1450 = vmatpush.msra.mxu0 0.0
    %1451 = vmatpush.msra.mxu0 0.0
    %1452 = vmatpush.msra.mxu0 %v1360
    %1453 = vmatmul.f32.gmra.mxu0 %v1432
    %v1454 = vpop.f32.mrf.mxu0
    %v1455 = vadd.f32 %v1426, %v1454
    %1456 = vmatmul.f32.gmra.mxu0 %v1435
    %v1457 = vpop.f32.mrf.mxu0
    %v1458 = vadd.f32 %v1429, %v1457
    %1459 = vdwg.mxu0
    %s1460 = scalar_lea.vmem %s13, 32
    %v1461 = vld [vmem:[%s1460] sm:$0xff]
    %v1462 = vld [vmem:[%s1460 + $0x8] sm:$0xff]
    %s1463 = scalar_lea.vmem [#allocation7], 256
    %v1464 = vld [vmem:[%s1463] sm:$0xff]
    %v1465 = vld [vmem:[%s1463 + $0x8] sm:$0xff]
    %v1466 = vld [vmem:[%s1463 + $0x10] sm:$0xff]
    %v1467 = vld [vmem:[%s1463 + $0x18] sm:$0xff]
    %v1468 = vld [vmem:[%s1463 + $0x20] sm:$0xff]
    %v1469 = vld [vmem:[%s1463 + $0x28] sm:$0xff]
    %v1470 = vld [vmem:[%s1463 + $0x30] sm:$0xff]
    %v1471 = vld [vmem:[%s1463 + $0x38] sm:$0xff]
    %v1472 = vld [vmem:[%s1463 + $0x40] sm:$0xff]
    %v1473 = vld [vmem:[%s1463 + $0x48] sm:$0xff]
    %v1474 = vld [vmem:[%s1463 + $0x50] sm:$0xff]
    %v1475 = vld [vmem:[%s1463 + $0x58] sm:$0xff]
    %v1476 = vld [vmem:[%s1463 + $0x60] sm:$0xff]
    %v1477 = vld [vmem:[%s1463 + $0x68] sm:$0xff]
    %v1478 = vld [vmem:[%s1463 + $0x70] sm:$0xff]
    %v1479 = vld [vmem:[%s1463 + $0x78] sm:$0xff]
    %1480 = vmatpush.msra.mxu0 %v1479
    %1481 = vmatpush.msra.mxu0 %v1478
    %1482 = vmatpush.msra.mxu0 %v1477
    %1483 = vmatpush.msra.mxu0 %v1476
    %1484 = vmatpush.msra.mxu0 %v1475
    %1485 = vmatpush.msra.mxu0 %v1474
    %1486 = vmatpush.msra.mxu0 %v1473
    %1487 = vmatpush.msra.mxu0 %v1472
    %1488 = vmatpush.msra.mxu0 %v1471
    %1489 = vmatpush.msra.mxu0 %v1470
    %1490 = vmatpush.msra.mxu0 %v1469
    %1491 = vmatpush.msra.mxu0 %v1468
    %1492 = vmatpush.msra.mxu0 %v1467
    %1493 = vmatpush.msra.mxu0 %v1466
    %1494 = vmatpush.msra.mxu0 %v1465
    %1495 = vmatpush.msra.mxu0 %v1464
    %1496 = vmatmul.f32.gmra.mxu0 %v1323
    %v1497 = vpop.f32.mrf.mxu0
    %v1498 = vadd.f32 0.0, %v1497
    %1499 = vdwg.mxu0
    %v1501 = vsel %vm729, %v1461, 0
    %v1504 = vsel %vm729, %v1462, 0
    %1506 = vmatpush.msra.mxu0 0.0
    %1507 = vmatpush.msra.mxu0 0.0
    %1508 = vmatpush.msra.mxu0 0.0
    %1509 = vmatpush.msra.mxu0 0.0
    %1510 = vmatpush.msra.mxu0 0.0
    %1511 = vmatpush.msra.mxu0 0.0
    %1512 = vmatpush.msra.mxu0 0.0
    %1513 = vmatpush.msra.mxu0 0.0
    %1514 = vmatpush.msra.mxu0 0.0
    %1515 = vmatpush.msra.mxu0 0.0
    %1516 = vmatpush.msra.mxu0 0.0
    %1517 = vmatpush.msra.mxu0 0.0
    %1518 = vmatpush.msra.mxu0 0.0
    %1519 = vmatpush.msra.mxu0 0.0
    %1520 = vmatpush.msra.mxu0 0.0
    %1521 = vmatpush.msra.mxu0 %v1498
    %1522 = vmatmul.f32.gmra.mxu0 %v1501
    %v1523 = vpop.f32.mrf.mxu0
    %v1524 = vadd.f32 0.0, %v1523
    %1525 = vmatmul.f32.gmra.mxu0 %v1504
    %v1526 = vpop.f32.mrf.mxu0
    %v1527 = vadd.f32 0.0, %v1526
    %1528 = vdwg.mxu0
    %v1529 = vadd.f32 %v1455, %v1524
    %v1530 = vadd.f32 %v1458, %v1527
    %s1531 = scalar_lea.vmem %s13, 48
    %v1532 = vld [vmem:[%s1531] sm:$0xff]
    %v1533 = vld [vmem:[%s1531 + $0x8] sm:$0xff]
    %s1534 = scalar_lea.vmem [#allocation7], 384
    %v1535 = vld [vmem:[%s1534] sm:$0xff]
    %v1536 = vld [vmem:[%s1534 + $0x8] sm:$0xff]
    %v1537 = vld [vmem:[%s1534 + $0x10] sm:$0xff]
    %v1538 = vld [vmem:[%s1534 + $0x18] sm:$0xff]
    %v1539 = vld [vmem:[%s1534 + $0x20] sm:$0xff]
    %v1540 = vld [vmem:[%s1534 + $0x28] sm:$0xff]
    %v1541 = vld [vmem:[%s1534 + $0x30] sm:$0xff]
    %v1542 = vld [vmem:[%s1534 + $0x38] sm:$0xff]
    %v1543 = vld [vmem:[%s1534 + $0x40] sm:$0xff]
    %v1544 = vld [vmem:[%s1534 + $0x48] sm:$0xff]
    %v1545 = vld [vmem:[%s1534 + $0x50] sm:$0xff]
    %v1546 = vld [vmem:[%s1534 + $0x58] sm:$0xff]
    %v1547 = vld [vmem:[%s1534 + $0x60] sm:$0xff]
    %v1548 = vld [vmem:[%s1534 + $0x68] sm:$0xff]
    %v1549 = vld [vmem:[%s1534 + $0x70] sm:$0xff]
    %v1550 = vld [vmem:[%s1534 + $0x78] sm:$0xff]
    %1551 = vmatpush.msra.mxu0 %v1550
    %1552 = vmatpush.msra.mxu0 %v1549
    %1553 = vmatpush.msra.mxu0 %v1548
    %1554 = vmatpush.msra.mxu0 %v1547
    %1555 = vmatpush.msra.mxu0 %v1546
    %1556 = vmatpush.msra.mxu0 %v1545
    %1557 = vmatpush.msra.mxu0 %v1544
    %1558 = vmatpush.msra.mxu0 %v1543
    %1559 = vmatpush.msra.mxu0 %v1542
    %1560 = vmatpush.msra.mxu0 %v1541
    %1561 = vmatpush.msra.mxu0 %v1540
    %1562 = vmatpush.msra.mxu0 %v1539
    %1563 = vmatpush.msra.mxu0 %v1538
    %1564 = vmatpush.msra.mxu0 %v1537
    %1565 = vmatpush.msra.mxu0 %v1536
    %1566 = vmatpush.msra.mxu0 %v1535
    %1567 = vmatmul.f32.gmra.mxu0 %v1323
    %v1568 = vpop.f32.mrf.mxu0
    %v1569 = vadd.f32 0.0, %v1568
    %1570 = vdwg.mxu0
    %v1572 = vsel %vm729, %v1532, 0
    %v1575 = vsel %vm729, %v1533, 0
    %1577 = vmatpush.msra.mxu0 0.0
    %1578 = vmatpush.msra.mxu0 0.0
    %1579 = vmatpush.msra.mxu0 0.0
    %1580 = vmatpush.msra.mxu0 0.0
    %1581 = vmatpush.msra.mxu0 0.0
    %1582 = vmatpush.msra.mxu0 0.0
    %1583 = vmatpush.msra.mxu0 0.0
    %1584 = vmatpush.msra.mxu0 0.0
    %1585 = vmatpush.msra.mxu0 0.0
    %1586 = vmatpush.msra.mxu0 0.0
    %1587 = vmatpush.msra.mxu0 0.0
    %1588 = vmatpush.msra.mxu0 0.0
    %1589 = vmatpush.msra.mxu0 0.0
    %1590 = vmatpush.msra.mxu0 0.0
    %1591 = vmatpush.msra.mxu0 0.0
    %1592 = vmatpush.msra.mxu0 %v1569
    %1593 = vmatmul.f32.gmra.mxu0 %v1572
    %v1594 = vpop.f32.mrf.mxu0
    %v1595 = vadd.f32 0.0, %v1594
    %1596 = vmatmul.f32.gmra.mxu0 %v1575
    %v1597 = vpop.f32.mrf.mxu0
    %v1598 = vadd.f32 0.0, %v1597
    %1599 = vdwg.mxu0
    %v1600 = vadd.f32 %v1529, %v1595
    %v1601 = vadd.f32 %v1530, %v1598
    %1602 = vadd.xlane.f32.xlu0 %v1600
    %v1603 = vpop.xlane.xlu0 %1602
    %1604 = vadd.xlane.f32.xlu0 %v1601
    %v1605 = vpop.xlane.xlu0 %1604
    %v1606 = vmul.f32 %v1603, 0.0625
    %v1607 = vmul.f32 %v1605, 0.0625
    %v1608 = vmul.f32 %v1600, %v1600
    %v1609 = vmul.f32 %v1601, %v1601
    %1610 = vadd.xlane.f32.xlu0 %v1608
    %v1611 = vpop.xlane.xlu0 %1610
    %1612 = vadd.xlane.f32.xlu0 %v1609
    %v1613 = vpop.xlane.xlu0 %1612
    %v1614 = vmul.f32 %v1611, 0.0625
    %v1615 = vmul.f32 %v1613, 0.0625
    %v1616 = vmul.f32 %v1606, %v1606
    %v1617 = vmul.f32 %v1607, %v1607
    %v1618 = vsub.f32 %v1614, %v1616
    %v1619 = vsub.f32 %v1615, %v1617
    %v1620 = vmax.f32 %v1618, 0.0
    %v1621 = vmax.f32 %v1619, 0.0
    %v1622 = vsub.f32 %v1600, %v1606
    %v1623 = vsub.f32 %v1601, %v1607
    %v1624 = vld [vmem:[%s15] sm:$0xff]
    %v1625 = vld [vmem:[%s15 + $0x8] sm:$0xff]
    %v1626 = vadd.f32 %v1620, 1e-05
    %v1627 = vadd.f32 %v1621, 1e-05
    %v1628 = vrsqrt.pop %v1626
    %v1629 = vmul.f32 %v1628, %v1626
    %v1630 = vmul.f32 %v1629, %v1628
    %v1631 = vmul.f32 0.5, %v1630
    %v1632 = vsub.f32 1.5, %v1631
    %v1633 = vmul.f32 %v1628, %v1632
    %vm1634 = vweird.f32 %v1626
    %vm1635 = vweird.f32 %v1628
    %vm1636 = vmor %vm1634, %vm1635
    %v1637 = vsel %vm1636, %v1628, %v1633
    %v1638 = vrsqrt.pop %v1627
    %v1639 = vmul.f32 %v1638, %v1627
    %v1640 = vmul.f32 %v1639, %v1638
    %v1641 = vmul.f32 0.5, %v1640
    %v1642 = vsub.f32 1.5, %v1641
    %v1643 = vmul.f32 %v1638, %v1642
    %vm1644 = vweird.f32 %v1627
    %vm1645 = vweird.f32 %v1638
    %vm1646 = vmor %vm1644, %vm1645
    %v1647 = vsel %vm1646, %v1638, %v1643
    %v1648 = vmul.f32 %v1624, %v1637
    %v1649 = vmul.f32 %v1625, %v1647
    %1651 = vset.pattern.permute.xlu0 0
    %1652 = vperm.xlu0 %1651, %v1648
    %v1653 = vpop.permute.xlu0 %1652
    %1656 = vset.pattern.permute.xlu0 0
    %1657 = vperm.xlu0 %1656, %v1649
    %v1658 = vpop.permute.xlu0 %1657
    %v1660 = vmul.f32 %v1622, %v1653
    %v1661 = vmul.f32 %v1623, %v1658
    %v1662 = vld [vmem:[%s16] sm:$0xff]
    %v1663 = vld [vmem:[%s16 + $0x8] sm:$0xff]
    %1665 = vset.pattern.permute.xlu0 0
    %1666 = vperm.xlu0 %1665, %v1662
    %v1667 = vpop.permute.xlu0 %1666
    %1670 = vset.pattern.permute.xlu0 0
    %1671 = vperm.xlu0 %1670, %v1663
    %v1672 = vpop.permute.xlu0 %1671
    %v1674 = vadd.f32 %v1660, %v1667
    %v1675 = vadd.f32 %v1661, %v1672
    %v1676 = vxor.u32 %v1675, 2147483648
    %v1677 = vmul.f32 %v1676, 1.442695
    %v1678 = vpow.pop %v1677
    %v1679 = vadd.f32 %v1678, 1.0
    %v1680 = vrcp.pop %v1679
    %v1681 = vmul.f32 %v1679, %v1680
    %v1682 = vsub.f32 1.0, %v1681
    %v1683 = vmul.f32 %v1680, %v1682
    %v1684 = vadd.f32 %v1680, %v1683
    %vm1685 = vweird.f32 %v1679
    %vm1686 = vweird.f32 %v1680
    %vm1687 = vmor %vm1685, %vm1686
    %v1688 = vsel %vm1687, %v1680, %v1684
    %v1689 = vand.u32 2147483647, %v1679
    %vm1690 = vcmp.eq.f32.partialorder %v1689, 8.507059e+37
    %v1691 = vand.u32 %v1679, 2147483648
    %v1692 = vor.u32 1.1754944e-38, %v1691
    %v1693 = vsel %vm1690, %v1692, %v1688
    %v1694 = vmul.f32 1.0, %v1693
    %v1695 = vmul.f32 %v1674, %v1694
    %v1696 = vld [vmem:[%s17] sm:$0xff]
    %v1697 = vld [vmem:[%s17 + $0x8] sm:$0xff]
    %v1698 = vld [vmem:[#allocation9] sm:$0xff]
    %v1699 = vld [vmem:[#allocation9 + $0x8] sm:$0xff]
    %v1700 = vld [vmem:[#allocation9 + $0x10] sm:$0xff]
    %v1701 = vld [vmem:[#allocation9 + $0x18] sm:$0xff]
    %v1702 = vld [vmem:[#allocation9 + $0x20] sm:$0xff]
    %v1703 = vld [vmem:[#allocation9 + $0x28] sm:$0xff]
    %v1704 = vld [vmem:[#allocation9 + $0x30] sm:$0xff]
    %v1705 = vld [vmem:[#allocation9 + $0x38] sm:$0xff]
    %v1706 = vld [vmem:[#allocation9 + $0x40] sm:$0xff]
    %v1707 = vld [vmem:[#allocation9 + $0x48] sm:$0xff]
    %v1708 = vld [vmem:[#allocation9 + $0x50] sm:$0xff]
    %v1709 = vld [vmem:[#allocation9 + $0x58] sm:$0xff]
    %v1710 = vld [vmem:[#allocation9 + $0x60] sm:$0xff]
    %v1711 = vld [vmem:[#allocation9 + $0x68] sm:$0xff]
    %v1712 = vld [vmem:[#allocation9 + $0x70] sm:$0xff]
    %v1713 = vld [vmem:[#allocation9 + $0x78] sm:$0xff]
    %1714 = vmatpush.msra.mxu0 %v1713
    %1715 = vmatpush.msra.mxu0 %v1712
    %1716 = vmatpush.msra.mxu0 %v1711
    %1717 = vmatpush.msra.mxu0 %v1710
    %1718 = vmatpush.msra.mxu0 %v1709
    %1719 = vmatpush.msra.mxu0 %v1708
    %1720 = vmatpush.msra.mxu0 %v1707
    %1721 = vmatpush.msra.mxu0 %v1706
    %1722 = vmatpush.msra.mxu0 %v1705
    %1723 = vmatpush.msra.mxu0 %v1704
    %1724 = vmatpush.msra.mxu0 %v1703
    %1725 = vmatpush.msra.mxu0 %v1702
    %1726 = vmatpush.msra.mxu0 %v1701
    %1727 = vmatpush.msra.mxu0 %v1700
    %1728 = vmatpush.msra.mxu0 %v1699
    %1729 = vmatpush.msra.mxu0 %v1698
    %1730 = vmatmul.f32.gmra.mxu0 %v1695
    %v1731 = vpop.f32.mrf.mxu0
    %v1732 = vadd.f32 0.0, %v1731
    %1733 = vdwg.mxu0
    %s1734 = scalar_lea.vmem %s17, 16
    %v1735 = vld [vmem:[%s1734] sm:$0xff]
    %v1736 = vld [vmem:[%s1734 + $0x8] sm:$0xff]
    %s1737 = scalar_lea.vmem [#allocation9], 128
    %v1738 = vld [vmem:[%s1737] sm:$0xff]
    %v1739 = vld [vmem:[%s1737 + $0x8] sm:$0xff]
    %v1740 = vld [vmem:[%s1737 + $0x10] sm:$0xff]
    %v1741 = vld [vmem:[%s1737 + $0x18] sm:$0xff]
    %v1742 = vld [vmem:[%s1737 + $0x20] sm:$0xff]
    %v1743 = vld [vmem:[%s1737 + $0x28] sm:$0xff]
    %v1744 = vld [vmem:[%s1737 + $0x30] sm:$0xff]
    %v1745 = vld [vmem:[%s1737 + $0x38] sm:$0xff]
    %v1746 = vld [vmem:[%s1737 + $0x40] sm:$0xff]
    %v1747 = vld [vmem:[%s1737 + $0x48] sm:$0xff]
    %v1748 = vld [vmem:[%s1737 + $0x50] sm:$0xff]
    %v1749 = vld [vmem:[%s1737 + $0x58] sm:$0xff]
    %v1750 = vld [vmem:[%s1737 + $0x60] sm:$0xff]
    %v1751 = vld [vmem:[%s1737 + $0x68] sm:$0xff]
    %v1752 = vld [vmem:[%s1737 + $0x70] sm:$0xff]
    %v1753 = vld [vmem:[%s1737 + $0x78] sm:$0xff]
    %1754 = vmatpush.msra.mxu0 %v1753
    %1755 = vmatpush.msra.mxu0 %v1752
    %1756 = vmatpush.msra.mxu0 %v1751
    %1757 = vmatpush.msra.mxu0 %v1750
    %1758 = vmatpush.msra.mxu0 %v1749
    %1759 = vmatpush.msra.mxu0 %v1748
    %1760 = vmatpush.msra.mxu0 %v1747
    %1761 = vmatpush.msra.mxu0 %v1746
    %1762 = vmatpush.msra.mxu0 %v1745
    %1763 = vmatpush.msra.mxu0 %v1744
    %1764 = vmatpush.msra.mxu0 %v1743
    %1765 = vmatpush.msra.mxu0 %v1742
    %1766 = vmatpush.msra.mxu0 %v1741
    %1767 = vmatpush.msra.mxu0 %v1740
    %1768 = vmatpush.msra.mxu0 %v1739
    %1769 = vmatpush.msra.mxu0 %v1738
    %1770 = vmatmul.f32.gmra.mxu0 %v1695
    %v1771 = vpop.f32.mrf.mxu0
    %v1772 = vadd.f32 0.0, %v1771
    %1773 = vdwg.mxu0
    %v1775 = vsel %vm729, %v1735, 0
    %v1778 = vsel %vm729, %v1736, 0
    %1780 = vmatpush.msra.mxu0 0.0
    %1781 = vmatpush.msra.mxu0 0.0
    %1782 = vmatpush.msra.mxu0 0.0
    %1783 = vmatpush.msra.mxu0 0.0
    %1784 = vmatpush.msra.mxu0 0.0
    %1785 = vmatpush.msra.mxu0 0.0
    %1786 = vmatpush.msra.mxu0 0.0
    %1787 = vmatpush.msra.mxu0 0.0
    %1788 = vmatpush.msra.mxu0 0.0
    %1789 = vmatpush.msra.mxu0 0.0
    %1790 = vmatpush.msra.mxu0 0.0
    %1791 = vmatpush.msra.mxu0 0.0
    %1792 = vmatpush.msra.mxu0 0.0
    %1793 = vmatpush.msra.mxu0 0.0
    %1794 = vmatpush.msra.mxu0 0.0
    %1795 = vmatpush.msra.mxu0 %v1772
    %1796 = vmatmul.f32.gmra.mxu0 %v1775
    %v1797 = vpop.f32.mrf.mxu0
    %v1798 = vadd.f32 0.0, %v1797
    %1799 = vmatmul.f32.gmra.mxu0 %v1778
    %v1800 = vpop.f32.mrf.mxu0
    %v1801 = vadd.f32 0.0, %v1800
    %1802 = vdwg.mxu0
    %v1804 = vsel %vm729, %v1696, 0
    %v1807 = vsel %vm729, %v1697, 0
    %1809 = vmatpush.msra.mxu0 0.0
    %1810 = vmatpush.msra.mxu0 0.0
    %1811 = vmatpush.msra.mxu0 0.0
    %1812 = vmatpush.msra.mxu0 0.0
    %1813 = vmatpush.msra.mxu0 0.0
    %1814 = vmatpush.msra.mxu0 0.0
    %1815 = vmatpush.msra.mxu0 0.0
    %1816 = vmatpush.msra.mxu0 0.0
    %1817 = vmatpush.msra.mxu0 0.0
    %1818 = vmatpush.msra.mxu0 0.0
    %1819 = vmatpush.msra.mxu0 0.0
    %1820 = vmatpush.msra.mxu0 0.0
    %1821 = vmatpush.msra.mxu0 0.0
    %1822 = vmatpush.msra.mxu0 0.0
    %1823 = vmatpush.msra.mxu0 0.0
    %1824 = vmatpush.msra.mxu0 %v1732
    %1825 = vmatmul.f32.gmra.mxu0 %v1804
    %v1826 = vpop.f32.mrf.mxu0
    %v1827 = vadd.f32 %v1798, %v1826
    %1828 = vmatmul.f32.gmra.mxu0 %v1807
    %v1829 = vpop.f32.mrf.mxu0
    %v1830 = vadd.f32 %v1801, %v1829
    %1831 = vdwg.mxu0
    %s1832 = scalar_lea.vmem %s17, 32
    %v1833 = vld [vmem:[%s1832] sm:$0xff]
    %v1834 = vld [vmem:[%s1832 + $0x8] sm:$0xff]
    %s1835 = scalar_lea.vmem [#allocation9], 256
    %v1836 = vld [vmem:[%s1835] sm:$0xff]
    %v1837 = vld [vmem:[%s1835 + $0x8] sm:$0xff]
    %v1838 = vld [vmem:[%s1835 + $0x10] sm:$0xff]
    %v1839 = vld [vmem:[%s1835 + $0x18] sm:$0xff]
    %v1840 = vld [vmem:[%s1835 + $0x20] sm:$0xff]
    %v1841 = vld [vmem:[%s1835 + $0x28] sm:$0xff]
    %v1842 = vld [vmem:[%s1835 + $0x30] sm:$0xff]
    %v1843 = vld [vmem:[%s1835 + $0x38] sm:$0xff]
    %v1844 = vld [vmem:[%s1835 + $0x40] sm:$0xff]
    %v1845 = vld [vmem:[%s1835 + $0x48] sm:$0xff]
    %v1846 = vld [vmem:[%s1835 + $0x50] sm:$0xff]
    %v1847 = vld [vmem:[%s1835 + $0x58] sm:$0xff]
    %v1848 = vld [vmem:[%s1835 + $0x60] sm:$0xff]
    %v1849 = vld [vmem:[%s1835 + $0x68] sm:$0xff]
    %v1850 = vld [vmem:[%s1835 + $0x70] sm:$0xff]
    %v1851 = vld [vmem:[%s1835 + $0x78] sm:$0xff]
    %1852 = vmatpush.msra.mxu0 %v1851
    %1853 = vmatpush.msra.mxu0 %v1850
    %1854 = vmatpush.msra.mxu0 %v1849
    %1855 = vmatpush.msra.mxu0 %v1848
    %1856 = vmatpush.msra.mxu0 %v1847
    %1857 = vmatpush.msra.mxu0 %v1846
    %1858 = vmatpush.msra.mxu0 %v1845
    %1859 = vmatpush.msra.mxu0 %v1844
    %1860 = vmatpush.msra.mxu0 %v1843
    %1861 = vmatpush.msra.mxu0 %v1842
    %1862 = vmatpush.msra.mxu0 %v1841
    %1863 = vmatpush.msra.mxu0 %v1840
    %1864 = vmatpush.msra.mxu0 %v1839
    %1865 = vmatpush.msra.mxu0 %v1838
    %1866 = vmatpush.msra.mxu0 %v1837
    %1867 = vmatpush.msra.mxu0 %v1836
    %1868 = vmatmul.f32.gmra.mxu0 %v1695
    %v1869 = vpop.f32.mrf.mxu0
    %v1870 = vadd.f32 0.0, %v1869
    %1871 = vdwg.mxu0
    %v1873 = vsel %vm729, %v1833, 0
    %v1876 = vsel %vm729, %v1834, 0
    %1878 = vmatpush.msra.mxu0 0.0
    %1879 = vmatpush.msra.mxu0 0.0
    %1880 = vmatpush.msra.mxu0 0.0
    %1881 = vmatpush.msra.mxu0 0.0
    %1882 = vmatpush.msra.mxu0 0.0
    %1883 = vmatpush.msra.mxu0 0.0
    %1884 = vmatpush.msra.mxu0 0.0
    %1885 = vmatpush.msra.mxu0 0.0
    %1886 = vmatpush.msra.mxu0 0.0
    %1887 = vmatpush.msra.mxu0 0.0
    %1888 = vmatpush.msra.mxu0 0.0
    %1889 = vmatpush.msra.mxu0 0.0
    %1890 = vmatpush.msra.mxu0 0.0
    %1891 = vmatpush.msra.mxu0 0.0
    %1892 = vmatpush.msra.mxu0 0.0
    %1893 = vmatpush.msra.mxu0 %v1870
    %1894 = vmatmul.f32.gmra.mxu0 %v1873
    %v1895 = vpop.f32.mrf.mxu0
    %v1896 = vadd.f32 0.0, %v1895
    %1897 = vmatmul.f32.gmra.mxu0 %v1876
    %v1898 = vpop.f32.mrf.mxu0
    %v1899 = vadd.f32 0.0, %v1898
    %1900 = vdwg.mxu0
    %v1901 = vadd.f32 %v1827, %v1896
    %v1902 = vadd.f32 %v1830, %v1899
    %s1903 = scalar_lea.vmem %s17, 48
    %v1904 = vld [vmem:[%s1903] sm:$0xff]
    %v1905 = vld [vmem:[%s1903 + $0x8] sm:$0xff]
    %s1906 = scalar_lea.vmem [#allocation9], 384
    %v1907 = vld [vmem:[%s1906] sm:$0xff]
    %v1908 = vld [vmem:[%s1906 + $0x8] sm:$0xff]
    %v1909 = vld [vmem:[%s1906 + $0x10] sm:$0xff]
    %v1910 = vld [vmem:[%s1906 + $0x18] sm:$0xff]
    %v1911 = vld [vmem:[%s1906 + $0x20] sm:$0xff]
    %v1912 = vld [vmem:[%s1906 + $0x28] sm:$0xff]
    %v1913 = vld [vmem:[%s1906 + $0x30] sm:$0xff]
    %v1914 = vld [vmem:[%s1906 + $0x38] sm:$0xff]
    %v1915 = vld [vmem:[%s1906 + $0x40] sm:$0xff]
    %v1916 = vld [vmem:[%s1906 + $0x48] sm:$0xff]
    %v1917 = vld [vmem:[%s1906 + $0x50] sm:$0xff]
    %v1918 = vld [vmem:[%s1906 + $0x58] sm:$0xff]
    %v1919 = vld [vmem:[%s1906 + $0x60] sm:$0xff]
    %v1920 = vld [vmem:[%s1906 + $0x68] sm:$0xff]
    %v1921 = vld [vmem:[%s1906 + $0x70] sm:$0xff]
    %v1922 = vld [vmem:[%s1906 + $0x78] sm:$0xff]
    %1923 = vmatpush.msra.mxu0 %v1922
    %1924 = vmatpush.msra.mxu0 %v1921
    %1925 = vmatpush.msra.mxu0 %v1920
    %1926 = vmatpush.msra.mxu0 %v1919
    %1927 = vmatpush.msra.mxu0 %v1918
    %1928 = vmatpush.msra.mxu0 %v1917
    %1929 = vmatpush.msra.mxu0 %v1916
    %1930 = vmatpush.msra.mxu0 %v1915
    %1931 = vmatpush.msra.mxu0 %v1914
    %1932 = vmatpush.msra.mxu0 %v1913
    %1933 = vmatpush.msra.mxu0 %v1912
    %1934 = vmatpush.msra.mxu0 %v1911
    %1935 = vmatpush.msra.mxu0 %v1910
    %1936 = vmatpush.msra.mxu0 %v1909
    %1937 = vmatpush.msra.mxu0 %v1908
    %1938 = vmatpush.msra.mxu0 %v1907
    %1939 = vmatmul.f32.gmra.mxu0 %v1695
    %v1940 = vpop.f32.mrf.mxu0
    %v1941 = vadd.f32 0.0, %v1940
    %1942 = vdwg.mxu0
    %v1944 = vsel %vm729, %v1904, 0
    %v1947 = vsel %vm729, %v1905, 0
    %1949 = vmatpush.msra.mxu0 0.0
    %1950 = vmatpush.msra.mxu0 0.0
    %1951 = vmatpush.msra.mxu0 0.0
    %1952 = vmatpush.msra.mxu0 0.0
    %1953 = vmatpush.msra.mxu0 0.0
    %1954 = vmatpush.msra.mxu0 0.0
    %1955 = vmatpush.msra.mxu0 0.0
    %1956 = vmatpush.msra.mxu0 0.0
    %1957 = vmatpush.msra.mxu0 0.0
    %1958 = vmatpush.msra.mxu0 0.0
    %1959 = vmatpush.msra.mxu0 0.0
    %1960 = vmatpush.msra.mxu0 0.0
    %1961 = vmatpush.msra.mxu0 0.0
    %1962 = vmatpush.msra.mxu0 0.0
    %1963 = vmatpush.msra.mxu0 0.0
    %1964 = vmatpush.msra.mxu0 %v1941
    %1965 = vmatmul.f32.gmra.mxu0 %v1944
    %v1966 = vpop.f32.mrf.mxu0
    %v1967 = vadd.f32 0.0, %v1966
    %1968 = vmatmul.f32.gmra.mxu0 %v1947
    %v1969 = vpop.f32.mrf.mxu0
    %v1970 = vadd.f32 0.0, %v1969
    %1971 = vdwg.mxu0
    %v1972 = vadd.f32 %v1901, %v1967
    %v1973 = vadd.f32 %v1902, %v1970
    %1974 = vadd.xlane.f32.xlu0 %v1972
    %v1975 = vpop.xlane.xlu0 %1974
    %1976 = vadd.xlane.f32.xlu0 %v1973
    %v1977 = vpop.xlane.xlu0 %1976
    %v1978 = vmul.f32 %v1975, 0.03125
    %v1979 = vmul.f32 %v1977, 0.03125
    %v1980 = vmul.f32 %v1972, %v1972
    %v1981 = vmul.f32 %v1973, %v1973
    %1982 = vadd.xlane.f32.xlu0 %v1980
    %v1983 = vpop.xlane.xlu0 %1982
    %1984 = vadd.xlane.f32.xlu0 %v1981
    %v1985 = vpop.xlane.xlu0 %1984
    %v1986 = vmul.f32 %v1983, 0.03125
    %v1987 = vmul.f32 %v1985, 0.03125
    %v1988 = vmul.f32 %v1978, %v1978
    %v1989 = vmul.f32 %v1979, %v1979
    %v1990 = vsub.f32 %v1986, %v1988
    %v1991 = vsub.f32 %v1987, %v1989
    %v1992 = vmax.f32 %v1990, 0.0
    %v1993 = vmax.f32 %v1991, 0.0
    %v1994 = vsub.f32 %v1972, %v1978
    %v1995 = vsub.f32 %v1973, %v1979
    %v1996 = vld [vmem:[%s19] sm:$0xff]
    %v1997 = vld [vmem:[%s19 + $0x8] sm:$0xff]
    %v1998 = vadd.f32 %v1992, 1e-05
    %v1999 = vadd.f32 %v1993, 1e-05
    %v2000 = vrsqrt.pop %v1998
    %v2001 = vmul.f32 %v2000, %v1998
    %v2002 = vmul.f32 %v2001, %v2000
    %v2003 = vmul.f32 0.5, %v2002
    %v2004 = vsub.f32 1.5, %v2003
    %v2005 = vmul.f32 %v2000, %v2004
    %vm2006 = vweird.f32 %v1998
    %vm2007 = vweird.f32 %v2000
    %vm2008 = vmor %vm2006, %vm2007
    %v2009 = vsel %vm2008, %v2000, %v2005
    %v2010 = vrsqrt.pop %v1999
    %v2011 = vmul.f32 %v2010, %v1999
    %v2012 = vmul.f32 %v2011, %v2010
    %v2013 = vmul.f32 0.5, %v2012
    %v2014 = vsub.f32 1.5, %v2013
    %v2015 = vmul.f32 %v2010, %v2014
    %vm2016 = vweird.f32 %v1999
    %vm2017 = vweird.f32 %v2010
    %vm2018 = vmor %vm2016, %vm2017
    %v2019 = vsel %vm2018, %v2010, %v2015
    %v2020 = vmul.f32 %v1996, %v2009
    %v2021 = vmul.f32 %v1997, %v2019
    %2023 = vset.pattern.permute.xlu0 0
    %2024 = vperm.xlu0 %2023, %v2020
    %v2025 = vpop.permute.xlu0 %2024
    %2028 = vset.pattern.permute.xlu0 0
    %2029 = vperm.xlu0 %2028, %v2021
    %v2030 = vpop.permute.xlu0 %2029
    %v2032 = vmul.f32 %v1994, %v2025
    %v2033 = vmul.f32 %v1995, %v2030
    %v2034 = vld [vmem:[%s20] sm:$0xff]
    %v2035 = vld [vmem:[%s20 + $0x8] sm:$0xff]
    %2037 = vset.pattern.permute.xlu0 0
    %2038 = vperm.xlu0 %2037, %v2034
    %v2039 = vpop.permute.xlu0 %2038
    %2042 = vset.pattern.permute.xlu0 0
    %2043 = vperm.xlu0 %2042, %v2035
    %v2044 = vpop.permute.xlu0 %2043
    %v2046 = vadd.f32 %v2032, %v2039
    %v2047 = vadd.f32 %v2033, %v2044
    %v2048 = vxor.u32 %v2047, 2147483648
    %v2049 = vmul.f32 %v2048, 1.442695
    %v2050 = vpow.pop %v2049
    %v2051 = vadd.f32 %v2050, 1.0
    %v2052 = vrcp.pop %v2051
    %v2053 = vmul.f32 %v2051, %v2052
    %v2054 = vsub.f32 1.0, %v2053
    %v2055 = vmul.f32 %v2052, %v2054
    %v2056 = vadd.f32 %v2052, %v2055
    %vm2057 = vweird.f32 %v2051
    %vm2058 = vweird.f32 %v2052
    %vm2059 = vmor %vm2057, %vm2058
    %v2060 = vsel %vm2059, %v2052, %v2056
    %v2061 = vand.u32 2147483647, %v2051
    %vm2062 = vcmp.eq.f32.partialorder %v2061, 8.507059e+37
    %v2063 = vand.u32 %v2051, 2147483648
    %v2064 = vor.u32 1.1754944e-38, %v2063
    %v2065 = vsel %vm2062, %v2064, %v2060
    %v2066 = vmul.f32 1.0, %v2065
    %v2067 = vmul.f32 %v2046, %v2066
    %v2068 = vld [vmem:[%s21] sm:$0xff]
    %v2069 = vld [vmem:[%s21 + $0x8] sm:$0xff]
    %v2070 = vld [vmem:[%s21 + $0x10] sm:$0xff]
    %v2071 = vld [vmem:[#allocation10] sm:$0xff]
    %v2072 = vld [vmem:[#allocation10 + $0x8] sm:$0xff]
    %v2073 = vld [vmem:[#allocation10 + $0x10] sm:$0xff]
    %v2074 = vld [vmem:[#allocation10 + $0x18] sm:$0xff]
    %v2075 = vld [vmem:[#allocation10 + $0x20] sm:$0xff]
    %v2076 = vld [vmem:[#allocation10 + $0x28] sm:$0xff]
    %v2077 = vld [vmem:[#allocation10 + $0x30] sm:$0xff]
    %v2078 = vld [vmem:[#allocation10 + $0x38] sm:$0xff]
    %v2079 = vld [vmem:[#allocation10 + $0x40] sm:$0xff]
    %v2080 = vld [vmem:[#allocation10 + $0x48] sm:$0xff]
    %v2081 = vld [vmem:[#allocation10 + $0x50] sm:$0xff]
    %v2082 = vld [vmem:[#allocation10 + $0x58] sm:$0xff]
    %v2083 = vld [vmem:[#allocation10 + $0x60] sm:$0xff]
    %v2084 = vld [vmem:[#allocation10 + $0x68] sm:$0xff]
    %v2085 = vld [vmem:[#allocation10 + $0x70] sm:$0xff]
    %v2086 = vld [vmem:[#allocation10 + $0x78] sm:$0xff]
    %2087 = vmatpush.msra.mxu0 %v2086
    %2088 = vmatpush.msra.mxu0 %v2085
    %2089 = vmatpush.msra.mxu0 %v2084
    %2090 = vmatpush.msra.mxu0 %v2083
    %2091 = vmatpush.msra.mxu0 %v2082
    %2092 = vmatpush.msra.mxu0 %v2081
    %2093 = vmatpush.msra.mxu0 %v2080
    %2094 = vmatpush.msra.mxu0 %v2079
    %2095 = vmatpush.msra.mxu0 %v2078
    %2096 = vmatpush.msra.mxu0 %v2077
    %2097 = vmatpush.msra.mxu0 %v2076
    %2098 = vmatpush.msra.mxu0 %v2075
    %2099 = vmatpush.msra.mxu0 %v2074
    %2100 = vmatpush.msra.mxu0 %v2073
    %2101 = vmatpush.msra.mxu0 %v2072
    %2102 = vmatpush.msra.mxu0 %v2071
    %2103 = vmatmul.f32.gmra.mxu0 %v2067
    %v2104 = vpop.f32.mrf.mxu0
    %v2105 = vadd.f32 0.0, %v2104
    %2106 = vdwg.mxu0
    %s2107 = scalar_lea.vmem %s21, 24
    %v2108 = vld [vmem:[%s2107] sm:$0xff]
    %v2109 = vld [vmem:[%s2107 + $0x8] sm:$0xff]
    %v2110 = vld [vmem:[%s2107 + $0x10] sm:$0xff]
    %s2111 = scalar_lea.vmem [#allocation10], 128
    %v2112 = vld [vmem:[%s2111] sm:$0xff]
    %v2113 = vld [vmem:[%s2111 + $0x8] sm:$0xff]
    %v2114 = vld [vmem:[%s2111 + $0x10] sm:$0xff]
    %v2115 = vld [vmem:[%s2111 + $0x18] sm:$0xff]
    %v2116 = vld [vmem:[%s2111 + $0x20] sm:$0xff]
    %v2117 = vld [vmem:[%s2111 + $0x28] sm:$0xff]
    %v2118 = vld [vmem:[%s2111 + $0x30] sm:$0xff]
    %v2119 = vld [vmem:[%s2111 + $0x38] sm:$0xff]
    %v2120 = vld [vmem:[%s2111 + $0x40] sm:$0xff]
    %v2121 = vld [vmem:[%s2111 + $0x48] sm:$0xff]
    %v2122 = vld [vmem:[%s2111 + $0x50] sm:$0xff]
    %v2123 = vld [vmem:[%s2111 + $0x58] sm:$0xff]
    %v2124 = vld [vmem:[%s2111 + $0x60] sm:$0xff]
    %v2125 = vld [vmem:[%s2111 + $0x68] sm:$0xff]
    %v2126 = vld [vmem:[%s2111 + $0x70] sm:$0xff]
    %v2127 = vld [vmem:[%s2111 + $0x78] sm:$0xff]
    %2128 = vmatpush.msra.mxu0 %v2127
    %2129 = vmatpush.msra.mxu0 %v2126
    %2130 = vmatpush.msra.mxu0 %v2125
    %2131 = vmatpush.msra.mxu0 %v2124
    %2132 = vmatpush.msra.mxu0 %v2123
    %2133 = vmatpush.msra.mxu0 %v2122
    %2134 = vmatpush.msra.mxu0 %v2121
    %2135 = vmatpush.msra.mxu0 %v2120
    %2136 = vmatpush.msra.mxu0 %v2119
    %2137 = vmatpush.msra.mxu0 %v2118
    %2138 = vmatpush.msra.mxu0 %v2117
    %2139 = vmatpush.msra.mxu0 %v2116
    %2140 = vmatpush.msra.mxu0 %v2115
    %2141 = vmatpush.msra.mxu0 %v2114
    %2142 = vmatpush.msra.mxu0 %v2113
    %2143 = vmatpush.msra.mxu0 %v2112
    %2144 = vmatmul.f32.gmra.mxu0 %v2067
    %v2145 = vpop.f32.mrf.mxu0
    %v2146 = vadd.f32 0.0, %v2145
    %2147 = vdwg.mxu0
    %v2149 = vsel %vm729, %v2108, 0
    %v2152 = vsel %vm729, %v2109, 0
    %v2155 = vsel %vm729, %v2110, 0
    %2157 = vmatpush.msra.mxu0 0.0
    %2158 = vmatpush.msra.mxu0 0.0
    %2159 = vmatpush.msra.mxu0 0.0
    %2160 = vmatpush.msra.mxu0 0.0
    %2161 = vmatpush.msra.mxu0 0.0
    %2162 = vmatpush.msra.mxu0 0.0
    %2163 = vmatpush.msra.mxu0 0.0
    %2164 = vmatpush.msra.mxu0 0.0
    %2165 = vmatpush.msra.mxu0 0.0
    %2166 = vmatpush.msra.mxu0 0.0
    %2167 = vmatpush.msra.mxu0 0.0
    %2168 = vmatpush.msra.mxu0 0.0
    %2169 = vmatpush.msra.mxu0 0.0
    %2170 = vmatpush.msra.mxu0 0.0
    %2171 = vmatpush.msra.mxu0 0.0
    %2172 = vmatpush.msra.mxu0 %v2146
    %2173 = vmatmul.f32.gmra.mxu0 %v2149
    %v2174 = vpop.f32.mrf.mxu0
    %v2175 = vadd.f32 0.0, %v2174
    %2176 = vmatmul.f32.gmra.mxu0 %v2152
    %v2177 = vpop.f32.mrf.mxu0
    %v2178 = vadd.f32 0.0, %v2177
    %2179 = vmatmul.f32.gmra.mxu0 %v2155
    %v2180 = vpop.f32.mrf.mxu0
    %v2181 = vadd.f32 0.0, %v2180
    %2182 = vdwg.mxu0
    %v2184 = vsel %vm729, %v2068, 0
    %v2187 = vsel %vm729, %v2069, 0
    %v2190 = vsel %vm729, %v2070, 0
    %2192 = vmatpush.msra.mxu0 0.0
    %2193 = vmatpush.msra.mxu0 0.0
    %2194 = vmatpush.msra.mxu0 0.0
    %2195 = vmatpush.msra.mxu0 0.0
    %2196 = vmatpush.msra.mxu0 0.0
    %2197 = vmatpush.msra.mxu0 0.0
    %2198 = vmatpush.msra.mxu0 0.0
    %2199 = vmatpush.msra.mxu0 0.0
    %2200 = vmatpush.msra.mxu0 0.0
    %2201 = vmatpush.msra.mxu0 0.0
    %2202 = vmatpush.msra.mxu0 0.0
    %2203 = vmatpush.msra.mxu0 0.0
    %2204 = vmatpush.msra.mxu0 0.0
    %2205 = vmatpush.msra.mxu0 0.0
    %2206 = vmatpush.msra.mxu0 0.0
    %2207 = vmatpush.msra.mxu0 %v2105
    %2208 = vmatmul.f32.gmra.mxu0 %v2184
    %v2209 = vpop.f32.mrf.mxu0
    %v2210 = vadd.f32 %v2175, %v2209
    %2211 = vmatmul.f32.gmra.mxu0 %v2187
    %v2212 = vpop.f32.mrf.mxu0
    %v2213 = vadd.f32 %v2178, %v2212
    %2214 = vmatmul.f32.gmra.mxu0 %v2190
    %v2215 = vpop.f32.mrf.mxu0
    %v2216 = vadd.f32 %v2181, %v2215
    %2217 = vdwg.mxu0
    %s2218 = scalar_lea.vmem %s21, 48
    %v2219 = vld [vmem:[%s2218] sm:$0xff]
    %v2220 = vld [vmem:[%s2218 + $0x8] sm:$0xff]
    %v2221 = vld [vmem:[%s2218 + $0x10] sm:$0xff]
    %s2222 = scalar_lea.vmem [#allocation10], 256
    %v2223 = vld [vmem:[%s2222] sm:$0xff]
    %v2224 = vld [vmem:[%s2222 + $0x8] sm:$0xff]
    %v2225 = vld [vmem:[%s2222 + $0x10] sm:$0xff]
    %v2226 = vld [vmem:[%s2222 + $0x18] sm:$0xff]
    %v2227 = vld [vmem:[%s2222 + $0x20] sm:$0xff]
    %v2228 = vld [vmem:[%s2222 + $0x28] sm:$0xff]
    %v2229 = vld [vmem:[%s2222 + $0x30] sm:$0xff]
    %v2230 = vld [vmem:[%s2222 + $0x38] sm:$0xff]
    %v2231 = vld [vmem:[%s2222 + $0x40] sm:$0xff]
    %v2232 = vld [vmem:[%s2222 + $0x48] sm:$0xff]
    %v2233 = vld [vmem:[%s2222 + $0x50] sm:$0xff]
    %v2234 = vld [vmem:[%s2222 + $0x58] sm:$0xff]
    %v2235 = vld [vmem:[%s2222 + $0x60] sm:$0xff]
    %v2236 = vld [vmem:[%s2222 + $0x68] sm:$0xff]
    %v2237 = vld [vmem:[%s2222 + $0x70] sm:$0xff]
    %v2238 = vld [vmem:[%s2222 + $0x78] sm:$0xff]
    %2239 = vmatpush.msra.mxu0 %v2238
    %2240 = vmatpush.msra.mxu0 %v2237
    %2241 = vmatpush.msra.mxu0 %v2236
    %2242 = vmatpush.msra.mxu0 %v2235
    %2243 = vmatpush.msra.mxu0 %v2234
    %2244 = vmatpush.msra.mxu0 %v2233
    %2245 = vmatpush.msra.mxu0 %v2232
    %2246 = vmatpush.msra.mxu0 %v2231
    %2247 = vmatpush.msra.mxu0 %v2230
    %2248 = vmatpush.msra.mxu0 %v2229
    %2249 = vmatpush.msra.mxu0 %v2228
    %2250 = vmatpush.msra.mxu0 %v2227
    %2251 = vmatpush.msra.mxu0 %v2226
    %2252 = vmatpush.msra.mxu0 %v2225
    %2253 = vmatpush.msra.mxu0 %v2224
    %2254 = vmatpush.msra.mxu0 %v2223
    %2255 = vmatmul.f32.gmra.mxu0 %v2067
    %v2256 = vpop.f32.mrf.mxu0
    %v2257 = vadd.f32 0.0, %v2256
    %2258 = vdwg.mxu0
    %v2260 = vsel %vm729, %v2219, 0
    %v2263 = vsel %vm729, %v2220, 0
    %v2266 = vsel %vm729, %v2221, 0
    %2268 = vmatpush.msra.mxu0 0.0
    %2269 = vmatpush.msra.mxu0 0.0
    %2270 = vmatpush.msra.mxu0 0.0
    %2271 = vmatpush.msra.mxu0 0.0
    %2272 = vmatpush.msra.mxu0 0.0
    %2273 = vmatpush.msra.mxu0 0.0
    %2274 = vmatpush.msra.mxu0 0.0
    %2275 = vmatpush.msra.mxu0 0.0
    %2276 = vmatpush.msra.mxu0 0.0
    %2277 = vmatpush.msra.mxu0 0.0
    %2278 = vmatpush.msra.mxu0 0.0
    %2279 = vmatpush.msra.mxu0 0.0
    %2280 = vmatpush.msra.mxu0 0.0
    %2281 = vmatpush.msra.mxu0 0.0
    %2282 = vmatpush.msra.mxu0 0.0
    %2283 = vmatpush.msra.mxu0 %v2257
    %2284 = vmatmul.f32.gmra.mxu0 %v2260
    %v2285 = vpop.f32.mrf.mxu0
    %v2286 = vadd.f32 0.0, %v2285
    %2287 = vmatmul.f32.gmra.mxu0 %v2263
    %v2288 = vpop.f32.mrf.mxu0
    %v2289 = vadd.f32 0.0, %v2288
    %2290 = vmatmul.f32.gmra.mxu0 %v2266
    %v2291 = vpop.f32.mrf.mxu0
    %v2292 = vadd.f32 0.0, %v2291
    %2293 = vdwg.mxu0
    %v2294 = vadd.f32 %v2210, %v2286
    %v2295 = vadd.f32 %v2213, %v2289
    %v2296 = vadd.f32 %v2216, %v2292
    %s2297 = scalar_lea.vmem %s21, 72
    %v2298 = vld [vmem:[%s2297] sm:$0xff]
    %v2299 = vld [vmem:[%s2297 + $0x8] sm:$0xff]
    %v2300 = vld [vmem:[%s2297 + $0x10] sm:$0xff]
    %s2301 = scalar_lea.vmem [#allocation10], 384
    %v2302 = vld [vmem:[%s2301] sm:$0xff]
    %v2303 = vld [vmem:[%s2301 + $0x8] sm:$0xff]
    %v2304 = vld [vmem:[%s2301 + $0x10] sm:$0xff]
    %v2305 = vld [vmem:[%s2301 + $0x18] sm:$0xff]
    %v2306 = vld [vmem:[%s2301 + $0x20] sm:$0xff]
    %v2307 = vld [vmem:[%s2301 + $0x28] sm:$0xff]
    %v2308 = vld [vmem:[%s2301 + $0x30] sm:$0xff]
    %v2309 = vld [vmem:[%s2301 + $0x38] sm:$0xff]
    %v2310 = vld [vmem:[%s2301 + $0x40] sm:$0xff]
    %v2311 = vld [vmem:[%s2301 + $0x48] sm:$0xff]
    %v2312 = vld [vmem:[%s2301 + $0x50] sm:$0xff]
    %v2313 = vld [vmem:[%s2301 + $0x58] sm:$0xff]
    %v2314 = vld [vmem:[%s2301 + $0x60] sm:$0xff]
    %v2315 = vld [vmem:[%s2301 + $0x68] sm:$0xff]
    %v2316 = vld [vmem:[%s2301 + $0x70] sm:$0xff]
    %v2317 = vld [vmem:[%s2301 + $0x78] sm:$0xff]
    %2318 = vmatpush.msra.mxu0 %v2317
    %2319 = vmatpush.msra.mxu0 %v2316
    %2320 = vmatpush.msra.mxu0 %v2315
    %2321 = vmatpush.msra.mxu0 %v2314
    %2322 = vmatpush.msra.mxu0 %v2313
    %2323 = vmatpush.msra.mxu0 %v2312
    %2324 = vmatpush.msra.mxu0 %v2311
    %2325 = vmatpush.msra.mxu0 %v2310
    %2326 = vmatpush.msra.mxu0 %v2309
    %2327 = vmatpush.msra.mxu0 %v2308
    %2328 = vmatpush.msra.mxu0 %v2307
    %2329 = vmatpush.msra.mxu0 %v2306
    %2330 = vmatpush.msra.mxu0 %v2305
    %2331 = vmatpush.msra.mxu0 %v2304
    %2332 = vmatpush.msra.mxu0 %v2303
    %2333 = vmatpush.msra.mxu0 %v2302
    %2334 = vmatmul.f32.gmra.mxu0 %v2067
    %v2335 = vpop.f32.mrf.mxu0
    %v2336 = vadd.f32 0.0, %v2335
    %2337 = vdwg.mxu0
    %v2339 = vsel %vm729, %v2298, 0
    %v2342 = vsel %vm729, %v2299, 0
    %v2345 = vsel %vm729, %v2300, 0
    %2347 = vmatpush.msra.mxu0 0.0
    %2348 = vmatpush.msra.mxu0 0.0
    %2349 = vmatpush.msra.mxu0 0.0
    %2350 = vmatpush.msra.mxu0 0.0
    %2351 = vmatpush.msra.mxu0 0.0
    %2352 = vmatpush.msra.mxu0 0.0
    %2353 = vmatpush.msra.mxu0 0.0
    %2354 = vmatpush.msra.mxu0 0.0
    %2355 = vmatpush.msra.mxu0 0.0
    %2356 = vmatpush.msra.mxu0 0.0
    %2357 = vmatpush.msra.mxu0 0.0
    %2358 = vmatpush.msra.mxu0 0.0
    %2359 = vmatpush.msra.mxu0 0.0
    %2360 = vmatpush.msra.mxu0 0.0
    %2361 = vmatpush.msra.mxu0 0.0
    %2362 = vmatpush.msra.mxu0 %v2336
    %2363 = vmatmul.f32.gmra.mxu0 %v2339
    %v2364 = vpop.f32.mrf.mxu0
    %v2365 = vadd.f32 0.0, %v2364
    %2366 = vmatmul.f32.gmra.mxu0 %v2342
    %v2367 = vpop.f32.mrf.mxu0
    %v2368 = vadd.f32 0.0, %v2367
    %2369 = vmatmul.f32.gmra.mxu0 %v2345
    %v2370 = vpop.f32.mrf.mxu0
    %v2371 = vadd.f32 0.0, %v2370
    %2372 = vdwg.mxu0
    %v2373 = vadd.f32 %v2294, %v2365
    %v2374 = vadd.f32 %v2295, %v2368
    %v2375 = vadd.f32 %v2296, %v2371
    %s2376 = scalar_lea.vmem %s21, 96
    %v2377 = vld [vmem:[%s2376] sm:$0xff]
    %v2378 = vld [vmem:[%s2376 + $0x8] sm:$0xff]
    %v2379 = vld [vmem:[%s2376 + $0x10] sm:$0xff]
    %s2380 = scalar_lea.vmem [#allocation10], 512
    %v2381 = vld [vmem:[%s2380] sm:$0xff]
    %v2382 = vld [vmem:[%s2380 + $0x8] sm:$0xff]
    %v2383 = vld [vmem:[%s2380 + $0x10] sm:$0xff]
    %v2384 = vld [vmem:[%s2380 + $0x18] sm:$0xff]
    %v2385 = vld [vmem:[%s2380 + $0x20] sm:$0xff]
    %v2386 = vld [vmem:[%s2380 + $0x28] sm:$0xff]
    %v2387 = vld [vmem:[%s2380 + $0x30] sm:$0xff]
    %v2388 = vld [vmem:[%s2380 + $0x38] sm:$0xff]
    %v2389 = vld [vmem:[%s2380 + $0x40] sm:$0xff]
    %v2390 = vld [vmem:[%s2380 + $0x48] sm:$0xff]
    %v2391 = vld [vmem:[%s2380 + $0x50] sm:$0xff]
    %v2392 = vld [vmem:[%s2380 + $0x58] sm:$0xff]
    %v2393 = vld [vmem:[%s2380 + $0x60] sm:$0xff]
    %v2394 = vld [vmem:[%s2380 + $0x68] sm:$0xff]
    %v2395 = vld [vmem:[%s2380 + $0x70] sm:$0xff]
    %v2396 = vld [vmem:[%s2380 + $0x78] sm:$0xff]
    %2397 = vmatpush.msra.mxu0 %v2396
    %2398 = vmatpush.msra.mxu0 %v2395
    %2399 = vmatpush.msra.mxu0 %v2394
    %2400 = vmatpush.msra.mxu0 %v2393
    %2401 = vmatpush.msra.mxu0 %v2392
    %2402 = vmatpush.msra.mxu0 %v2391
    %2403 = vmatpush.msra.mxu0 %v2390
    %2404 = vmatpush.msra.mxu0 %v2389
    %2405 = vmatpush.msra.mxu0 %v2388
    %2406 = vmatpush.msra.mxu0 %v2387
    %2407 = vmatpush.msra.mxu0 %v2386
    %2408 = vmatpush.msra.mxu0 %v2385
    %2409 = vmatpush.msra.mxu0 %v2384
    %2410 = vmatpush.msra.mxu0 %v2383
    %2411 = vmatpush.msra.mxu0 %v2382
    %2412 = vmatpush.msra.mxu0 %v2381
    %2413 = vmatmul.f32.gmra.mxu0 %v2067
    %v2414 = vpop.f32.mrf.mxu0
    %v2415 = vadd.f32 0.0, %v2414
    %2416 = vdwg.mxu0
    %v2418 = vsel %vm729, %v2377, 0
    %v2421 = vsel %vm729, %v2378, 0
    %v2424 = vsel %vm729, %v2379, 0
    %2426 = vmatpush.msra.mxu0 0.0
    %2427 = vmatpush.msra.mxu0 0.0
    %2428 = vmatpush.msra.mxu0 0.0
    %2429 = vmatpush.msra.mxu0 0.0
    %2430 = vmatpush.msra.mxu0 0.0
    %2431 = vmatpush.msra.mxu0 0.0
    %2432 = vmatpush.msra.mxu0 0.0
    %2433 = vmatpush.msra.mxu0 0.0
    %2434 = vmatpush.msra.mxu0 0.0
    %2435 = vmatpush.msra.mxu0 0.0
    %2436 = vmatpush.msra.mxu0 0.0
    %2437 = vmatpush.msra.mxu0 0.0
    %2438 = vmatpush.msra.mxu0 0.0
    %2439 = vmatpush.msra.mxu0 0.0
    %2440 = vmatpush.msra.mxu0 0.0
    %2441 = vmatpush.msra.mxu0 %v2415
    %2442 = vmatmul.f32.gmra.mxu0 %v2418
    %v2443 = vpop.f32.mrf.mxu0
    %v2444 = vadd.f32 0.0, %v2443
    %2445 = vmatmul.f32.gmra.mxu0 %v2421
    %v2446 = vpop.f32.mrf.mxu0
    %v2447 = vadd.f32 0.0, %v2446
    %2448 = vmatmul.f32.gmra.mxu0 %v2424
    %v2449 = vpop.f32.mrf.mxu0
    %v2450 = vadd.f32 0.0, %v2449
    %2451 = vdwg.mxu0
    %v2452 = vadd.f32 %v2373, %v2444
    %v2453 = vadd.f32 %v2374, %v2447
    %v2454 = vadd.f32 %v2375, %v2450
    %v2455 = vld [vmem:[%s23] sm:$0xff]
    %v2456 = vld [vmem:[%s23 + $0x8] sm:$0xff]
    %v2457 = vld [vmem:[%s23 + $0x10] sm:$0xff]
    %2459 = vset.pattern.permute.xlu0 0
    %2460 = vperm.xlu0 %2459, %v2455
    %v2461 = vpop.permute.xlu0 %2460
    %2464 = vset.pattern.permute.xlu0 0
    %2465 = vperm.xlu0 %2464, %v2456
    %v2466 = vpop.permute.xlu0 %2465
    %2469 = vset.pattern.permute.xlu0 0
    %2470 = vperm.xlu0 %2469, %v2457
    %v2471 = vpop.permute.xlu0 %2470
    %v2473 = vadd.f32 %v2452, %v2461
    %v2474 = vadd.f32 %v2453, %v2466
    %v2475 = vadd.f32 %v2454, %v2471
    %v2476 = vadd.f32 %v2473, 1e-06
    %v2477 = vadd.f32 %v2474, 1e-06
    %v2478 = vadd.f32 %v2475, 1e-06
    %2479 = vst [vmem:[%s24] sm:$0xff] %v2476
    %2480 = vst [vmem:[%s24 + $0x8] sm:$0xff] %v2477
    %2481 = vst [vmem:[%s24 + $0x10] sm:$0xff] %v2478
    // Predicated region
    $region122: #{vae_forward.1} parent=1 // pred_check
      _
    $region123: #{vae_forward.1} parent=1 // pred_check_branch
      %2483 = sbr.rel (0) target = $region125
    $region124: #{vae_forward.1} parent=1 // pred_region
      _
    $region125: #{vae_forward.1} parent=1 // pred_fallthru
      _
    // Predicated region
    $region126: #{vae_forward.1} parent=1 // pred_check
      _
    $region127: #{vae_forward.1} parent=1 // pred_check_branch
      %2485 = sbr.rel (0) target = $region129
    $region128: #{vae_forward.1} parent=1 // pred_region
      _
    $region129: #{vae_forward.1} parent=1 // pred_fallthru
      _
    // Predicated region
    $region130: #{vae_forward.1} parent=1 // pred_check
      _
    $region131: #{vae_forward.1} parent=1 // pred_check_branch
      %2487 = sbr.rel (0) target = $region133
    $region132: #{vae_forward.1} parent=1 // pred_region
      _
    $region133: #{vae_forward.1} parent=1 // pred_fallthru
      _
    // Predicated region
    $region134: #{vae_forward.1} parent=1 // pred_check
      _
    $region135: #{vae_forward.1} parent=1 // pred_check_branch
      %2489 = sbr.rel (0) target = $region137
    $region136: #{vae_forward.1} parent=1 // pred_region
      _
    $region137: #{vae_forward.1} parent=1 // pred_fallthru
      _
    // Predicated region
    $region138: #{vae_forward.1} parent=1 // pred_check
      _
    $region139: #{vae_forward.1} parent=1 // pred_check_branch
      %2491 = sbr.rel (0) target = $region141
    $region140: #{vae_forward.1} parent=1 // pred_region
      _
    $region141: #{vae_forward.1} parent=1 // pred_fallthru
      _
    // Predicated region
    $region142: #{vae_forward.1} parent=1 // pred_check
      _
    $region143: #{vae_forward.1} parent=1 // pred_check_branch
      %2493 = sbr.rel (0) target = $region145
    $region144: #{vae_forward.1} parent=1 // pred_region
      _
    $region145: #{vae_forward.1} parent=1 // pred_fallthru
      _
    %2494 = vsyncpa [#allocation3], 1
    %2495 = vsyncpa [#allocation5], 1
    %2496 = vsyncpa [#allocation8], 1
    %2497 = vsyncpa [#allocation11], 1

</llo_original>
